<compile_context>
chip_gen: v6e
topology: v6e:2x2x1
jax: 0.10.0
libtpu: 0.0.40
codegen_flags: <defaults>
</compile_context>

<pallas_src>
import math
from functools import partial

import jax
import jax.numpy as jnp
from jax.experimental import pallas as pl
from jax.experimental.pallas import tpu as pltpu


# ----------------------------------------------------------------------------
# tiling helper
# ----------------------------------------------------------------------------
def _tile(dim, target, align):
    """Largest multiple of `align` that divides `dim` and is <= `target`,
    falling back to the full dim (always a legal Pallas block size)."""
    if dim <= target:
        return dim
    t = (target // align) * align
    while t >= align:
        if dim % t == 0:
            return t
        t -= align
    return dim


# ----------------------------------------------------------------------------
# Pallas kernels
# ----------------------------------------------------------------------------
def _matmul_bias_kernel(x_ref, w_ref, b_ref, o_ref):
    acc = jnp.dot(x_ref[...], w_ref[...], preferred_element_type=jnp.float32)
    o_ref[...] = (acc + b_ref[...].astype(jnp.float32)).astype(o_ref.dtype)


def _matmul_bias_res_kernel(x_ref, w_ref, b_ref, r_ref, o_ref):
    acc = jnp.dot(x_ref[...], w_ref[...], preferred_element_type=jnp.float32)
    acc = acc + b_ref[...].astype(jnp.float32) + r_ref[...].astype(jnp.float32)
    o_ref[...] = acc.astype(o_ref.dtype)


def _ln_matmul_bias_kernel(x_ref, lng_ref, lnb_ref, w_ref, b_ref, o_ref):
    # LayerNorm (eps=1e-6, matching nn.LayerNorm) fused into the matmul.
    x = x_ref[...].astype(jnp.float32)
    mu = jnp.mean(x, axis=-1, keepdims=True)
    var = jnp.mean(jnp.square(x - mu), axis=-1, keepdims=True)
    y = (x - mu) * jax.lax.rsqrt(var + 1e-6)
    y = y * lng_ref[...].astype(jnp.float32) + lnb_ref[...].astype(jnp.float32)
    acc = jnp.dot(y.astype(x_ref.dtype), w_ref[...],
                  preferred_element_type=jnp.float32)
    o_ref[...] = (acc + b_ref[...].astype(jnp.float32)).astype(o_ref.dtype)


def _ln_swiglu_kernel(x_ref, lng_ref, lnb_ref, w1_ref, b1_ref, w2_ref, b2_ref,
                      w3_ref, b3_ref, o_ref, acc_ref, y_sc):
    # grid = (row tiles, hidden tiles); hidden is the reduction axis (last).
    hk = pl.program_id(1)

    @pl.when(hk == 0)
    def _():
        acc_ref[...] = jnp.zeros(acc_ref.shape, jnp.float32)
        # LayerNorm computed ONCE per row tile, cached in VMEM and reused
        # across all hidden-dim reduction steps.
        x = x_ref[...].astype(jnp.float32)
        mu = jnp.mean(x, axis=-1, keepdims=True)
        var = jnp.mean(jnp.square(x - mu), axis=-1, keepdims=True)
        y = (x - mu) * jax.lax.rsqrt(var + 1e-6)
        y = (y * lng_ref[...].astype(jnp.float32)
             + lnb_ref[...].astype(jnp.float32))
        y_sc[...] = y.astype(y_sc.dtype)

    y = y_sc[...]
    gate = jnp.dot(y, w1_ref[...], preferred_element_type=jnp.float32)
    gate = gate + b1_ref[...].astype(jnp.float32)
    up = jnp.dot(y, w2_ref[...], preferred_element_type=jnp.float32)
    up = up + b2_ref[...].astype(jnp.float32)
    h = (gate * jax.nn.sigmoid(gate)) * up            # SiLU(gate) * value
    acc_ref[...] += jnp.dot(h.astype(y.dtype), w3_ref[...],
                            preferred_element_type=jnp.float32)

    @pl.when(hk == pl.num_programs(1) - 1)
    def _():
        out = acc_ref[...] + b3_ref[...].astype(jnp.float32)
        out = out + x_ref[...].astype(jnp.float32)    # fused residual
        o_ref[...] = out.astype(o_ref.dtype)


def _flash_attn_kernel(q_ref, k_ref, v_ref, o_ref, m_sc, l_sc, acc_sc):
    # grid = (batch, q tiles, kv tiles); all heads of one batch per step.
    kv = pl.program_id(2)

    @pl.when(kv == 0)
    def _():
        m_sc[...] = jnp.full(m_sc.shape, -jnp.inf, jnp.float32)
        l_sc[...] = jnp.zeros(l_sc.shape, jnp.float32)
        acc_sc[...] = jnp.zeros(acc_sc.shape, jnp.float32)

    # q is already RoPE'd and scaled; keep MXU operands in the model dtype.
    s = jnp.einsum("hqd,hkd->hqk", q_ref[...], k_ref[...],
                   preferred_element_type=jnp.float32)
    m_prev = m_sc[...]
    m_new = jnp.maximum(m_prev, jnp.max(s, axis=-1, keepdims=True))
    alpha = jnp.exp(m_prev - m_new)
    p = jnp.exp(s - m_new)
    l_sc[...] = alpha * l_sc[...] + jnp.sum(p, axis=-1, keepdims=True)
    acc_sc[...] = alpha * acc_sc[...] + jnp.einsum(
        "hqk,hkd->hqd", p.astype(v_ref.dtype), v_ref[...],
        preferred_element_type=jnp.float32)
    m_sc[...] = m_new

    @pl.when(kv == pl.num_programs(2) - 1)
    def _():
        inv = pl.reciprocal(l_sc[...], approx=True)   # EUP slot, ~free
        o_ref[...] = (acc_sc[...] * inv).astype(o_ref.dtype)


# ----------------------------------------------------------------------------
# pallas_call wrappers
# ----------------------------------------------------------------------------
def pallas_linear(x, w, b):
    """y = x @ w + b, tiled over (rows, out-cols); K stays whole in VMEM."""
    M, K = x.shape
    N = w.shape[1]
    tm, tn = _tile(M, 512, 8), _tile(N, 512, 128)
    isz = x.dtype.itemsize
    return pl.pallas_call(
        _matmul_bias_kernel,
        out_shape=jax.ShapeDtypeStruct((M, N), x.dtype),
        grid=(M // tm, N // tn),
        in_specs=[
            pl.BlockSpec((tm, K), lambda i, j: (i, 0)),
            pl.BlockSpec((K, tn), lambda i, j: (0, j)),
            pl.BlockSpec((1, tn), lambda i, j: (0, j)),
        ],
        out_specs=pl.BlockSpec((tm, tn), lambda i, j: (i, j)),
        compiler_params=pltpu.CompilerParams(
            dimension_semantics=("parallel", "parallel")),
        cost_estimate=pl.CostEstimate(
            flops=2 * M * K * N, transcendentals=0,
            bytes_accessed=isz * (M * K + K * N + M * N + N)),
    )(x, w, b.reshape(1, N))


def pallas_linear_res(x, w, b, res):
    """y = x @ w + b + res (bias + residual fused into the matmul epilogue)."""
    M, K = x.shape
    N = w.shape[1]
    tm, tn = _tile(M, 512, 8), _tile(N, 512, 128)
    isz = x.dtype.itemsize
    return pl.pallas_call(
        _matmul_bias_res_kernel,
        out_shape=jax.ShapeDtypeStruct((M, N), x.dtype),
        grid=(M // tm, N // tn),
        in_specs=[
            pl.BlockSpec((tm, K), lambda i, j: (i, 0)),
            pl.BlockSpec((K, tn), lambda i, j: (0, j)),
            pl.BlockSpec((1, tn), lambda i, j: (0, j)),
            pl.BlockSpec((tm, tn), lambda i, j: (i, j)),
        ],
        out_specs=pl.BlockSpec((tm, tn), lambda i, j: (i, j)),
        compiler_params=pltpu.CompilerParams(
            dimension_semantics=("parallel", "parallel")),
        cost_estimate=pl.CostEstimate(
            flops=2 * M * K * N, transcendentals=0,
            bytes_accessed=isz * (M * K + K * N + 2 * M * N + N)),
    )(x, w, b.reshape(1, N), res)


def pallas_ln_linear(x, lng, lnb, w, b):
    """y = LayerNorm(x) @ w + b  (LN fused into the matmul kernel)."""
    M, K = x.shape
    N = w.shape[1]
    tm, tn = _tile(M, 512, 8), _tile(N, 512, 128)
    isz = x.dtype.itemsize
    return pl.pallas_call(
        _ln_matmul_bias_kernel,
        out_shape=jax.ShapeDtypeStruct((M, N), x.dtype),
        grid=(M // tm, N // tn),
        in_specs=[
            pl.BlockSpec((tm, K), lambda i, j: (i, 0)),
            pl.BlockSpec((1, K), lambda i, j: (0, 0)),
            pl.BlockSpec((1, K), lambda i, j: (0, 0)),
            pl.BlockSpec((K, tn), lambda i, j: (0, j)),
            pl.BlockSpec((1, tn), lambda i, j: (0, j)),
        ],
        out_specs=pl.BlockSpec((tm, tn), lambda i, j: (i, j)),
        compiler_params=pltpu.CompilerParams(
            dimension_semantics=("parallel", "parallel")),
        cost_estimate=pl.CostEstimate(
            flops=2 * M * K * N, transcendentals=M,
            bytes_accessed=isz * (M * K + K * N + M * N + 2 * K + N)),
    )(x, lng.reshape(1, K), lnb.reshape(1, K), w, b.reshape(1, N))


def pallas_ln_swiglu(x, lng, lnb, w1, b1, w2, b2, w3, b3):
    """out = x + (SiLU(LN(x)@w1+b1) * (LN(x)@w2+b2)) @ w3 + b3
    Fused LN + SwiGLU MLP + residual; hidden dim is the tiled reduction.
    LN(x) is cached in VMEM across the hidden-dim sweep."""
    M, D = x.shape
    Hd = w1.shape[1]
    tm = _tile(M, 256, 8)
    thd = _tile(Hd, 512, 128)
    isz = x.dtype.itemsize
    return pl.pallas_call(
        _ln_swiglu_kernel,
        out_shape=jax.ShapeDtypeStruct((M, D), x.dtype),
        grid=(M // tm, Hd // thd),
        in_specs=[
            pl.BlockSpec((tm, D), lambda i, hk: (i, 0)),
            pl.BlockSpec((1, D), lambda i, hk: (0, 0)),
            pl.BlockSpec((1, D), lambda i, hk: (0, 0)),
            pl.BlockSpec((D, thd), lambda i, hk: (0, hk)),
            pl.BlockSpec((1, thd), lambda i, hk: (0, hk)),
            pl.BlockSpec((D, thd), lambda i, hk: (0, hk)),
            pl.BlockSpec((1, thd), lambda i, hk: (0, hk)),
            pl.BlockSpec((thd, D), lambda i, hk: (hk, 0)),
            pl.BlockSpec((1, D), lambda i, hk: (0, 0)),
        ],
        out_specs=pl.BlockSpec((tm, D), lambda i, hk: (i, 0)),
        scratch_shapes=[
            pltpu.VMEM((tm, D), jnp.float32),   # fp32 accumulator
            pltpu.VMEM((tm, D), x.dtype),       # cached LN(x)
        ],
        compiler_params=pltpu.CompilerParams(
            dimension_semantics=("parallel", "arbitrary"),
            vmem_limit_bytes=32 * 1024 * 1024),
        cost_estimate=pl.CostEstimate(
            flops=6 * M * D * Hd, transcendentals=M * Hd,
            bytes_accessed=isz * (2 * M * D + 3 * D * Hd + 2 * Hd + 3 * D)),
    )(x, lng.reshape(1, D), lnb.reshape(1, D),
      w1, b1.reshape(1, Hd), w2, b2.reshape(1, Hd), w3, b3.reshape(1, D))


def pallas_flash_attention(q, k, v, *, num_heads):
    """softmax(q k^T) v with online softmax.  q/k/v: (B*H, N, Dh), q already
    RoPE'd and scaled.  All heads of one batch are processed per grid step."""
    BH, N, Dh = q.shape
    H = num_heads
    B = BH // H
    tq = _tile(N, 256, 8)
    tkv = _tile(N, 256, 128)
    isz = q.dtype.itemsize
    return pl.pallas_call(
        _flash_attn_kernel,
        out_shape=jax.ShapeDtypeStruct((BH, N, Dh), q.dtype),
        grid=(B, N // tq, N // tkv),
        in_specs=[
            pl.BlockSpec((H, tq, Dh), lambda b, qi, ki: (b, qi, 0)),
            pl.BlockSpec((H, tkv, Dh), lambda b, qi, ki: (b, ki, 0)),
            pl.BlockSpec((H, tkv, Dh), lambda b, qi, ki: (b, ki, 0)),
        ],
        out_specs=pl.BlockSpec((H, tq, Dh), lambda b, qi, ki: (b, qi, 0)),
        scratch_shapes=[
            pltpu.VMEM((H, tq, 1), jnp.float32),
            pltpu.VMEM((H, tq, 1), jnp.float32),
            pltpu.VMEM((H, tq, Dh), jnp.float32),
        ],
        compiler_params=pltpu.CompilerParams(
            dimension_semantics=("parallel", "parallel", "arbitrary"),
            vmem_limit_bytes=32 * 1024 * 1024),
        cost_estimate=pl.CostEstimate(
            flops=4 * BH * N * N * Dh, transcendentals=BH * N * N,
            bytes_accessed=isz * 4 * BH * N * Dh),
    )(q, k, v)


# ----------------------------------------------------------------------------
# Model glue (plain JAX: reshapes, RoPE table, parameter plumbing)
# ----------------------------------------------------------------------------
def build_rope(head_dim, grid_hw, pt_seq_len, theta=10000.0):
    """Axial 2D RoPE tables (cos, sin), each (grid_hw*grid_hw, head_dim)."""
    # TODO(synk): the exact VisionRotaryPositionalEmbedding class is not part
    # of the provided source; this uses the standard EVA-style axial 2D RoPE
    # (half-split rotate, interpolate_freq rescaling) convention.
    d_axis = head_dim // 2
    n_freq = d_axis // 2
    inv = 1.0 / (theta ** (jnp.arange(n_freq, dtype=jnp.float32) * 2.0 / d_axis))
    pos = jnp.arange(grid_hw, dtype=jnp.float32) / grid_hw * pt_seq_len
    ang = pos[:, None] * inv[None, :]
    row = jnp.broadcast_to(ang[:, None, :], (grid_hw, grid_hw, n_freq))
    col = jnp.broadcast_to(ang[None, :, :], (grid_hw, grid_hw, n_freq))
    half = jnp.concatenate([row, col], axis=-1).reshape(grid_hw * grid_hw, d_axis)
    ang_full = jnp.concatenate([half, half], axis=-1)
    return jnp.cos(ang_full), jnp.sin(ang_full)


def apply_rope(t, cos, sin):
    """rotate-half RoPE applied in plain JAX.  Called right next to the qkv
    head-split transpose so XLA fuses it into that (single) copy — no extra
    HBM pass, and the flash kernel's MXU only runs QK^T / PV."""
    half = t.shape[-1] // 2
    rot = jnp.concatenate([-t[..., half:], t[..., :half]], axis=-1)
    return t * cos + rot * sin


def patch_embed(x, w, b, patch_size):
    """Conv2d(kernel=stride=p) == per-patch matmul.  x NCHW -> (B, Hp, Wp, D)."""
    B, C, H, W = x.shape
    p = patch_size
    Hp, Wp = H // p, W // p
    xp = (
        x.reshape(B, C, Hp, p, Wp, p)
        .transpose(0, 2, 4, 1, 3, 5)
        .reshape(B * Hp * Wp, C * p * p)
    )
    y = pallas_linear(xp, w, b)
    return y.reshape(B, Hp, Wp, w.shape[1])


def get_abs_pos(pos_embed, has_cls_token, hw):
    Hp, Wp = hw
    if has_cls_token:
        pos_embed = pos_embed[:, 1:]
    num = pos_embed.shape[1]
    side = int(math.isqrt(num))
    # TODO(synk): PyTorch uses bicubic F.interpolate when the pretrain grid
    # differs from the runtime grid; the example config keeps them equal.
    assert side == Hp == Wp, "example config keeps pretrain grid == runtime grid"
    return pos_embed.reshape(1, Hp, Wp, -1)


def vit_block(x, p, cos, sin, num_heads):
    B, Hp, Wp, D = x.shape
    N = Hp * Wp
    hd = D // num_heads
    xt = x.reshape(B * N, D)

    # --- attention branch (LN fused into the qkv matmul) ---
    qkv = pallas_ln_linear(xt, p["ln1_g"], p["ln1_b"], p["qkv_w"], p["qkv_b"])
    # Head split + RoPE + q-scaling: one XLA transpose-fusion of the qkv tensor.
    qkv = qkv.reshape(B, N, 3, num_heads, hd).transpose(2, 0, 3, 1, 4)
    q = (apply_rope(qkv[0], cos, sin) * (hd ** -0.5)).astype(xt.dtype)
    k = apply_rope(qkv[1], cos, sin).astype(xt.dtype)
    v = qkv[2]
    q = q.reshape(B * num_heads, N, hd)
    k = k.reshape(B * num_heads, N, hd)
    v = v.reshape(B * num_heads, N, hd)
    o = pallas_flash_attention(q, k, v, num_heads=num_heads)  # (B*H, N, hd)
    # Head merge is a single XLA copy; proj + bias + residual fused in Pallas.
    o = o.reshape(B, num_heads, N, hd).transpose(0, 2, 1, 3).reshape(B * N, D)
    x1 = pallas_linear_res(o, p["proj_w"], p["proj_b"], xt)   # drop_path = 0

    # --- SwiGLU MLP branch (LN + MLP + residual fused in one kernel) ---
    x2 = pallas_ln_swiglu(
        x1, p["ln2_g"], p["ln2_b"],
        p["fc1g_w"], p["fc1g_b"], p["fc1x_w"], p["fc1x_b"],
        p["fc2_w"], p["fc2_b"],
    )
    return x2.reshape(B, Hp, Wp, D)


def vit_forward(x, params, *, num_heads, patch_size):
    x = patch_embed(x, params["patch_w"], params["patch_b"], patch_size)
    x = x + get_abs_pos(params["pos_embed"], True, (x.shape[1], x.shape[2]))
    cos, sin = params["rope_cos"], params["rope_sin"]
    for blk in params["blocks"]:
        x = vit_block(x, blk, cos, sin, num_heads)
    return x.transpose(0, 3, 1, 2)  # (B, D, Hp, Wp), matches permute(0,3,1,2)


# ----------------------------------------------------------------------------
# Deterministic parameter construction (matching __init__ / _init_weights)
# ----------------------------------------------------------------------------
def trunc_normal(key, shape, std=0.02):
    return std * jax.random.truncated_normal(key, -2.0, 2.0, shape, jnp.float32)


def make_params(key, *, img_size, patch_size, in_chans, embed_dim, depth,
                num_heads, mlp_ratio, pretrain_img_size, patch_hw_seq_length):
    keys = iter(jax.random.split(key, 4 + depth * 5))
    hw = img_size // patch_size
    head_dim = embed_dim // num_heads
    hidden = int(embed_dim * mlp_ratio)

    params = {
        # patch-embed projection stored pre-flattened as (C*p*p, D): no
        # per-forward weight reshape/transpose.
        "patch_w": trunc_normal(next(keys), (in_chans * patch_size * patch_size,
                                             embed_dim)),
        "patch_b": jnp.zeros((embed_dim,), jnp.float32),
        # nn.Parameter(torch.zeros(...)); _init_weights does not touch it.
        "pos_embed": jnp.zeros(
            (1, (pretrain_img_size // patch_size) ** 2 + 1, embed_dim),
            jnp.float32),
    }
    cos, sin = build_rope(head_dim, hw, patch_hw_seq_length)
    params["rope_cos"], params["rope_sin"] = cos, sin

    blocks = []
    for _ in range(depth):
        blocks.append({
            "ln1_g": jnp.ones((embed_dim,), jnp.float32),
            "ln1_b": jnp.zeros((embed_dim,), jnp.float32),
            "qkv_w": trunc_normal(next(keys), (embed_dim, 3 * embed_dim)),
            "qkv_b": jnp.zeros((3 * embed_dim,), jnp.float32),
            "proj_w": trunc_normal(next(keys), (embed_dim, embed_dim)),
            "proj_b": jnp.zeros((embed_dim,), jnp.float32),
            "ln2_g": jnp.ones((embed_dim,), jnp.float32),
            "ln2_b": jnp.zeros((embed_dim,), jnp.float32),
            "fc1g_w": trunc_normal(next(keys), (embed_dim, hidden)),
            "fc1g_b": jnp.zeros((hidden,), jnp.float32),
            "fc1x_w": trunc_normal(next(keys), (embed_dim, hidden)),
            "fc1x_b": jnp.zeros((hidden,), jnp.float32),
            "fc2_w": trunc_normal(next(keys), (hidden, embed_dim)),
            "fc2_b": jnp.zeros((embed_dim,), jnp.float32),
        })
    params["blocks"] = blocks
    return params


# ----------------------------------------------------------------------------
if __name__ == "__main__":
    # Small, consistent config: 16x16 image, 4x4 patches -> 4x4 = 16 tokens.
    cfg = dict(
        img_size=16,
        patch_size=4,
        in_chans=3,
        embed_dim=32,
        depth=2,
        num_heads=4,
        mlp_ratio=4 * 2 / 3,
        pretrain_img_size=16,      # pretrain grid == runtime grid (no interp)
        patch_hw_seq_length=16,
    )

    key = jax.random.PRNGKey(0)
    k_param, k_x = jax.random.split(key)
    params = make_params(k_param, **cfg)

    # layout: NCHW input, matching PyTorch's conv input convention
    x = jax.random.normal(
        k_x, (2, cfg["in_chans"], cfg["img_size"], cfg["img_size"]),
        dtype=jnp.float32)

    fwd = jax.jit(partial(vit_forward, num_heads=cfg["num_heads"],
                          patch_size=cfg["patch_size"]))
    out = fwd(x, params)
    out = jax.block_until_ready(out)

    expected = (2, cfg["embed_dim"], cfg["img_size"] // cfg["patch_size"],
                cfg["img_size"] // cfg["patch_size"])
    assert out.shape == expected, (out.shape, expected)
    assert jnp.all(jnp.isfinite(out))
    print("KERNEL_OK")
</pallas_src>

<mosaic_0001>
module attributes {stable_mosaic.version = 11 : i64} {
  func.func @_matmul_bias_kernel(%arg0: i32, %arg1: i32, %arg2: memref<32x48xf32, #tpu.memory_space<vmem>>, %arg3: memref<48x32xf32, #tpu.memory_space<vmem>>, %arg4: memref<1x32xf32, #tpu.memory_space<vmem>>, %arg5: memref<32x32xf32, #tpu.memory_space<vmem>>) attributes {dimension_semantics = [#tpu.dimension_semantics<parallel>, #tpu.dimension_semantics<parallel>], iteration_bounds = array<i64: 1, 1>, scalar_prefetch = 0 : i64, scratch_operands = 0 : i64, tpu.core_type = #tpu.core_type<tc>, window_params = [{transform_indices = @transform_0, window_bounds = array<i64: 32, 48>}, {transform_indices = @transform_1, window_bounds = array<i64: 48, 32>}, {transform_indices = @transform_2, window_bounds = array<i64: 1, 32>}, {transform_indices = @transform_3, window_bounds = array<i64: 32, 32>}]} {
    %c0 = arith.constant 0 : index
    %c0_0 = arith.constant 0 : index
    %0 = vector.load %arg2[%c0, %c0_0] : memref<32x48xf32, #tpu.memory_space<vmem>>, vector<32x48xf32>
    %c0_1 = arith.constant 0 : index
    %c0_2 = arith.constant 0 : index
    %1 = vector.load %arg3[%c0_1, %c0_2] : memref<48x32xf32, #tpu.memory_space<vmem>>, vector<48x32xf32>
    %cst = arith.constant dense<0.000000e+00> : vector<32x32xf32>
    %2 = tpu.matmul %0, %1, %cst {dimension_numbers = #tpu.dot_dimension_numbers<[1], [0], [0], [1], [0, 0, 1, 1], [], []>} : vector<32x48xf32>, vector<48x32xf32>, vector<32x32xf32> -> vector<32x32xf32>
    %c0_3 = arith.constant 0 : index
    %c0_4 = arith.constant 0 : index
    %3 = vector.load %arg4[%c0_3, %c0_4] : memref<1x32xf32, #tpu.memory_space<vmem>>, vector<1x32xf32>
    %4 = vector.broadcast %3 : vector<1x32xf32> to vector<32x32xf32>
    %5 = arith.addf %2, %4 : vector<32x32xf32>
    %c0_5 = arith.constant 0 : index
    %c0_6 = arith.constant 0 : index
    %6 = vector.load %arg5[%c0_5, %c0_6] : memref<32x32xf32, #tpu.memory_space<vmem>>, vector<32x32xf32>
    tpu.vector_store %arg5[%c0_5, %c0_6], %5 {strides = array<i32>} : memref<32x32xf32, #tpu.memory_space<vmem>>, vector<32x32xf32>,
    return
  }
  func.func @transform_0(%arg0: i32, %arg1: i32) -> (i32, i32) {
    %c0_i32 = arith.constant 0 : i32
    %c0_i32_0 = arith.constant 0 : i32
    return %arg0, %c0_i32 : i32, i32
  }
  func.func @transform_1(%arg0: i32, %arg1: i32) -> (i32, i32) {
    %c0_i32 = arith.constant 0 : i32
    %c0_i32_0 = arith.constant 0 : i32
    return %c0_i32, %arg1 : i32, i32
  }
  func.func @transform_2(%arg0: i32, %arg1: i32) -> (i32, i32) {
    %c0_i32 = arith.constant 0 : i32
    %c0_i32_0 = arith.constant 0 : i32
    return %c0_i32, %arg1 : i32, i32
  }
  func.func @transform_3(%arg0: i32, %arg1: i32) -> (i32, i32) {
    %c0_i32 = arith.constant 0 : i32
    return %arg0, %arg1 : i32, i32
  }
}

module attributes {stable_mosaic.version = 11 : i64} {
  func.func @_ln_matmul_bias_kernel(%arg0: i32, %arg1: i32, %arg2: memref<32x32xf32, #tpu.memory_space<vmem>>, %arg3: memref<1x32xf32, #tpu.memory_space<vmem>>, %arg4: memref<1x32xf32, #tpu.memory_space<vmem>>, %arg5: memref<32x96xf32, #tpu.memory_space<vmem>>, %arg6: memref<1x96xf32, #tpu.memory_space<vmem>>, %arg7: memref<32x96xf32, #tpu.memory_space<vmem>>) attributes {dimension_semantics = [#tpu.dimension_semantics<parallel>, #tpu.dimension_semantics<parallel>], iteration_bounds = array<i64: 1, 1>, scalar_prefetch = 0 : i64, scratch_operands = 0 : i64, tpu.core_type = #tpu.core_type<tc>, window_params = [{transform_indices = @transform_0, window_bounds = array<i64: 32, 32>}, {pipeline_mode = #tpu.pipeline_mode<synchronous>, transform_indices = @transform_1, window_bounds = array<i64: 1, 32>}, {pipeline_mode = #tpu.pipeline_mode<synchronous>, transform_indices = @transform_2, window_bounds = array<i64: 1, 32>}, {transform_indices = @transform_3, window_bounds = array<i64: 32, 96>}, {transform_indices = @transform_4, window_bounds = array<i64: 1, 96>}, {transform_indices = @transform_5, window_bounds = array<i64: 32, 96>}]} {
    %c0 = arith.constant 0 : index
    %c0_0 = arith.constant 0 : index
    %0 = vector.load %arg2[%c0, %c0_0] : memref<32x32xf32, #tpu.memory_space<vmem>>, vector<32x32xf32>
    %cst = arith.constant dense<0.000000e+00> : vector<32xf32>
    %1 = vector.multi_reduction <add>, %0, %cst [1] : vector<32x32xf32> to vector<32xf32>
    %2 = vector.shape_cast %1 : vector<32xf32> to vector<32x1xf32>
    %cst_1 = arith.constant 3.200000e+01 : f32
    %3 = vector.broadcast %cst_1 : f32 to vector<32x1xf32>
    %4 = arith.divf %2, %3 : vector<32x1xf32>
    %5 = vector.broadcast %4 : vector<32x1xf32> to vector<32x32xf32>
    %6 = arith.subf %0, %5 : vector<32x32xf32>
    %7 = arith.mulf %6, %6 : vector<32x32xf32>
    %cst_2 = arith.constant dense<0.000000e+00> : vector<32xf32>
    %8 = vector.multi_reduction <add>, %7, %cst_2 [1] : vector<32x32xf32> to vector<32xf32>
    %9 = vector.shape_cast %8 : vector<32xf32> to vector<32x1xf32>
    %cst_3 = arith.constant 3.200000e+01 : f32
    %10 = vector.broadcast %cst_3 : f32 to vector<32x1xf32>
    %11 = arith.divf %9, %10 : vector<32x1xf32>
    %12 = vector.broadcast %4 : vector<32x1xf32> to vector<32x32xf32>
    %13 = arith.subf %0, %12 : vector<32x32xf32>
    %cst_4 = arith.constant 9.99999997E-7 : f32
    %14 = vector.broadcast %cst_4 : f32 to vector<32x1xf32>
    %15 = arith.addf %11, %14 : vector<32x1xf32>
    %16 = math.rsqrt %15 : vector<32x1xf32>
    %17 = vector.broadcast %16 : vector<32x1xf32> to vector<32x32xf32>
    %18 = arith.mulf %13, %17 : vector<32x32xf32>
    %c0_5 = arith.constant 0 : index
    %c0_6 = arith.constant 0 : index
    %19 = vector.load %arg3[%c0_5, %c0_6] : memref<1x32xf32, #tpu.memory_space<vmem>>, vector<1x32xf32>
    %20 = vector.broadcast %19 : vector<1x32xf32> to vector<32x32xf32>
    %21 = arith.mulf %18, %20 : vector<32x32xf32>
    %c0_7 = arith.constant 0 : index
    %c0_8 = arith.constant 0 : index
    %22 = vector.load %arg4[%c0_7, %c0_8] : memref<1x32xf32, #tpu.memory_space<vmem>>, vector<1x32xf32>
    %23 = vector.broadcast %22 : vector<1x32xf32> to vector<32x32xf32>
    %24 = arith.addf %21, %23 : vector<32x32xf32>
    %c0_9 = arith.constant 0 : index
    %c0_10 = arith.constant 0 : index
    %25 = vector.load %arg5[%c0_9, %c0_10] : memref<32x96xf32, #tpu.memory_space<vmem>>, vector<32x96xf32>
    %cst_11 = arith.constant dense<0.000000e+00> : vector<32x96xf32>
    %26 = tpu.matmul %24, %25, %cst_11 {dimension_numbers = #tpu.dot_dimension_numbers<[1], [0], [0], [1], [0, 0, 1, 1], [], []>} : vector<32x32xf32>, vector<32x96xf32>, vector<32x96xf32> -> vector<32x96xf32>
    %c0_12 = arith.constant 0 : index
    %c0_13 = arith.constant 0 : index
    %27 = vector.load %arg6[%c0_12, %c0_13] : memref<1x96xf32, #tpu.memory_space<vmem>>, vector<1x96xf32>
    %28 = vector.broadcast %27 : vector<1x96xf32> to vector<32x96xf32>
    %29 = arith.addf %26, %28 : vector<32x96xf32>
    %c0_14 = arith.constant 0 : index
    %c0_15 = arith.constant 0 : index
    %30 = vector.load %arg7[%c0_14, %c0_15] : memref<32x96xf32, #tpu.memory_space<vmem>>, vector<32x96xf32>
    tpu.vector_store %arg7[%c0_14, %c0_15], %29 {strides = array<i32>} : memref<32x96xf32, #tpu.memory_space<vmem>>, vector<32x96xf32>,
    return
  }
  func.func @transform_0(%arg0: i32, %arg1: i32) -> (i32, i32) {
    %c0_i32 = arith.constant 0 : i32
    %c0_i32_0 = arith.constant 0 : i32
    return %arg0, %c0_i32 : i32, i32
  }
  func.func @transform_1(%arg0: i32, %arg1: i32) -> (i32, i32) {
    %c0_i32 = arith.constant 0 : i32
    %c0_i32_0 = arith.constant 0 : i32
    %c0_i32_1 = arith.constant 0 : i32
    return %c0_i32, %c0_i32_0 : i32, i32
  }
  func.func @transform_2(%arg0: i32, %arg1: i32) -> (i32, i32) {
    %c0_i32 = arith.constant 0 : i32
    %c0_i32_0 = arith.constant 0 : i32
    %c0_i32_1 = arith.constant 0 : i32
    return %c0_i32, %c0_i32_0 : i32, i32
  }
  func.func @transform_3(%arg0: i32, %arg1: i32) -> (i32, i32) {
    %c0_i32 = arith.constant 0 : i32
    %c0_i32_0 = arith.constant 0 : i32
    return %c0_i32, %arg1 : i32, i32
  }
  func.func @transform_4(%arg0: i32, %arg1: i32) -> (i32, i32) {
    %c0_i32 = arith.constant 0 : i32
    %c0_i32_0 = arith.constant 0 : i32
    return %c0_i32, %arg1 : i32, i32
  }
  func.func @transform_5(%arg0: i32, %arg1: i32) -> (i32, i32) {
    %c0_i32 = arith.constant 0 : i32
    return %arg0, %arg1 : i32, i32
  }
}

module attributes {stable_mosaic.version = 11 : i64} {
  func.func @_matmul_bias_res_kernel(%arg0: i32, %arg1: i32, %arg2: memref<32x32xf32, #tpu.memory_space<vmem>>, %arg3: memref<32x32xf32, #tpu.memory_space<vmem>>, %arg4: memref<1x32xf32, #tpu.memory_space<vmem>>, %arg5: memref<32x32xf32, #tpu.memory_space<vmem>>, %arg6: memref<32x32xf32, #tpu.memory_space<vmem>>) attributes {dimension_semantics = [#tpu.dimension_semantics<parallel>, #tpu.dimension_semantics<parallel>], iteration_bounds = array<i64: 1, 1>, scalar_prefetch = 0 : i64, scratch_operands = 0 : i64, tpu.core_type = #tpu.core_type<tc>, window_params = [{transform_indices = @transform_0, window_bounds = array<i64: 32, 32>}, {transform_indices = @transform_1, window_bounds = array<i64: 32, 32>}, {transform_indices = @transform_2, window_bounds = array<i64: 1, 32>}, {transform_indices = @transform_3, window_bounds = array<i64: 32, 32>}, {transform_indices = @transform_4, window_bounds = array<i64: 32, 32>}]} {
    %c0 = arith.constant 0 : index
    %c0_0 = arith.constant 0 : index
    %0 = vector.load %arg2[%c0, %c0_0] : memref<32x32xf32, #tpu.memory_space<vmem>>, vector<32x32xf32>
    %c0_1 = arith.constant 0 : index
    %c0_2 = arith.constant 0 : index
    %1 = vector.load %arg3[%c0_1, %c0_2] : memref<32x32xf32, #tpu.memory_space<vmem>>, vector<32x32xf32>
    %cst = arith.constant dense<0.000000e+00> : vector<32x32xf32>
    %2 = tpu.matmul %0, %1, %cst {dimension_numbers = #tpu.dot_dimension_numbers<[1], [0], [0], [1], [0, 0, 1, 1], [], []>} : vector<32x32xf32>, vector<32x32xf32>, vector<32x32xf32> -> vector<32x32xf32>
    %c0_3 = arith.constant 0 : index
    %c0_4 = arith.constant 0 : index
    %3 = vector.load %arg4[%c0_3, %c0_4] : memref<1x32xf32, #tpu.memory_space<vmem>>, vector<1x32xf32>
    %4 = vector.broadcast %3 : vector<1x32xf32> to vector<32x32xf32>
    %5 = arith.addf %2, %4 : vector<32x32xf32>
    %c0_5 = arith.constant 0 : index
    %c0_6 = arith.constant 0 : index
    %6 = vector.load %arg5[%c0_5, %c0_6] : memref<32x32xf32, #tpu.memory_space<vmem>>, vector<32x32xf32>
    %7 = arith.addf %5, %6 : vector<32x32xf32>
    %c0_7 = arith.constant 0 : index
    %c0_8 = arith.constant 0 : index
    %8 = vector.load %arg6[%c0_7, %c0_8] : memref<32x32xf32, #tpu.memory_space<vmem>>, vector<32x32xf32>
    tpu.vector_store %arg6[%c0_7, %c0_8], %7 {strides = array<i32>} : memref<32x32xf32, #tpu.memory_space<vmem>>, vector<32x32xf32>,
    return
  }
  func.func @transform_0(%arg0: i32, %arg1: i32) -> (i32, i32) {
    %c0_i32 = arith.constant 0 : i32
    %c0_i32_0 = arith.constant 0 : i32
    return %arg0, %c0_i32 : i32, i32
  }
  func.func @transform_1(%arg0: i32, %arg1: i32) -> (i32, i32) {
    %c0_i32 = arith.constant 0 : i32
    %c0_i32_0 = arith.constant 0 : i32
    return %c0_i32, %arg1 : i32, i32
  }
  func.func @transform_2(%arg0: i32, %arg1: i32) -> (i32, i32) {
    %c0_i32 = arith.constant 0 : i32
    %c0_i32_0 = arith.constant 0 : i32
    return %c0_i32, %arg1 : i32, i32
  }
  func.func @transform_3(%arg0: i32, %arg1: i32) -> (i32, i32) {
    %c0_i32 = arith.constant 0 : i32
    return %arg0, %arg1 : i32, i32
  }
  func.func @transform_4(%arg0: i32, %arg1: i32) -> (i32, i32) {
    %c0_i32 = arith.constant 0 : i32
    return %arg0, %arg1 : i32, i32
  }
}

module attributes {stable_mosaic.version = 11 : i64} {
  func.func @_flash_attn_kernel(%arg0: i32, %arg1: i32, %arg2: i32, %arg3: memref<4x16x8xf32, #tpu.memory_space<vmem>>, %arg4: memref<4x16x8xf32, #tpu.memory_space<vmem>>, %arg5: memref<4x16x8xf32, #tpu.memory_space<vmem>>, %arg6: memref<4x16x8xf32, #tpu.memory_space<vmem>>, %arg7: memref<4x16x1xf32, #tpu.memory_space<vmem>>, %arg8: memref<4x16x1xf32, #tpu.memory_space<vmem>>, %arg9: memref<4x16x8xf32, #tpu.memory_space<vmem>>) attributes {dimension_semantics = [#tpu.dimension_semantics<parallel>, #tpu.dimension_semantics<parallel>, #tpu.dimension_semantics<arbitrary>], iteration_bounds = array<i64: 2, 1, 1>, scalar_prefetch = 0 : i64, scratch_operands = 3 : i64, tpu.core_type = #tpu.core_type<tc>, window_params = [{transform_indices = @transform_0, window_bounds = array<i64: 4, 16, 8>}, {transform_indices = @transform_1, window_bounds = array<i64: 4, 16, 8>}, {transform_indices = @transform_2, window_bounds = array<i64: 4, 16, 8>}, {transform_indices = @transform_3, window_bounds = array<i64: 4, 16, 8>}]} {
    %c0_i32 = arith.constant 0 : i32
    %0 = arith.cmpi eq, %arg2, %c0_i32 : i32
    %1 = arith.extui %0 : i1 to i32
    %c0_i32_0 = arith.constant 0 : i32
    %2 = arith.cmpi ne, %1, %c0_i32_0 : i32
    scf.if %2 {
      %cst_32 = arith.constant 0xFF800000 : f32
      %32 = vector.broadcast %cst_32 : f32 to vector<4x16x1xf32>
      %c0_33 = arith.constant 0 : index
      %c0_34 = arith.constant 0 : index
      %c0_35 = arith.constant 0 : index
      %33 = vector.load %arg7[%c0_33, %c0_34, %c0_35] : memref<4x16x1xf32, #tpu.memory_space<vmem>>, vector<4x16x1xf32>
      tpu.vector_store %arg7[%c0_33, %c0_34, %c0_35], %32 {strides = array<i32>} : memref<4x16x1xf32, #tpu.memory_space<vmem>>, vector<4x16x1xf32>,
      %cst_36 = arith.constant 0.000000e+00 : f32
      %34 = vector.broadcast %cst_36 : f32 to vector<4x16x1xf32>
      %c0_37 = arith.constant 0 : index
      %c0_38 = arith.constant 0 : index
      %c0_39 = arith.constant 0 : index
      %35 = vector.load %arg8[%c0_37, %c0_38, %c0_39] : memref<4x16x1xf32, #tpu.memory_space<vmem>>, vector<4x16x1xf32>
      tpu.vector_store %arg8[%c0_37, %c0_38, %c0_39], %34 {strides = array<i32>} : memref<4x16x1xf32, #tpu.memory_space<vmem>>, vector<4x16x1xf32>,
      %cst_40 = arith.constant 0.000000e+00 : f32
      %36 = vector.broadcast %cst_40 : f32 to vector<4x16x8xf32>
      %c0_41 = arith.constant 0 : index
      %c0_42 = arith.constant 0 : index
      %c0_43 = arith.constant 0 : index
      %37 = vector.load %arg9[%c0_41, %c0_42, %c0_43] : memref<4x16x8xf32, #tpu.memory_space<vmem>>, vector<4x16x8xf32>
      tpu.vector_store %arg9[%c0_41, %c0_42, %c0_43], %36 {strides = array<i32>} : memref<4x16x8xf32, #tpu.memory_space<vmem>>, vector<4x16x8xf32>,
    } else {
    }
    %c0 = arith.constant 0 : index
    %c0_1 = arith.constant 0 : index
    %c0_2 = arith.constant 0 : index
    %3 = vector.load %arg3[%c0, %c0_1, %c0_2] : memref<4x16x8xf32, #tpu.memory_space<vmem>>, vector<4x16x8xf32>
    %c0_3 = arith.constant 0 : index
    %c0_4 = arith.constant 0 : index
    %c0_5 = arith.constant 0 : index
    %4 = vector.load %arg4[%c0_3, %c0_4, %c0_5] : memref<4x16x8xf32, #tpu.memory_space<vmem>>, vector<4x16x8xf32>
    "tpu.trace_start"() <{level = 10 : i32, message = "hqd,hkd->hqk"}> : () -> ()
    %cst = arith.constant dense<0.000000e+00> : vector<4x16x16xf32>
    %5 = tpu.matmul %3, %4, %cst {dimension_numbers = #tpu.dot_dimension_numbers<[2], [2], [1], [1], [0, 0, 0, 1, 1, 1], [0], [0]>} : vector<4x16x8xf32>, vector<4x16x8xf32>, vector<4x16x16xf32> -> vector<4x16x16xf32>
    "tpu.trace_stop"() : () -> ()
    %c0_6 = arith.constant 0 : index
    %c0_7 = arith.constant 0 : index
    %c0_8 = arith.constant 0 : index
    %6 = vector.load %arg7[%c0_6, %c0_7, %c0_8] : memref<4x16x1xf32, #tpu.memory_space<vmem>>, vector<4x16x1xf32>
    %cst_9 = arith.constant dense<0xFF800000> : vector<4x16xf32>
    %7 = vector.multi_reduction <maximumf>, %5, %cst_9 [2] : vector<4x16x16xf32> to vector<4x16xf32>
    %8 = vector.shape_cast %7 : vector<4x16xf32> to vector<4x16x1xf32>
    %9 = arith.maximumf %6, %8 : vector<4x16x1xf32>
    %10 = arith.subf %6, %9 : vector<4x16x1xf32>
    %11 = math.exp %10 : vector<4x16x1xf32>
    %12 = vector.broadcast %9 : vector<4x16x1xf32> to vector<4x16x16xf32>
    %13 = arith.subf %5, %12 : vector<4x16x16xf32>
    %14 = math.exp %13 : vector<4x16x16xf32>
    %c0_10 = arith.constant 0 : index
    %c0_11 = arith.constant 0 : index
    %c0_12 = arith.constant 0 : index
    %15 = vector.load %arg8[%c0_10, %c0_11, %c0_12] : memref<4x16x1xf32, #tpu.memory_space<vmem>>, vector<4x16x1xf32>
    %16 = arith.mulf %11, %15 : vector<4x16x1xf32>
    %cst_13 = arith.constant dense<0.000000e+00> : vector<4x16xf32>
    %17 = vector.multi_reduction <add>, %14, %cst_13 [2] : vector<4x16x16xf32> to vector<4x16xf32>
    %18 = vector.shape_cast %17 : vector<4x16xf32> to vector<4x16x1xf32>
    %19 = arith.addf %16, %18 : vector<4x16x1xf32>
    %c0_14 = arith.constant 0 : index
    %c0_15 = arith.constant 0 : index
    %c0_16 = arith.constant 0 : index
    %20 = vector.load %arg8[%c0_14, %c0_15, %c0_16] : memref<4x16x1xf32, #tpu.memory_space<vmem>>, vector<4x16x1xf32>
    tpu.vector_store %arg8[%c0_14, %c0_15, %c0_16], %19 {strides = array<i32>} : memref<4x16x1xf32, #tpu.memory_space<vmem>>, vector<4x16x1xf32>,
    %c0_17 = arith.constant 0 : index
    %c0_18 = arith.constant 0 : index
    %c0_19 = arith.constant 0 : index
    %21 = vector.load %arg9[%c0_17, %c0_18, %c0_19] : memref<4x16x8xf32, #tpu.memory_space<vmem>>, vector<4x16x8xf32>
    %22 = vector.broadcast %11 : vector<4x16x1xf32> to vector<4x16x8xf32>
    %23 = arith.mulf %22, %21 : vector<4x16x8xf32>
    %c0_20 = arith.constant 0 : index
    %c0_21 = arith.constant 0 : index
    %c0_22 = arith.constant 0 : index
    %24 = vector.load %arg5[%c0_20, %c0_21, %c0_22] : memref<4x16x8xf32, #tpu.memory_space<vmem>>, vector<4x16x8xf32>
    "tpu.trace_start"() <{level = 10 : i32, message = "hqk,hkd->hqd"}> : () -> ()
    %cst_23 = arith.constant dense<0.000000e+00> : vector<4x16x8xf32>
    %25 = tpu.matmul %14, %24, %cst_23 {dimension_numbers = #tpu.dot_dimension_numbers<[2], [1], [1], [2], [0, 0, 0, 1, 1, 2], [0], [0]>} : vector<4x16x16xf32>, vector<4x16x8xf32>, vector<4x16x8xf32> -> vector<4x16x8xf32>
    "tpu.trace_stop"() : () -> ()
    %26 = arith.addf %23, %25 : vector<4x16x8xf32>
    %c0_24 = arith.constant 0 : index
    %c0_25 = arith.constant 0 : index
    %c0_26 = arith.constant 0 : index
    %27 = vector.load %arg9[%c0_24, %c0_25, %c0_26] : memref<4x16x8xf32, #tpu.memory_space<vmem>>, vector<4x16x8xf32>
    tpu.vector_store %arg9[%c0_24, %c0_25, %c0_26], %26 {strides = array<i32>} : memref<4x16x8xf32, #tpu.memory_space<vmem>>, vector<4x16x8xf32>,
    %c0_27 = arith.constant 0 : index
    %c0_28 = arith.constant 0 : index
    %c0_29 = arith.constant 0 : index
    %28 = vector.load %arg7[%c0_27, %c0_28, %c0_29] : memref<4x16x1xf32, #tpu.memory_space<vmem>>, vector<4x16x1xf32>
    tpu.vector_store %arg7[%c0_27, %c0_28, %c0_29], %9 {strides = array<i32>} : memref<4x16x1xf32, #tpu.memory_space<vmem>>, vector<4x16x1xf32>,
    %c0_i32_30 = arith.constant 0 : i32
    %29 = arith.cmpi eq, %arg2, %c0_i32_30 : i32
    %30 = arith.extui %29 : i1 to i32
    %c0_i32_31 = arith.constant 0 : i32
    %31 = arith.cmpi ne, %30, %c0_i32_31 : i32
    scf.if %31 {
      %c0_32 = arith.constant 0 : index
      %c0_33 = arith.constant 0 : index
      %c0_34 = arith.constant 0 : index
      %32 = vector.load %arg8[%c0_32, %c0_33, %c0_34] : memref<4x16x1xf32, #tpu.memory_space<vmem>>, vector<4x16x1xf32>
      %33 = tpu.reciprocal %32 {approx = true} : vector<4x16x1xf32> -> vector<4x16x1xf32>
      %c0_35 = arith.constant 0 : index
      %c0_36 = arith.constant 0 : index
      %c0_37 = arith.constant 0 : index
      %34 = vector.load %arg9[%c0_35, %c0_36, %c0_37] : memref<4x16x8xf32, #tpu.memory_space<vmem>>, vector<4x16x8xf32>
      %35 = vector.broadcast %33 : vector<4x16x1xf32> to vector<4x16x8xf32>
      %36 = arith.mulf %34, %35 : vector<4x16x8xf32>
      %c0_38 = arith.constant 0 : index
      %c0_39 = arith.constant 0 : index
      %c0_40 = arith.constant 0 : index
      %37 = vector.load %arg6[%c0_38, %c0_39, %c0_40] : memref<4x16x8xf32, #tpu.memory_space<vmem>>, vector<4x16x8xf32>
      tpu.vector_store %arg6[%c0_38, %c0_39, %c0_40], %36 {strides = array<i32>} : memref<4x16x8xf32, #tpu.memory_space<vmem>>, vector<4x16x8xf32>,
    } else {
    }
    return
  }
  func.func @transform_0(%arg0: i32, %arg1: i32, %arg2: i32) -> (i32, i32, i32) {
    %c0_i32 = arith.constant 0 : i32
    %c0_i32_0 = arith.constant 0 : i32
    return %arg0, %arg1, %c0_i32 : i32, i32, i32
  }
  func.func @transform_1(%arg0: i32, %arg1: i32, %arg2: i32) -> (i32, i32, i32) {
    %c0_i32 = arith.constant 0 : i32
    %c0_i32_0 = arith.constant 0 : i32
    return %arg0, %arg2, %c0_i32 : i32, i32, i32
  }
  func.func @transform_2(%arg0: i32, %arg1: i32, %arg2: i32) -> (i32, i32, i32) {
    %c0_i32 = arith.constant 0 : i32
    %c0_i32_0 = arith.constant 0 : i32
    return %arg0, %arg2, %c0_i32 : i32, i32, i32
  }
  func.func @transform_3(%arg0: i32, %arg1: i32, %arg2: i32) -> (i32, i32, i32) {
    %c0_i32 = arith.constant 0 : i32
    %c0_i32_0 = arith.constant 0 : i32
    return %arg0, %arg1, %c0_i32 : i32, i32, i32
  }
}

module attributes {stable_mosaic.version = 11 : i64} {
  func.func @_ln_swiglu_kernel(%arg0: i32, %arg1: i32, %arg2: memref<32x32xf32, #tpu.memory_space<vmem>>, %arg3: memref<1x32xf32, #tpu.memory_space<vmem>>, %arg4: memref<1x32xf32, #tpu.memory_space<vmem>>, %arg5: memref<32x85xf32, #tpu.memory_space<vmem>>, %arg6: memref<1x85xf32, #tpu.memory_space<vmem>>, %arg7: memref<32x85xf32, #tpu.memory_space<vmem>>, %arg8: memref<1x85xf32, #tpu.memory_space<vmem>>, %arg9: memref<85x32xf32, #tpu.memory_space<vmem>>, %arg10: memref<1x32xf32, #tpu.memory_space<vmem>>, %arg11: memref<32x32xf32, #tpu.memory_space<vmem>>, %arg12: memref<32x32xf32, #tpu.memory_space<vmem>>, %arg13: memref<32x32xf32, #tpu.memory_space<vmem>>) attributes {dimension_semantics = [#tpu.dimension_semantics<parallel>, #tpu.dimension_semantics<arbitrary>], iteration_bounds = array<i64: 1, 1>, scalar_prefetch = 0 : i64, scratch_operands = 2 : i64, tpu.core_type = #tpu.core_type<tc>, window_params = [{transform_indices = @transform_0, window_bounds = array<i64: 32, 32>}, {pipeline_mode = #tpu.pipeline_mode<synchronous>, transform_indices = @transform_1, window_bounds = array<i64: 1, 32>}, {pipeline_mode = #tpu.pipeline_mode<synchronous>, transform_indices = @transform_2, window_bounds = array<i64: 1, 32>}, {transform_indices = @transform_3, window_bounds = array<i64: 32, 85>}, {transform_indices = @transform_4, window_bounds = array<i64: 1, 85>}, {transform_indices = @transform_5, window_bounds = array<i64: 32, 85>}, {transform_indices = @transform_6, window_bounds = array<i64: 1, 85>}, {transform_indices = @transform_7, window_bounds = array<i64: 85, 32>}, {pipeline_mode = #tpu.pipeline_mode<synchronous>, transform_indices = @transform_8, window_bounds = array<i64: 1, 32>}, {transform_indices = @transform_9, window_bounds = array<i64: 32, 32>}]} {
    %c0_i32 = arith.constant 0 : i32
    %0 = arith.cmpi eq, %arg1, %c0_i32 : i32
    %1 = arith.extui %0 : i1 to i32
    %c0_i32_0 = arith.constant 0 : i32
    %2 = arith.cmpi ne, %1, %c0_i32_0 : i32
    scf.if %2 {
      %cst_21 = arith.constant 0.000000e+00 : f32
      %29 = vector.broadcast %cst_21 : f32 to vector<32x32xf32>
      %c0_22 = arith.constant 0 : index
      %c0_23 = arith.constant 0 : index
      %30 = vector.load %arg12[%c0_22, %c0_23] : memref<32x32xf32, #tpu.memory_space<vmem>>, vector<32x32xf32>
      tpu.vector_store %arg12[%c0_22, %c0_23], %29 {strides = array<i32>} : memref<32x32xf32, #tpu.memory_space<vmem>>, vector<32x32xf32>,
      %c0_24 = arith.constant 0 : index
      %c0_25 = arith.constant 0 : index
      %31 = vector.load %arg2[%c0_24, %c0_25] : memref<32x32xf32, #tpu.memory_space<vmem>>, vector<32x32xf32>
      %cst_26 = arith.constant dense<0.000000e+00> : vector<32xf32>
      %32 = vector.multi_reduction <add>, %31, %cst_26 [1] : vector<32x32xf32> to vector<32xf32>
      %33 = vector.shape_cast %32 : vector<32xf32> to vector<32x1xf32>
      %cst_27 = arith.constant 3.200000e+01 : f32
      %34 = vector.broadcast %cst_27 : f32 to vector<32x1xf32>
      %35 = arith.divf %33, %34 : vector<32x1xf32>
      %36 = vector.broadcast %35 : vector<32x1xf32> to vector<32x32xf32>
      %37 = arith.subf %31, %36 : vector<32x32xf32>
      %38 = arith.mulf %37, %37 : vector<32x32xf32>
      %cst_28 = arith.constant dense<0.000000e+00> : vector<32xf32>
      %39 = vector.multi_reduction <add>, %38, %cst_28 [1] : vector<32x32xf32> to vector<32xf32>
      %40 = vector.shape_cast %39 : vector<32xf32> to vector<32x1xf32>
      %cst_29 = arith.constant 3.200000e+01 : f32
      %41 = vector.broadcast %cst_29 : f32 to vector<32x1xf32>
      %42 = arith.divf %40, %41 : vector<32x1xf32>
      %43 = vector.broadcast %35 : vector<32x1xf32> to vector<32x32xf32>
      %44 = arith.subf %31, %43 : vector<32x32xf32>
      %cst_30 = arith.constant 9.99999997E-7 : f32
      %45 = vector.broadcast %cst_30 : f32 to vector<32x1xf32>
      %46 = arith.addf %42, %45 : vector<32x1xf32>
      %47 = math.rsqrt %46 : vector<32x1xf32>
      %48 = vector.broadcast %47 : vector<32x1xf32> to vector<32x32xf32>
      %49 = arith.mulf %44, %48 : vector<32x32xf32>
      %c0_31 = arith.constant 0 : index
      %c0_32 = arith.constant 0 : index
      %50 = vector.load %arg3[%c0_31, %c0_32] : memref<1x32xf32, #tpu.memory_space<vmem>>, vector<1x32xf32>
      %51 = vector.broadcast %50 : vector<1x32xf32> to vector<32x32xf32>
      %52 = arith.mulf %49, %51 : vector<32x32xf32>
      %c0_33 = arith.constant 0 : index
      %c0_34 = arith.constant 0 : index
      %53 = vector.load %arg4[%c0_33, %c0_34] : memref<1x32xf32, #tpu.memory_space<vmem>>, vector<1x32xf32>
      %54 = vector.broadcast %53 : vector<1x32xf32> to vector<32x32xf32>
      %55 = arith.addf %52, %54 : vector<32x32xf32>
      %c0_35 = arith.constant 0 : index
      %c0_36 = arith.constant 0 : index
      %56 = vector.load %arg13[%c0_35, %c0_36] : memref<32x32xf32, #tpu.memory_space<vmem>>, vector<32x32xf32>
      tpu.vector_store %arg13[%c0_35, %c0_36], %55 {strides = array<i32>} : memref<32x32xf32, #tpu.memory_space<vmem>>, vector<32x32xf32>,
    } else {
    }
    %c0 = arith.constant 0 : index
    %c0_1 = arith.constant 0 : index
    %3 = vector.load %arg13[%c0, %c0_1] : memref<32x32xf32, #tpu.memory_space<vmem>>, vector<32x32xf32>
    %c0_2 = arith.constant 0 : index
    %c0_3 = arith.constant 0 : index
    %4 = vector.load %arg5[%c0_2, %c0_3] : memref<32x85xf32, #tpu.memory_space<vmem>>, vector<32x85xf32>
    %cst = arith.constant dense<0.000000e+00> : vector<32x85xf32>
    %5 = tpu.matmul %3, %4, %cst {dimension_numbers = #tpu.dot_dimension_numbers<[1], [0], [0], [1], [0, 0, 1, 1], [], []>} : vector<32x32xf32>, vector<32x85xf32>, vector<32x85xf32> -> vector<32x85xf32>
    %c0_4 = arith.constant 0 : index
    %c0_5 = arith.constant 0 : index
    %6 = vector.load %arg6[%c0_4, %c0_5] : memref<1x85xf32, #tpu.memory_space<vmem>>, vector<1x85xf32>
    %7 = vector.broadcast %6 : vector<1x85xf32> to vector<32x85xf32>
    %8 = arith.addf %5, %7 : vector<32x85xf32>
    %c0_6 = arith.constant 0 : index
    %c0_7 = arith.constant 0 : index
    %9 = vector.load %arg7[%c0_6, %c0_7] : memref<32x85xf32, #tpu.memory_space<vmem>>, vector<32x85xf32>
    %cst_8 = arith.constant dense<0.000000e+00> : vector<32x85xf32>
    %10 = tpu.matmul %3, %9, %cst_8 {dimension_numbers = #tpu.dot_dimension_numbers<[1], [0], [0], [1], [0, 0, 1, 1], [], []>} : vector<32x32xf32>, vector<32x85xf32>, vector<32x85xf32> -> vector<32x85xf32>
    %c0_9 = arith.constant 0 : index
    %c0_10 = arith.constant 0 : index
    %11 = vector.load %arg8[%c0_9, %c0_10] : memref<1x85xf32, #tpu.memory_space<vmem>>, vector<1x85xf32>
    %12 = vector.broadcast %11 : vector<1x85xf32> to vector<32x85xf32>
    %13 = arith.addf %10, %12 : vector<32x85xf32>
    %14 = arith.negf %8 : vector<32x85xf32>
    %15 = math.exp %14 : vector<32x85xf32>
    %cst_11 = arith.constant 1.000000e+00 : f32
    %16 = vector.broadcast %cst_11 : f32 to vector<32x85xf32>
    %17 = arith.addf %16, %15 : vector<32x85xf32>
    %18 = arith.divf %16, %17 : vector<32x85xf32>
    %19 = arith.mulf %8, %18 : vector<32x85xf32>
    %20 = arith.mulf %19, %13 : vector<32x85xf32>
    %c0_12 = arith.constant 0 : index
    %c0_13 = arith.constant 0 : index
    %21 = vector.load %arg12[%c0_12, %c0_13] : memref<32x32xf32, #tpu.memory_space<vmem>>, vector<32x32xf32>
    %c0_14 = arith.constant 0 : index
    %c0_15 = arith.constant 0 : index
    %22 = vector.load %arg9[%c0_14, %c0_15] : memref<85x32xf32, #tpu.memory_space<vmem>>, vector<85x32xf32>
    %cst_16 = arith.constant dense<0.000000e+00> : vector<32x32xf32>
    %23 = tpu.matmul %20, %22, %cst_16 {dimension_numbers = #tpu.dot_dimension_numbers<[1], [0], [0], [1], [0, 0, 1, 1], [], []>} : vector<32x85xf32>, vector<85x32xf32>, vector<32x32xf32> -> vector<32x32xf32>
    %24 = arith.addf %21, %23 : vector<32x32xf32>
    %c0_17 = arith.constant 0 : index
    %c0_18 = arith.constant 0 : index
    %25 = vector.load %arg12[%c0_17, %c0_18] : memref<32x32xf32, #tpu.memory_space<vmem>>, vector<32x32xf32>
    tpu.vector_store %arg12[%c0_17, %c0_18], %24 {strides = array<i32>} : memref<32x32xf32, #tpu.memory_space<vmem>>, vector<32x32xf32>,
    %c0_i32_19 = arith.constant 0 : i32
    %26 = arith.cmpi eq, %arg1, %c0_i32_19 : i32
    %27 = arith.extui %26 : i1 to i32
    %c0_i32_20 = arith.constant 0 : i32
    %28 = arith.cmpi ne, %27, %c0_i32_20 : i32
    scf.if %28 {
      %c0_21 = arith.constant 0 : index
      %c0_22 = arith.constant 0 : index
      %29 = vector.load %arg12[%c0_21, %c0_22] : memref<32x32xf32, #tpu.memory_space<vmem>>, vector<32x32xf32>
      %c0_23 = arith.constant 0 : index
      %c0_24 = arith.constant 0 : index
      %30 = vector.load %arg10[%c0_23, %c0_24] : memref<1x32xf32, #tpu.memory_space<vmem>>, vector<1x32xf32>
      %31 = vector.broadcast %30 : vector<1x32xf32> to vector<32x32xf32>
      %32 = arith.addf %29, %31 : vector<32x32xf32>
      %c0_25 = arith.constant 0 : index
      %c0_26 = arith.constant 0 : index
      %33 = vector.load %arg2[%c0_25, %c0_26] : memref<32x32xf32, #tpu.memory_space<vmem>>, vector<32x32xf32>
      %34 = arith.addf %32, %33 : vector<32x32xf32>
      %c0_27 = arith.constant 0 : index
      %c0_28 = arith.constant 0 : index
      %35 = vector.load %arg11[%c0_27, %c0_28] : memref<32x32xf32, #tpu.memory_space<vmem>>, vector<32x32xf32>
      tpu.vector_store %arg11[%c0_27, %c0_28], %34 {strides = array<i32>} : memref<32x32xf32, #tpu.memory_space<vmem>>, vector<32x32xf32>,
    } else {
    }
    return
  }
  func.func @transform_0(%arg0: i32, %arg1: i32) -> (i32, i32) {
    %c0_i32 = arith.constant 0 : i32
    %c0_i32_0 = arith.constant 0 : i32
    return %arg0, %c0_i32 : i32, i32
  }
  func.func @transform_1(%arg0: i32, %arg1: i32) -> (i32, i32) {
    %c0_i32 = arith.constant 0 : i32
    %c0_i32_0 = arith.constant 0 : i32
    %c0_i32_1 = arith.constant 0 : i32
    return %c0_i32, %c0_i32_0 : i32, i32
  }
  func.func @transform_2(%arg0: i32, %arg1: i32) -> (i32, i32) {
    %c0_i32 = arith.constant 0 : i32
    %c0_i32_0 = arith.constant 0 : i32
    %c0_i32_1 = arith.constant 0 : i32
    return %c0_i32, %c0_i32_0 : i32, i32
  }
  func.func @transform_3(%arg0: i32, %arg1: i32) -> (i32, i32) {
    %c0_i32 = arith.constant 0 : i32
    %c0_i32_0 = arith.constant 0 : i32
    return %c0_i32, %arg1 : i32, i32
  }
  func.func @transform_4(%arg0: i32, %arg1: i32) -> (i32, i32) {
    %c0_i32 = arith.constant 0 : i32
    %c0_i32_0 = arith.constant 0 : i32
    return %c0_i32, %arg1 : i32, i32
  }
  func.func @transform_5(%arg0: i32, %arg1: i32) -> (i32, i32) {
    %c0_i32 = arith.constant 0 : i32
    %c0_i32_0 = arith.constant 0 : i32
    return %c0_i32, %arg1 : i32, i32
  }
  func.func @transform_6(%arg0: i32, %arg1: i32) -> (i32, i32) {
    %c0_i32 = arith.constant 0 : i32
    %c0_i32_0 = arith.constant 0 : i32
    return %c0_i32, %arg1 : i32, i32
  }
  func.func @transform_7(%arg0: i32, %arg1: i32) -> (i32, i32) {
    %c0_i32 = arith.constant 0 : i32
    %c0_i32_0 = arith.constant 0 : i32
    return %arg1, %c0_i32 : i32, i32
  }
  func.func @transform_8(%arg0: i32, %arg1: i32) -> (i32, i32) {
    %c0_i32 = arith.constant 0 : i32
    %c0_i32_0 = arith.constant 0 : i32
    %c0_i32_1 = arith.constant 0 : i32
    return %c0_i32, %c0_i32_0 : i32, i32
  }
  func.func @transform_9(%arg0: i32, %arg1: i32) -> (i32, i32) {
    %c0_i32 = arith.constant 0 : i32
    %c0_i32_0 = arith.constant 0 : i32
    return %arg0, %c0_i32 : i32, i32
  }
}

module attributes {stable_mosaic.version = 11 : i64} {
  func.func @_ln_swiglu_kernel(%arg0: i32, %arg1: i32, %arg2: memref<32x32xf32, #tpu.memory_space<vmem>>, %arg3: memref<1x32xf32, #tpu.memory_space<vmem>>, %arg4: memref<1x32xf32, #tpu.memory_space<vmem>>, %arg5: memref<32x85xf32, #tpu.memory_space<vmem>>, %arg6: memref<1x85xf32, #tpu.memory_space<vmem>>, %arg7: memref<32x85xf32, #tpu.memory_space<vmem>>, %arg8: memref<1x85xf32, #tpu.memory_space<vmem>>, %arg9: memref<85x32xf32, #tpu.memory_space<vmem>>, %arg10: memref<1x32xf32, #tpu.memory_space<vmem>>, %arg11: memref<32x32xf32, #tpu.memory_space<vmem>>, %arg12: memref<32x32xf32, #tpu.memory_space<vmem>>, %arg13: memref<32x32xf32, #tpu.memory_space<vmem>>) attributes {dimension_semantics = [#tpu.dimension_semantics<parallel>, #tpu.dimension_semantics<arbitrary>], iteration_bounds = array<i64: 1, 1>, scalar_prefetch = 0 : i64, scratch_operands = 2 : i64, tpu.core_type = #tpu.core_type<tc>, window_params = [{transform_indices = @transform_0, window_bounds = array<i64: 32, 32>}, {pipeline_mode = #tpu.pipeline_mode<synchronous>, transform_indices = @transform_1, window_bounds = array<i64: 1, 32>}, {pipeline_mode = #tpu.pipeline_mode<synchronous>, transform_indices = @transform_2, window_bounds = array<i64: 1, 32>}, {transform_indices = @transform_3, window_bounds = array<i64: 32, 85>}, {transform_indices = @transform_4, window_bounds = array<i64: 1, 85>}, {transform_indices = @transform_5, window_bounds = array<i64: 32, 85>}, {transform_indices = @transform_6, window_bounds = array<i64: 1, 85>}, {transform_indices = @transform_7, window_bounds = array<i64: 85, 32>}, {pipeline_mode = #tpu.pipeline_mode<synchronous>, transform_indices = @transform_8, window_bounds = array<i64: 1, 32>}, {transform_indices = @transform_9, window_bounds = array<i64: 32, 32>}]} {
    %c0_i32 = arith.constant 0 : i32
    %0 = arith.cmpi eq, %arg1, %c0_i32 : i32
    %1 = arith.extui %0 : i1 to i32
    %c0_i32_0 = arith.constant 0 : i32
    %2 = arith.cmpi ne, %1, %c0_i32_0 : i32
    scf.if %2 {
      %cst_21 = arith.constant 0.000000e+00 : f32
      %29 = vector.broadcast %cst_21 : f32 to vector<32x32xf32>
      %c0_22 = arith.constant 0 : index
      %c0_23 = arith.constant 0 : index
      %30 = vector.load %arg12[%c0_22, %c0_23] : memref<32x32xf32, #tpu.memory_space<vmem>>, vector<32x32xf32>
      tpu.vector_store %arg12[%c0_22, %c0_23], %29 {strides = array<i32>} : memref<32x32xf32, #tpu.memory_space<vmem>>, vector<32x32xf32>,
      %c0_24 = arith.constant 0 : index
      %c0_25 = arith.constant 0 : index
      %31 = vector.load %arg2[%c0_24, %c0_25] : memref<32x32xf32, #tpu.memory_space<vmem>>, vector<32x32xf32>
      %cst_26 = arith.constant dense<0.000000e+00> : vector<32xf32>
      %32 = vector.multi_reduction <add>, %31, %cst_26 [1] : vector<32x32xf32> to vector<32xf32>
      %33 = vector.shape_cast %32 : vector<32xf32> to vector<32x1xf32>
      %cst_27 = arith.constant 3.200000e+01 : f32
      %34 = vector.broadcast %cst_27 : f32 to vector<32x1xf32>
      %35 = arith.divf %33, %34 : vector<32x1xf32>
      %36 = vector.broadcast %35 : vector<32x1xf32> to vector<32x32xf32>
      %37 = arith.subf %31, %36 : vector<32x32xf32>
      %38 = arith.mulf %37, %37 : vector<32x32xf32>
      %cst_28 = arith.constant dense<0.000000e+00> : vector<32xf32>
      %39 = vector.multi_reduction <add>, %38, %cst_28 [1] : vector<32x32xf32> to vector<32xf32>
      %40 = vector.shape_cast %39 : vector<32xf32> to vector<32x1xf32>
      %cst_29 = arith.constant 3.200000e+01 : f32
      %41 = vector.broadcast %cst_29 : f32 to vector<32x1xf32>
      %42 = arith.divf %40, %41 : vector<32x1xf32>
      %43 = vector.broadcast %35 : vector<32x1xf32> to vector<32x32xf32>
      %44 = arith.subf %31, %43 : vector<32x32xf32>
      %cst_30 = arith.constant 9.99999997E-7 : f32
      %45 = vector.broadcast %cst_30 : f32 to vector<32x1xf32>
      %46 = arith.addf %42, %45 : vector<32x1xf32>
      %47 = math.rsqrt %46 : vector<32x1xf32>
      %48 = vector.broadcast %47 : vector<32x1xf32> to vector<32x32xf32>
      %49 = arith.mulf %44, %48 : vector<32x32xf32>
      %c0_31 = arith.constant 0 : index
      %c0_32 = arith.constant 0 : index
      %50 = vector.load %arg3[%c0_31, %c0_32] : memref<1x32xf32, #tpu.memory_space<vmem>>, vector<1x32xf32>
      %51 = vector.broadcast %50 : vector<1x32xf32> to vector<32x32xf32>
      %52 = arith.mulf %49, %51 : vector<32x32xf32>
      %c0_33 = arith.constant 0 : index
      %c0_34 = arith.constant 0 : index
      %53 = vector.load %arg4[%c0_33, %c0_34] : memref<1x32xf32, #tpu.memory_space<vmem>>, vector<1x32xf32>
      %54 = vector.broadcast %53 : vector<1x32xf32> to vector<32x32xf32>
      %55 = arith.addf %52, %54 : vector<32x32xf32>
      %c0_35 = arith.constant 0 : index
      %c0_36 = arith.constant 0 : index
      %56 = vector.load %arg13[%c0_35, %c0_36] : memref<32x32xf32, #tpu.memory_space<vmem>>, vector<32x32xf32>
      tpu.vector_store %arg13[%c0_35, %c0_36], %55 {strides = array<i32>} : memref<32x32xf32, #tpu.memory_space<vmem>>, vector<32x32xf32>,
    } else {
    }
    %c0 = arith.constant 0 : index
    %c0_1 = arith.constant 0 : index
    %3 = vector.load %arg13[%c0, %c0_1] : memref<32x32xf32, #tpu.memory_space<vmem>>, vector<32x32xf32>
    %c0_2 = arith.constant 0 : index
    %c0_3 = arith.constant 0 : index
    %4 = vector.load %arg5[%c0_2, %c0_3] : memref<32x85xf32, #tpu.memory_space<vmem>>, vector<32x85xf32>
    %cst = arith.constant dense<0.000000e+00> : vector<32x85xf32>
    %5 = tpu.matmul %3, %4, %cst {dimension_numbers = #tpu.dot_dimension_numbers<[1], [0], [0], [1], [0, 0, 1, 1], [], []>} : vector<32x32xf32>, vector<32x85xf32>, vector<32x85xf32> -> vector<32x85xf32>
    %c0_4 = arith.constant 0 : index
    %c0_5 = arith.constant 0 : index
    %6 = vector.load %arg6[%c0_4, %c0_5] : memref<1x85xf32, #tpu.memory_space<vmem>>, vector<1x85xf32>
    %7 = vector.broadcast %6 : vector<1x85xf32> to vector<32x85xf32>
    %8 = arith.addf %5, %7 : vector<32x85xf32>
    %c0_6 = arith.constant 0 : index
    %c0_7 = arith.constant 0 : index
    %9 = vector.load %arg7[%c0_6, %c0_7] : memref<32x85xf32, #tpu.memory_space<vmem>>, vector<32x85xf32>
    %cst_8 = arith.constant dense<0.000000e+00> : vector<32x85xf32>
    %10 = tpu.matmul %3, %9, %cst_8 {dimension_numbers = #tpu.dot_dimension_numbers<[1], [0], [0], [1], [0, 0, 1, 1], [], []>} : vector<32x32xf32>, vector<32x85xf32>, vector<32x85xf32> -> vector<32x85xf32>
    %c0_9 = arith.constant 0 : index
    %c0_10 = arith.constant 0 : index
    %11 = vector.load %arg8[%c0_9, %c0_10] : memref<1x85xf32, #tpu.memory_space<vmem>>, vector<1x85xf32>
    %12 = vector.broadcast %11 : vector<1x85xf32> to vector<32x85xf32>
    %13 = arith.addf %10, %12 : vector<32x85xf32>
    %14 = arith.negf %8 : vector<32x85xf32>
    %15 = math.exp %14 : vector<32x85xf32>
    %cst_11 = arith.constant 1.000000e+00 : f32
    %16 = vector.broadcast %cst_11 : f32 to vector<32x85xf32>
    %17 = arith.addf %16, %15 : vector<32x85xf32>
    %18 = arith.divf %16, %17 : vector<32x85xf32>
    %19 = arith.mulf %8, %18 : vector<32x85xf32>
    %20 = arith.mulf %19, %13 : vector<32x85xf32>
    %c0_12 = arith.constant 0 : index
    %c0_13 = arith.constant 0 : index
    %21 = vector.load %arg12[%c0_12, %c0_13] : memref<32x32xf32, #tpu.memory_space<vmem>>, vector<32x32xf32>
    %c0_14 = arith.constant 0 : index
    %c0_15 = arith.constant 0 : index
    %22 = vector.load %arg9[%c0_14, %c0_15] : memref<85x32xf32, #tpu.memory_space<vmem>>, vector<85x32xf32>
    %cst_16 = arith.constant dense<0.000000e+00> : vector<32x32xf32>
    %23 = tpu.matmul %20, %22, %cst_16 {dimension_numbers = #tpu.dot_dimension_numbers<[1], [0], [0], [1], [0, 0, 1, 1], [], []>} : vector<32x85xf32>, vector<85x32xf32>, vector<32x32xf32> -> vector<32x32xf32>
    %24 = arith.addf %21, %23 : vector<32x32xf32>
    %c0_17 = arith.constant 0 : index
    %c0_18 = arith.constant 0 : index
    %25 = vector.load %arg12[%c0_17, %c0_18] : memref<32x32xf32, #tpu.memory_space<vmem>>, vector<32x32xf32>
    tpu.vector_store %arg12[%c0_17, %c0_18], %24 {strides = array<i32>} : memref<32x32xf32, #tpu.memory_space<vmem>>, vector<32x32xf32>,
    %c0_i32_19 = arith.constant 0 : i32
    %26 = arith.cmpi eq, %arg1, %c0_i32_19 : i32
    %27 = arith.extui %26 : i1 to i32
    %c0_i32_20 = arith.constant 0 : i32
    %28 = arith.cmpi ne, %27, %c0_i32_20 : i32
    scf.if %28 {
      %c0_21 = arith.constant 0 : index
      %c0_22 = arith.constant 0 : index
      %29 = vector.load %arg12[%c0_21, %c0_22] : memref<32x32xf32, #tpu.memory_space<vmem>>, vector<32x32xf32>
      %c0_23 = arith.constant 0 : index
      %c0_24 = arith.constant 0 : index
      %30 = vector.load %arg10[%c0_23, %c0_24] : memref<1x32xf32, #tpu.memory_space<vmem>>, vector<1x32xf32>
      %31 = vector.broadcast %30 : vector<1x32xf32> to vector<32x32xf32>
      %32 = arith.addf %29, %31 : vector<32x32xf32>
      %c0_25 = arith.constant 0 : index
      %c0_26 = arith.constant 0 : index
      %33 = vector.load %arg2[%c0_25, %c0_26] : memref<32x32xf32, #tpu.memory_space<vmem>>, vector<32x32xf32>
      %34 = arith.addf %32, %33 : vector<32x32xf32>
      %c0_27 = arith.constant 0 : index
      %c0_28 = arith.constant 0 : index
      %35 = vector.load %arg11[%c0_27, %c0_28] : memref<32x32xf32, #tpu.memory_space<vmem>>, vector<32x32xf32>
      tpu.vector_store %arg11[%c0_27, %c0_28], %34 {strides = array<i32>} : memref<32x32xf32, #tpu.memory_space<vmem>>, vector<32x32xf32>,
    } else {
    }
    return
  }
  func.func @transform_0(%arg0: i32, %arg1: i32) -> (i32, i32) {
    %c0_i32 = arith.constant 0 : i32
    %c0_i32_0 = arith.constant 0 : i32
    return %arg0, %c0_i32 : i32, i32
  }
  func.func @transform_1(%arg0: i32, %arg1: i32) -> (i32, i32) {
    %c0_i32 = arith.constant 0 : i32
    %c0_i32_0 = arith.constant 0 : i32
    %c0_i32_1 = arith.constant 0 : i32
    return %c0_i32, %c0_i32_0 : i32, i32
  }
  func.func @transform_2(%arg0: i32, %arg1: i32) -> (i32, i32) {
    %c0_i32 = arith.constant 0 : i32
    %c0_i32_0 = arith.constant 0 : i32
    %c0_i32_1 = arith.constant 0 : i32
    return %c0_i32, %c0_i32_0 : i32, i32
  }
  func.func @transform_3(%arg0: i32, %arg1: i32) -> (i32, i32) {
    %c0_i32 = arith.constant 0 : i32
    %c0_i32_0 = arith.constant 0 : i32
    return %c0_i32, %arg1 : i32, i32
  }
  func.func @transform_4(%arg0: i32, %arg1: i32) -> (i32, i32) {
    %c0_i32 = arith.constant 0 : i32
    %c0_i32_0 = arith.constant 0 : i32
    return %c0_i32, %arg1 : i32, i32
  }
  func.func @transform_5(%arg0: i32, %arg1: i32) -> (i32, i32) {
    %c0_i32 = arith.constant 0 : i32
    %c0_i32_0 = arith.constant 0 : i32
    return %c0_i32, %arg1 : i32, i32
  }
  func.func @transform_6(%arg0: i32, %arg1: i32) -> (i32, i32) {
    %c0_i32 = arith.constant 0 : i32
    %c0_i32_0 = arith.constant 0 : i32
    return %c0_i32, %arg1 : i32, i32
  }
  func.func @transform_7(%arg0: i32, %arg1: i32) -> (i32, i32) {
    %c0_i32 = arith.constant 0 : i32
    %c0_i32_0 = arith.constant 0 : i32
    return %arg1, %c0_i32 : i32, i32
  }
  func.func @transform_8(%arg0: i32, %arg1: i32) -> (i32, i32) {
    %c0_i32 = arith.constant 0 : i32
    %c0_i32_0 = arith.constant 0 : i32
    %c0_i32_1 = arith.constant 0 : i32
    return %c0_i32, %c0_i32_0 : i32, i32
  }
  func.func @transform_9(%arg0: i32, %arg1: i32) -> (i32, i32) {
    %c0_i32 = arith.constant 0 : i32
    %c0_i32_0 = arith.constant 0 : i32
    return %arg0, %c0_i32 : i32, i32
  }
}

</mosaic_0001>

<llo_original>
// kernel: vit_forward.9
$region0: #{vit_forward.9}
  #allocation0 [shape = 'u32[]', space=smem, size = 0x4, offset = 0x4, fixed_abs, tag = 'smem constant byte address 0x4 - core index']
  #allocation1 [shape = 'u32[144,128]{1,0:T(1,128)}', space=vmem, size = 0x12000, scoped, tag = 'internal scratch']
  %s0 = inlined_call_operand.vmem [shape: f32[32,48], index: 0, kind: input, shape index: {}]
  %s1 = inlined_call_operand.vmem [shape: f32[48,32], index: 1, kind: input, shape index: {}]
  %s2 = inlined_call_operand.vmem [shape: f32[1,32], index: 2, kind: input, shape index: {}]
  %s3 = inlined_call_operand.vmem [shape: f32[32,32], index: 3, kind: output, shape index: {}]
  %s4 = sld [smem:[#allocation0]]
  $region22: #{vit_forward.9} parent=0
    _
  %s6 = ssub.s32 1, %s4
  %s7 = scalar_select 0, %s6, %s4
  // Predicated region
  $region2: #{vit_forward.9} parent=0 // pred_check
    _
  $region3: #{vit_forward.9} parent=0 // pred_check_branch
    %9 = sbr.rel (0) target = $region5
  $region4: #{vit_forward.9} parent=0 // pred_region
    _
  $region5: #{vit_forward.9} parent=0 // pred_fallthru
    _
  // Predicated region
  $region6: #{vit_forward.9} parent=0 // pred_check
    _
  $region7: #{vit_forward.9} parent=0 // pred_check_branch
    %11 = sbr.rel (0) target = $region9
  $region8: #{vit_forward.9} parent=0 // pred_region
    _
  $region9: #{vit_forward.9} parent=0 // pred_fallthru
    _
  // Predicated region
  $region10: #{vit_forward.9} parent=0 // pred_check
    _
  $region11: #{vit_forward.9} parent=0 // pred_check_branch
    %13 = sbr.rel (0) target = $region13
  $region12: #{vit_forward.9} parent=0 // pred_region
    _
  $region13: #{vit_forward.9} parent=0 // pred_fallthru
    _
  %v14 = vld [vmem:[%s0] sm:$0xff]
  %v15 = vld [vmem:[%s0 + $0x8] sm:$0xff]
  %v16 = vld [vmem:[%s0 + $0x10] sm:$0xff]
  %v17 = vld [vmem:[%s0 + $0x18] sm:$0xff]
  %v18 = vld [vmem:[%s1] sm:$0xff]
  %v19 = vld [vmem:[%s1 + $0x8] sm:$0xff]
  %v20 = vld [vmem:[%s1 + $0x10] sm:$0xff]
  %v21 = vld [vmem:[%s1 + $0x18] sm:$0xff]
  %v22 = vld [vmem:[%s1 + $0x20] sm:$0xff]
  %v23 = vld [vmem:[%s1 + $0x28] sm:$0xff]
  %v24 = vld [vmem:[%s2] sm:$0x1]
  %v26 = vlaneseq
  %v27 = vshrl.u32 %v26, 7
  %v28 = vsub.s32 0, %v27
  %v29 = vrot.slane %v24, %v28
  %vm31 = vcmask 392192
  %v33 = vsel %vm31, %v14, 0
  %v36 = vsel %vm31, %v15, 0
  %v39 = vsel %vm31, %v16, 0
  %v42 = vsel %vm31, %v17, 0
  %44 = vmatprep.subr.mxu0 0.0
  %45 = vmatpush1.msra.mxu0 0.0
  %46 = vmatprep.subr.mxu0 0.0
  %47 = vmatpush1.msra.mxu0 0.0
  %48 = vmatprep.subr.mxu0 0.0
  %49 = vmatpush1.msra.mxu0 0.0
  %50 = vmatprep.subr.mxu0 0.0
  %51 = vmatpush1.msra.mxu0 0.0
  %52 = vmatprep.subr.mxu0 0.0
  %53 = vmatpush1.msra.mxu0 0.0
  %54 = vmatprep.subr.mxu0 0.0
  %55 = vmatpush1.msra.mxu0 0.0
  %56 = vmatprep.subr.mxu0 0.0
  %57 = vmatpush1.msra.mxu0 0.0
  %58 = vmatprep.subr.mxu0 0.0
  %59 = vmatpush1.msra.mxu0 0.0
  %60 = vmatprep.subr.mxu0 0.0
  %61 = vmatpush1.msra.mxu0 0.0
  %62 = vmatprep.subr.mxu0 0.0
  %63 = vmatpush1.msra.mxu0 0.0
  %64 = vmatprep.subr.mxu0 0.0
  %65 = vmatpush1.msra.mxu0 %v23
  %66 = vmatprep.subr.mxu0 0.0
  %67 = vmatpush1.msra.mxu0 %v22
  %68 = vmatprep.subr.mxu0 0.0
  %69 = vmatpush1.msra.mxu0 %v21
  %70 = vmatprep.subr.mxu0 0.0
  %71 = vmatpush1.msra.mxu0 %v20
  %72 = vmatprep.subr.mxu0 0.0
  %73 = vmatpush1.msra.mxu0 %v19
  %74 = vmatprep.subr.mxu0 0.0
  %75 = vmatpush1.msra.mxu0 %v18
  %76 = vmatprep.subr.mxu0 0.0
  %77 = vmatpush2.msra.mxu0 0.0
  %78 = vmatprep.subr.mxu0 0.0
  %79 = vmatpush2.msra.mxu0 0.0
  %80 = vmatprep.subr.mxu0 0.0
  %81 = vmatpush2.msra.mxu0 0.0
  %82 = vmatprep.subr.mxu0 0.0
  %83 = vmatpush2.msra.mxu0 0.0
  %84 = vmatprep.subr.mxu0 0.0
  %85 = vmatpush2.msra.mxu0 0.0
  %86 = vmatprep.subr.mxu0 0.0
  %87 = vmatpush2.msra.mxu0 0.0
  %88 = vmatprep.subr.mxu0 0.0
  %89 = vmatpush2.msra.mxu0 0.0
  %90 = vmatprep.subr.mxu0 0.0
  %91 = vmatpush2.msra.mxu0 0.0
  %92 = vmatprep.subr.mxu0 0.0
  %93 = vmatpush2.msra.mxu0 0.0
  %94 = vmatprep.subr.mxu0 0.0
  %95 = vmatpush2.msra.mxu0 0.0
  %96 = vmatprep.subr.mxu0 0.0
  %97 = vmatpush2.msra.mxu0 0.0
  %98 = vmatprep.subr.mxu0 0.0
  %99 = vmatpush2.msra.mxu0 0.0
  %100 = vmatprep.subr.mxu0 0.0
  %101 = vmatpush2.msra.mxu0 0.0
  %102 = vmatprep.subr.mxu0 0.0
  %103 = vmatpush2.msra.mxu0 0.0
  %104 = vmatprep.subr.mxu0 0.0
  %105 = vmatpush2.msra.mxu0 0.0
  %106 = vmatprep.subr.mxu0 0.0
  %107 = vmatpush2.msra.mxu0 0.0
  %108 = vmatprep.mubr.f32.mxu0 0.0
  %109 = vmatmul.mubr.f32.gmra.mxu0 %v33
  %v110 = vpop.f32.mrf.mxu0
  %v111 = vadd.f32 %v29, %v110
  %v112 = vpop.f32.mrf.mxu0
  %113 = vmatprep.mubr.f32.mxu0 0.0
  %114 = vmatmul.mubr.f32.gmra.mxu0 %v36
  %v115 = vpop.f32.mrf.mxu0
  %v116 = vadd.f32 %v29, %v115
  %v117 = vpop.f32.mrf.mxu0
  %118 = vmatprep.mubr.f32.mxu0 0.0
  %119 = vmatmul.mubr.f32.gmra.mxu0 %v39
  %v120 = vpop.f32.mrf.mxu0
  %v121 = vadd.f32 %v29, %v120
  %v122 = vpop.f32.mrf.mxu0
  %123 = vmatprep.mubr.f32.mxu0 0.0
  %124 = vmatmul.mubr.f32.gmra.mxu0 %v42
  %v125 = vpop.f32.mrf.mxu0
  %v126 = vadd.f32 %v29, %v125
  %v127 = vpop.f32.mrf.mxu0
  %128 = vdwg.mxu0
  %vm129 = vcmask 261120
  %130 = vst.msk [vmem:[%s3] sm:$0xff] %vm129, %v111
  %131 = vst.msk [vmem:[%s3 + $0x8] sm:$0xff] %vm129, %v116
  %132 = vst.msk [vmem:[%s3 + $0x10] sm:$0xff] %vm129, %v121
  %133 = vst.msk [vmem:[%s3 + $0x18] sm:$0xff] %vm129, %v126
  // Predicated region
  $region14: #{vit_forward.9} parent=0 // pred_check
    _
  $region15: #{vit_forward.9} parent=0 // pred_check_branch
    %135 = sbr.rel (0) target = $region17
  $region16: #{vit_forward.9} parent=0 // pred_region
    _
  $region17: #{vit_forward.9} parent=0 // pred_fallthru
    _
  // Predicated region
  $region18: #{vit_forward.9} parent=0 // pred_check
    _
  $region19: #{vit_forward.9} parent=0 // pred_check_branch
    %137 = sbr.rel (0) target = $region21
  $region20: #{vit_forward.9} parent=0 // pred_region
    _
  $region21: #{vit_forward.9} parent=0 // pred_fallthru
    _

// kernel: vit_forward.10
$region0: #{vit_forward.10}
  #allocation0 [shape = 'u32[]', space=smem, size = 0x4, offset = 0x4, fixed_abs, tag = 'smem constant byte address 0x4 - core index']
  #allocation1 [shape = 'u32[144,128]{1,0:T(1,128)}', space=vmem, size = 0x12000, scoped, tag = 'internal scratch']
  %s0 = inlined_call_operand.vmem [shape: f32[32,32], index: 0, kind: input, shape index: {}]
  %s1 = inlined_call_operand.vmem [shape: f32[1,32], index: 1, kind: input, shape index: {}]
  %s2 = inlined_call_operand.vmem [shape: f32[1,32], index: 2, kind: input, shape index: {}]
  %s3 = inlined_call_operand.vmem [shape: f32[32,96], index: 3, kind: input, shape index: {}]
  %s4 = inlined_call_operand.vmem [shape: f32[1,96], index: 4, kind: input, shape index: {}]
  %s5 = inlined_call_operand.vmem [shape: f32[32,96], index: 5, kind: output, shape index: {}]
  %s6 = sld [smem:[#allocation0]]
  $region30: #{vit_forward.10} parent=0
    _
  %s8 = ssub.s32 1, %s6
  %s9 = scalar_select 0, %s8, %s6
  // Predicated region
  $region2: #{vit_forward.10} parent=0 // pred_check
    _
  $region3: #{vit_forward.10} parent=0 // pred_check_branch
    %11 = sbr.rel (0) target = $region5
  $region4: #{vit_forward.10} parent=0 // pred_region
    _
  $region5: #{vit_forward.10} parent=0 // pred_fallthru
    _
  // Predicated region
  $region6: #{vit_forward.10} parent=0 // pred_check
    _
  $region7: #{vit_forward.10} parent=0 // pred_check_branch
    %13 = sbr.rel (0) target = $region9
  $region8: #{vit_forward.10} parent=0 // pred_region
    _
  $region9: #{vit_forward.10} parent=0 // pred_fallthru
    _
  // Predicated region
  $region10: #{vit_forward.10} parent=0 // pred_check
    _
  $region11: #{vit_forward.10} parent=0 // pred_check_branch
    %15 = sbr.rel (0) target = $region13
  $region12: #{vit_forward.10} parent=0 // pred_region
    _
  $region13: #{vit_forward.10} parent=0 // pred_fallthru
    _
  // Predicated region
  $region14: #{vit_forward.10} parent=0 // pred_check
    _
  $region15: #{vit_forward.10} parent=0 // pred_check_branch
    %17 = sbr.rel (0) target = $region17
  $region16: #{vit_forward.10} parent=0 // pred_region
    _
  $region17: #{vit_forward.10} parent=0 // pred_fallthru
    _
  // Predicated region
  $region18: #{vit_forward.10} parent=0 // pred_check
    _
  $region19: #{vit_forward.10} parent=0 // pred_check_branch
    %19 = sbr.rel (0) target = $region21
  $region20: #{vit_forward.10} parent=0 // pred_region
    _
  $region21: #{vit_forward.10} parent=0 // pred_fallthru
    _
  %v20 = vld [vmem:[%s0] sm:$0xff]
  %v21 = vld [vmem:[%s0 + $0x8] sm:$0xff]
  %v22 = vld [vmem:[%s0 + $0x10] sm:$0xff]
  %v23 = vld [vmem:[%s0 + $0x18] sm:$0xff]
  %vm24 = vcmask 261120
  %v25 = vsel %vm24, %v20, 0.0
  %26 = vadd.xlane.f32.xlu0 %v25
  %v27 = vpop.xlane.xlu0 %26
  %v28 = vsel %vm24, %v21, 0.0
  %29 = vadd.xlane.f32.xlu0 %v28
  %v30 = vpop.xlane.xlu0 %29
  %v31 = vsel %vm24, %v22, 0.0
  %32 = vadd.xlane.f32.xlu0 %v31
  %v33 = vpop.xlane.xlu0 %32
  %v34 = vsel %vm24, %v23, 0.0
  %35 = vadd.xlane.f32.xlu0 %v34
  %v36 = vpop.xlane.xlu0 %35
  %v37 = vrcp.pop 32.0
  %v38 = vmul.f32 %v27, %v37
  %v39 = vmul.f32 %v30, %v37
  %v40 = vmul.f32 %v33, %v37
  %v41 = vmul.f32 %v36, %v37
  %v42 = vsub.f32 %v20, %v38
  %v43 = vsub.f32 %v21, %v39
  %v44 = vsub.f32 %v22, %v40
  %v45 = vsub.f32 %v23, %v41
  %v46 = vmul.f32 %v42, %v42
  %v47 = vmul.f32 %v43, %v43
  %v48 = vmul.f32 %v44, %v44
  %v49 = vmul.f32 %v45, %v45
  %v50 = vsel %vm24, %v46, 0.0
  %51 = vadd.xlane.f32.xlu0 %v50
  %v52 = vpop.xlane.xlu0 %51
  %v53 = vsel %vm24, %v47, 0.0
  %54 = vadd.xlane.f32.xlu0 %v53
  %v55 = vpop.xlane.xlu0 %54
  %v56 = vsel %vm24, %v48, 0.0
  %57 = vadd.xlane.f32.xlu0 %v56
  %v58 = vpop.xlane.xlu0 %57
  %v59 = vsel %vm24, %v49, 0.0
  %60 = vadd.xlane.f32.xlu0 %v59
  %v61 = vpop.xlane.xlu0 %60
  %v62 = vmul.f32 %v52, %v37
  %v63 = vmul.f32 %v55, %v37
  %v64 = vmul.f32 %v58, %v37
  %v65 = vmul.f32 %v61, %v37
  %v66 = vadd.f32 %v62, 1e-06
  %v67 = vadd.f32 %v63, 1e-06
  %v68 = vadd.f32 %v64, 1e-06
  %v69 = vadd.f32 %v65, 1e-06
  %v70 = vrsqrt.pop %v66
  %v71 = vrsqrt.pop %v67
  %v72 = vrsqrt.pop %v68
  %v73 = vrsqrt.pop %v69
  %v74 = vmul.f32 %v42, %v70
  %v75 = vmul.f32 %v43, %v71
  %v76 = vmul.f32 %v44, %v72
  %v77 = vmul.f32 %v45, %v73
  %v78 = vld [vmem:[%s1] sm:$0x1]
  %v80 = vlaneseq
  %v81 = vshrl.u32 %v80, 7
  %v82 = vsub.s32 0, %v81
  %v83 = vrot.slane %v78, %v82
  %v85 = vmul.f32 %v74, %v83
  %v86 = vmul.f32 %v75, %v83
  %v87 = vmul.f32 %v76, %v83
  %v88 = vmul.f32 %v77, %v83
  %v89 = vld [vmem:[%s2] sm:$0x1]
  %v91 = vlaneseq
  %v92 = vshrl.u32 %v91, 7
  %v93 = vsub.s32 0, %v92
  %v94 = vrot.slane %v89, %v93
  %v96 = vadd.f32 %v85, %v94
  %v97 = vadd.f32 %v86, %v94
  %v98 = vadd.f32 %v87, %v94
  %v99 = vadd.f32 %v88, %v94
  %v100 = vld [vmem:[%s3] sm:$0xff]
  %v101 = vld [vmem:[%s3 + $0x8] sm:$0xff]
  %v102 = vld [vmem:[%s3 + $0x10] sm:$0xff]
  %v103 = vld [vmem:[%s3 + $0x18] sm:$0xff]
  %v104 = vld [vmem:[%s4] sm:$0x1]
  %v106 = vlaneseq
  %v107 = vshrl.u32 %v106, 7
  %v108 = vsub.s32 0, %v107
  %v109 = vrot.slane %v104, %v108
  %v112 = vsel %vm24, %v96, 0
  %v115 = vsel %vm24, %v97, 0
  %v118 = vsel %vm24, %v98, 0
  %v121 = vsel %vm24, %v99, 0
  %123 = vmatprep.subr.mxu0 0.0
  %124 = vmatpush1.msra.mxu0 0.0
  %125 = vmatprep.subr.mxu0 0.0
  %126 = vmatpush1.msra.mxu0 0.0
  %127 = vmatprep.subr.mxu0 0.0
  %128 = vmatpush1.msra.mxu0 0.0
  %129 = vmatprep.subr.mxu0 0.0
  %130 = vmatpush1.msra.mxu0 0.0
  %131 = vmatprep.subr.mxu0 0.0
  %132 = vmatpush1.msra.mxu0 0.0
  %133 = vmatprep.subr.mxu0 0.0
  %134 = vmatpush1.msra.mxu0 0.0
  %135 = vmatprep.subr.mxu0 0.0
  %136 = vmatpush1.msra.mxu0 0.0
  %137 = vmatprep.subr.mxu0 0.0
  %138 = vmatpush1.msra.mxu0 0.0
  %139 = vmatprep.subr.mxu0 0.0
  %140 = vmatpush1.msra.mxu0 0.0
  %141 = vmatprep.subr.mxu0 0.0
  %142 = vmatpush1.msra.mxu0 0.0
  %143 = vmatprep.subr.mxu0 0.0
  %144 = vmatpush1.msra.mxu0 0.0
  %145 = vmatprep.subr.mxu0 0.0
  %146 = vmatpush1.msra.mxu0 0.0
  %147 = vmatprep.subr.mxu0 0.0
  %148 = vmatpush1.msra.mxu0 %v103
  %149 = vmatprep.subr.mxu0 0.0
  %150 = vmatpush1.msra.mxu0 %v102
  %151 = vmatprep.subr.mxu0 0.0
  %152 = vmatpush1.msra.mxu0 %v101
  %153 = vmatprep.subr.mxu0 0.0
  %154 = vmatpush1.msra.mxu0 %v100
  %155 = vmatprep.subr.mxu0 0.0
  %156 = vmatpush2.msra.mxu0 0.0
  %157 = vmatprep.subr.mxu0 0.0
  %158 = vmatpush2.msra.mxu0 0.0
  %159 = vmatprep.subr.mxu0 0.0
  %160 = vmatpush2.msra.mxu0 0.0
  %161 = vmatprep.subr.mxu0 0.0
  %162 = vmatpush2.msra.mxu0 0.0
  %163 = vmatprep.subr.mxu0 0.0
  %164 = vmatpush2.msra.mxu0 0.0
  %165 = vmatprep.subr.mxu0 0.0
  %166 = vmatpush2.msra.mxu0 0.0
  %167 = vmatprep.subr.mxu0 0.0
  %168 = vmatpush2.msra.mxu0 0.0
  %169 = vmatprep.subr.mxu0 0.0
  %170 = vmatpush2.msra.mxu0 0.0
  %171 = vmatprep.subr.mxu0 0.0
  %172 = vmatpush2.msra.mxu0 0.0
  %173 = vmatprep.subr.mxu0 0.0
  %174 = vmatpush2.msra.mxu0 0.0
  %175 = vmatprep.subr.mxu0 0.0
  %176 = vmatpush2.msra.mxu0 0.0
  %177 = vmatprep.subr.mxu0 0.0
  %178 = vmatpush2.msra.mxu0 0.0
  %179 = vmatprep.subr.mxu0 0.0
  %180 = vmatpush2.msra.mxu0 0.0
  %181 = vmatprep.subr.mxu0 0.0
  %182 = vmatpush2.msra.mxu0 0.0
  %183 = vmatprep.subr.mxu0 0.0
  %184 = vmatpush2.msra.mxu0 0.0
  %185 = vmatprep.subr.mxu0 0.0
  %186 = vmatpush2.msra.mxu0 0.0
  %187 = vmatprep.mubr.f32.mxu0 0.0
  %188 = vmatmul.mubr.f32.gmra.mxu0 %v112
  %v189 = vpop.f32.mrf.mxu0
  %v190 = vadd.f32 %v109, %v189
  %v191 = vpop.f32.mrf.mxu0
  %192 = vmatprep.mubr.f32.mxu0 0.0
  %193 = vmatmul.mubr.f32.gmra.mxu0 %v115
  %v194 = vpop.f32.mrf.mxu0
  %v195 = vadd.f32 %v109, %v194
  %v196 = vpop.f32.mrf.mxu0
  %197 = vmatprep.mubr.f32.mxu0 0.0
  %198 = vmatmul.mubr.f32.gmra.mxu0 %v118
  %v199 = vpop.f32.mrf.mxu0
  %v200 = vadd.f32 %v109, %v199
  %v201 = vpop.f32.mrf.mxu0
  %202 = vmatprep.mubr.f32.mxu0 0.0
  %203 = vmatmul.mubr.f32.gmra.mxu0 %v121
  %v204 = vpop.f32.mrf.mxu0
  %v205 = vadd.f32 %v109, %v204
  %v206 = vpop.f32.mrf.mxu0
  %207 = vdwg.mxu0
  %vm208 = vcmask 785408
  %209 = vst.msk [vmem:[%s5] sm:$0xff] %vm208, %v190
  %210 = vst.msk [vmem:[%s5 + $0x8] sm:$0xff] %vm208, %v195
  %211 = vst.msk [vmem:[%s5 + $0x10] sm:$0xff] %vm208, %v200
  %212 = vst.msk [vmem:[%s5 + $0x18] sm:$0xff] %vm208, %v205
  // Predicated region
  $region22: #{vit_forward.10} parent=0 // pred_check
    _
  $region23: #{vit_forward.10} parent=0 // pred_check_branch
    %214 = sbr.rel (0) target = $region25
  $region24: #{vit_forward.10} parent=0 // pred_region
    _
  $region25: #{vit_forward.10} parent=0 // pred_fallthru
    _
  // Predicated region
  $region26: #{vit_forward.10} parent=0 // pred_check
    _
  $region27: #{vit_forward.10} parent=0 // pred_check_branch
    %216 = sbr.rel (0) target = $region29
  $region28: #{vit_forward.10} parent=0 // pred_region
    _
  $region29: #{vit_forward.10} parent=0 // pred_fallthru
    _

// kernel: vit_forward.12
$region0: #{vit_forward.12}
  #allocation0 [shape = 'u32[]', space=smem, size = 0x4, offset = 0x4, fixed_abs, tag = 'smem constant byte address 0x4 - core index']
  #allocation1 [shape = 'u32[144,128]{1,0:T(1,128)}', space=vmem, size = 0x12000, scoped, tag = 'internal scratch']
  %s0 = inlined_call_operand.vmem [shape: f32[32,32], index: 0, kind: input, shape index: {}]
  %s1 = inlined_call_operand.vmem [shape: f32[32,32], index: 1, kind: input, shape index: {}]
  %s2 = inlined_call_operand.vmem [shape: f32[1,32], index: 2, kind: input, shape index: {}]
  %s3 = inlined_call_operand.vmem [shape: f32[32,32], index: 3, kind: input, shape index: {}]
  %s4 = inlined_call_operand.vmem [shape: f32[32,32], index: 4, kind: output, shape index: {}]
  %s5 = sld [smem:[#allocation0]]
  $region26: #{vit_forward.12} parent=0
    _
  %s7 = ssub.s32 1, %s5
  %s8 = scalar_select 0, %s7, %s5
  // Predicated region
  $region2: #{vit_forward.12} parent=0 // pred_check
    _
  $region3: #{vit_forward.12} parent=0 // pred_check_branch
    %10 = sbr.rel (0) target = $region5
  $region4: #{vit_forward.12} parent=0 // pred_region
    _
  $region5: #{vit_forward.12} parent=0 // pred_fallthru
    _
  // Predicated region
  $region6: #{vit_forward.12} parent=0 // pred_check
    _
  $region7: #{vit_forward.12} parent=0 // pred_check_branch
    %12 = sbr.rel (0) target = $region9
  $region8: #{vit_forward.12} parent=0 // pred_region
    _
  $region9: #{vit_forward.12} parent=0 // pred_fallthru
    _
  // Predicated region
  $region10: #{vit_forward.12} parent=0 // pred_check
    _
  $region11: #{vit_forward.12} parent=0 // pred_check_branch
    %14 = sbr.rel (0) target = $region13
  $region12: #{vit_forward.12} parent=0 // pred_region
    _
  $region13: #{vit_forward.12} parent=0 // pred_fallthru
    _
  // Predicated region
  $region14: #{vit_forward.12} parent=0 // pred_check
    _
  $region15: #{vit_forward.12} parent=0 // pred_check_branch
    %16 = sbr.rel (0) target = $region17
  $region16: #{vit_forward.12} parent=0 // pred_region
    _
  $region17: #{vit_forward.12} parent=0 // pred_fallthru
    _
  %v17 = vld [vmem:[%s0] sm:$0xff]
  %v18 = vld [vmem:[%s0 + $0x8] sm:$0xff]
  %v19 = vld [vmem:[%s0 + $0x10] sm:$0xff]
  %v20 = vld [vmem:[%s0 + $0x18] sm:$0xff]
  %v21 = vld [vmem:[%s1] sm:$0xff]
  %v22 = vld [vmem:[%s1 + $0x8] sm:$0xff]
  %v23 = vld [vmem:[%s1 + $0x10] sm:$0xff]
  %v24 = vld [vmem:[%s1 + $0x18] sm:$0xff]
  %v25 = vld [vmem:[%s2] sm:$0x1]
  %v27 = vlaneseq
  %v28 = vshrl.u32 %v27, 7
  %v29 = vsub.s32 0, %v28
  %v30 = vrot.slane %v25, %v29
  %vm32 = vcmask 261120
  %v34 = vsel %vm32, %v17, 0
  %v37 = vsel %vm32, %v18, 0
  %v40 = vsel %vm32, %v19, 0
  %v43 = vsel %vm32, %v20, 0
  %45 = vmatprep.subr.mxu0 0.0
  %46 = vmatpush1.msra.mxu0 0.0
  %47 = vmatprep.subr.mxu0 0.0
  %48 = vmatpush1.msra.mxu0 0.0
  %49 = vmatprep.subr.mxu0 0.0
  %50 = vmatpush1.msra.mxu0 0.0
  %51 = vmatprep.subr.mxu0 0.0
  %52 = vmatpush1.msra.mxu0 0.0
  %53 = vmatprep.subr.mxu0 0.0
  %54 = vmatpush1.msra.mxu0 0.0
  %55 = vmatprep.subr.mxu0 0.0
  %56 = vmatpush1.msra.mxu0 0.0
  %57 = vmatprep.subr.mxu0 0.0
  %58 = vmatpush1.msra.mxu0 0.0
  %59 = vmatprep.subr.mxu0 0.0
  %60 = vmatpush1.msra.mxu0 0.0
  %61 = vmatprep.subr.mxu0 0.0
  %62 = vmatpush1.msra.mxu0 0.0
  %63 = vmatprep.subr.mxu0 0.0
  %64 = vmatpush1.msra.mxu0 0.0
  %65 = vmatprep.subr.mxu0 0.0
  %66 = vmatpush1.msra.mxu0 0.0
  %67 = vmatprep.subr.mxu0 0.0
  %68 = vmatpush1.msra.mxu0 0.0
  %69 = vmatprep.subr.mxu0 0.0
  %70 = vmatpush1.msra.mxu0 %v24
  %71 = vmatprep.subr.mxu0 0.0
  %72 = vmatpush1.msra.mxu0 %v23
  %73 = vmatprep.subr.mxu0 0.0
  %74 = vmatpush1.msra.mxu0 %v22
  %75 = vmatprep.subr.mxu0 0.0
  %76 = vmatpush1.msra.mxu0 %v21
  %77 = vmatprep.subr.mxu0 0.0
  %78 = vmatpush2.msra.mxu0 0.0
  %79 = vmatprep.subr.mxu0 0.0
  %80 = vmatpush2.msra.mxu0 0.0
  %81 = vmatprep.subr.mxu0 0.0
  %82 = vmatpush2.msra.mxu0 0.0
  %83 = vmatprep.subr.mxu0 0.0
  %84 = vmatpush2.msra.mxu0 0.0
  %85 = vmatprep.subr.mxu0 0.0
  %86 = vmatpush2.msra.mxu0 0.0
  %87 = vmatprep.subr.mxu0 0.0
  %88 = vmatpush2.msra.mxu0 0.0
  %89 = vmatprep.subr.mxu0 0.0
  %90 = vmatpush2.msra.mxu0 0.0
  %91 = vmatprep.subr.mxu0 0.0
  %92 = vmatpush2.msra.mxu0 0.0
  %93 = vmatprep.subr.mxu0 0.0
  %94 = vmatpush2.msra.mxu0 0.0
  %95 = vmatprep.subr.mxu0 0.0
  %96 = vmatpush2.msra.mxu0 0.0
  %97 = vmatprep.subr.mxu0 0.0
  %98 = vmatpush2.msra.mxu0 0.0
  %99 = vmatprep.subr.mxu0 0.0
  %100 = vmatpush2.msra.mxu0 0.0
  %101 = vmatprep.subr.mxu0 0.0
  %102 = vmatpush2.msra.mxu0 0.0
  %103 = vmatprep.subr.mxu0 0.0
  %104 = vmatpush2.msra.mxu0 0.0
  %105 = vmatprep.subr.mxu0 0.0
  %106 = vmatpush2.msra.mxu0 0.0
  %107 = vmatprep.subr.mxu0 0.0
  %108 = vmatpush2.msra.mxu0 0.0
  %109 = vmatprep.mubr.f32.mxu0 0.0
  %110 = vmatmul.mubr.f32.gmra.mxu0 %v34
  %v111 = vpop.f32.mrf.mxu0
  %v112 = vadd.f32 %v30, %v111
  %v113 = vpop.f32.mrf.mxu0
  %114 = vmatprep.mubr.f32.mxu0 0.0
  %115 = vmatmul.mubr.f32.gmra.mxu0 %v37
  %v116 = vpop.f32.mrf.mxu0
  %v117 = vadd.f32 %v30, %v116
  %v118 = vpop.f32.mrf.mxu0
  %119 = vmatprep.mubr.f32.mxu0 0.0
  %120 = vmatmul.mubr.f32.gmra.mxu0 %v40
  %v121 = vpop.f32.mrf.mxu0
  %v122 = vadd.f32 %v30, %v121
  %v123 = vpop.f32.mrf.mxu0
  %124 = vmatprep.mubr.f32.mxu0 0.0
  %125 = vmatmul.mubr.f32.gmra.mxu0 %v43
  %v126 = vpop.f32.mrf.mxu0
  %v127 = vadd.f32 %v30, %v126
  %v128 = vpop.f32.mrf.mxu0
  %129 = vdwg.mxu0
  %v130 = vld [vmem:[%s3] sm:$0xff]
  %v131 = vld [vmem:[%s3 + $0x8] sm:$0xff]
  %v132 = vld [vmem:[%s3 + $0x10] sm:$0xff]
  %v133 = vld [vmem:[%s3 + $0x18] sm:$0xff]
  %v134 = vadd.f32 %v112, %v130
  %v135 = vadd.f32 %v117, %v131
  %v136 = vadd.f32 %v122, %v132
  %v137 = vadd.f32 %v127, %v133
  %138 = vst.msk [vmem:[%s4] sm:$0xff] %vm32, %v134
  %139 = vst.msk [vmem:[%s4 + $0x8] sm:$0xff] %vm32, %v135
  %140 = vst.msk [vmem:[%s4 + $0x10] sm:$0xff] %vm32, %v136
  %141 = vst.msk [vmem:[%s4 + $0x18] sm:$0xff] %vm32, %v137
  // Predicated region
  $region18: #{vit_forward.12} parent=0 // pred_check
    _
  $region19: #{vit_forward.12} parent=0 // pred_check_branch
    %143 = sbr.rel (0) target = $region21
  $region20: #{vit_forward.12} parent=0 // pred_region
    _
  $region21: #{vit_forward.12} parent=0 // pred_fallthru
    _
  // Predicated region
  $region22: #{vit_forward.12} parent=0 // pred_check
    _
  $region23: #{vit_forward.12} parent=0 // pred_check_branch
    %145 = sbr.rel (0) target = $region25
  $region24: #{vit_forward.12} parent=0 // pred_region
    _
  $region25: #{vit_forward.12} parent=0 // pred_fallthru
    _

// kernel: vit_forward.13
$region0: #{vit_forward.13}
  #allocation0 [shape = 'u32[]', space=smem, size = 0x4, offset = 0x4, fixed_abs, tag = 'smem constant byte address 0x4 - core index']
  #allocation1 [shape = 'u32[144,128]{1,0:T(1,128)}', space=vmem, size = 0x12000, scoped, tag = 'internal scratch']
  #allocation2 [shape = 'f32[32,32]{1,0:T(8,128)}', space=vmem, size = 0x4000, scoped, tag = 'scratch operand']
  #allocation3 [shape = 'f32[32,32]{1,0:T(8,128)}', space=vmem, size = 0x4000, scoped, tag = 'scratch operand']
  %s0 = inlined_call_operand.vmem [shape: f32[32,32], index: 0, kind: input, shape index: {}]
  %s1 = inlined_call_operand.vmem [shape: f32[1,32], index: 1, kind: input, shape index: {}]
  %s2 = inlined_call_operand.vmem [shape: f32[1,32], index: 2, kind: input, shape index: {}]
  %s3 = inlined_call_operand.vmem [shape: f32[32,85], index: 3, kind: input, shape index: {}]
  %s4 = inlined_call_operand.vmem [shape: f32[1,85], index: 4, kind: input, shape index: {}]
  %s5 = inlined_call_operand.vmem [shape: f32[32,85], index: 5, kind: input, shape index: {}]
  %s6 = inlined_call_operand.vmem [shape: f32[1,85], index: 6, kind: input, shape index: {}]
  %s7 = inlined_call_operand.vmem [shape: f32[85,32], index: 7, kind: input, shape index: {}]
  %s8 = inlined_call_operand.vmem [shape: f32[1,32], index: 8, kind: input, shape index: {}]
  %s9 = inlined_call_operand.vmem [shape: f32[32,32], index: 9, kind: output, shape index: {}]
  %s10 = sld [smem:[#allocation0]]
  $region54: #{vit_forward.13} parent=0
    _
  %s12 = ssub.s32 1, %s10
  %s13 = scalar_select 0, %s12, %s10
  // Predicated region
  $region2: #{vit_forward.13} parent=0 // pred_check
    _
  $region3: #{vit_forward.13} parent=0 // pred_check_branch
    %15 = sbr.rel (0) target = $region5
  $region4: #{vit_forward.13} parent=0 // pred_region
    _
  $region5: #{vit_forward.13} parent=0 // pred_fallthru
    _
  // Predicated region
  $region6: #{vit_forward.13} parent=0 // pred_check
    _
  $region7: #{vit_forward.13} parent=0 // pred_check_branch
    %17 = sbr.rel (0) target = $region9
  $region8: #{vit_forward.13} parent=0 // pred_region
    _
  $region9: #{vit_forward.13} parent=0 // pred_fallthru
    _
  // Predicated region
  $region10: #{vit_forward.13} parent=0 // pred_check
    _
  $region11: #{vit_forward.13} parent=0 // pred_check_branch
    %19 = sbr.rel (0) target = $region13
  $region12: #{vit_forward.13} parent=0 // pred_region
    _
  $region13: #{vit_forward.13} parent=0 // pred_fallthru
    _
  // Predicated region
  $region14: #{vit_forward.13} parent=0 // pred_check
    _
  $region15: #{vit_forward.13} parent=0 // pred_check_branch
    %21 = sbr.rel (0) target = $region17
  $region16: #{vit_forward.13} parent=0 // pred_region
    _
  $region17: #{vit_forward.13} parent=0 // pred_fallthru
    _
  // Predicated region
  $region18: #{vit_forward.13} parent=0 // pred_check
    _
  $region19: #{vit_forward.13} parent=0 // pred_check_branch
    %23 = sbr.rel (0) target = $region21
  $region20: #{vit_forward.13} parent=0 // pred_region
    _
  $region21: #{vit_forward.13} parent=0 // pred_fallthru
    _
  // Predicated region
  $region22: #{vit_forward.13} parent=0 // pred_check
    _
  $region23: #{vit_forward.13} parent=0 // pred_check_branch
    %25 = sbr.rel (0) target = $region25
  $region24: #{vit_forward.13} parent=0 // pred_region
    _
  $region25: #{vit_forward.13} parent=0 // pred_fallthru
    _
  // Predicated region
  $region26: #{vit_forward.13} parent=0 // pred_check
    _
  $region27: #{vit_forward.13} parent=0 // pred_check_branch
    %27 = sbr.rel (0) target = $region29
  $region28: #{vit_forward.13} parent=0 // pred_region
    _
  $region29: #{vit_forward.13} parent=0 // pred_fallthru
    _
  // Predicated region
  $region30: #{vit_forward.13} parent=0 // pred_check
    _
  $region31: #{vit_forward.13} parent=0 // pred_check_branch
    %29 = sbr.rel (0) target = $region33
  $region32: #{vit_forward.13} parent=0 // pred_region
    _
  $region33: #{vit_forward.13} parent=0 // pred_fallthru
    _
  // Predicated region
  $region34: #{vit_forward.13} parent=0 // pred_check
    _
  $region35: #{vit_forward.13} parent=0 // pred_check_branch
    %31 = sbr.rel (0) target = $region37
  $region36: #{vit_forward.13} parent=0 // pred_region
    _
  $region37: #{vit_forward.13} parent=0 // pred_fallthru
    _
  %p32 = scmp.eq.s32.totalorder 0, 0
  // Predicated region
  $region38: #{vit_forward.13} parent=0 // pred_check
    %p33 = pneg %p32
  $region39: #{vit_forward.13} parent=0 // pred_check_branch
    %35 = sbr.rel (%p33) target = $region41
  $region40: #{vit_forward.13} parent=0 // pred_region
    %vm36 = vcmask 261120
    %37 = vst.msk [vmem:[#allocation2] sm:$0xff] %vm36, 0.0
    %38 = vst.msk [vmem:[#allocation2 + $0x8] sm:$0xff] %vm36, 0.0
    %39 = vst.msk [vmem:[#allocation2 + $0x10] sm:$0xff] %vm36, 0.0
    %40 = vst.msk [vmem:[#allocation2 + $0x18] sm:$0xff] %vm36, 0.0
    %v41 = vld [vmem:[%s0] sm:$0xff]
    %v42 = vld [vmem:[%s0 + $0x8] sm:$0xff]
    %v43 = vld [vmem:[%s0 + $0x10] sm:$0xff]
    %v44 = vld [vmem:[%s0 + $0x18] sm:$0xff]
    %v45 = vsel %vm36, %v41, 0.0
    %46 = vadd.xlane.f32.xlu0 %v45
    %v47 = vpop.xlane.xlu0 %46
    %v48 = vsel %vm36, %v42, 0.0
    %49 = vadd.xlane.f32.xlu0 %v48
    %v50 = vpop.xlane.xlu0 %49
    %v51 = vsel %vm36, %v43, 0.0
    %52 = vadd.xlane.f32.xlu0 %v51
    %v53 = vpop.xlane.xlu0 %52
    %v54 = vsel %vm36, %v44, 0.0
    %55 = vadd.xlane.f32.xlu0 %v54
    %v56 = vpop.xlane.xlu0 %55
    %v57 = vrcp.pop 32.0
    %v58 = vmul.f32 %v47, %v57
    %v59 = vmul.f32 %v50, %v57
    %v60 = vmul.f32 %v53, %v57
    %v61 = vmul.f32 %v56, %v57
    %v62 = vsub.f32 %v41, %v58
    %v63 = vsub.f32 %v42, %v59
    %v64 = vsub.f32 %v43, %v60
    %v65 = vsub.f32 %v44, %v61
    %v66 = vmul.f32 %v62, %v62
    %v67 = vmul.f32 %v63, %v63
    %v68 = vmul.f32 %v64, %v64
    %v69 = vmul.f32 %v65, %v65
    %v70 = vsel %vm36, %v66, 0.0
    %71 = vadd.xlane.f32.xlu0 %v70
    %v72 = vpop.xlane.xlu0 %71
    %v73 = vsel %vm36, %v67, 0.0
    %74 = vadd.xlane.f32.xlu0 %v73
    %v75 = vpop.xlane.xlu0 %74
    %v76 = vsel %vm36, %v68, 0.0
    %77 = vadd.xlane.f32.xlu0 %v76
    %v78 = vpop.xlane.xlu0 %77
    %v79 = vsel %vm36, %v69, 0.0
    %80 = vadd.xlane.f32.xlu0 %v79
    %v81 = vpop.xlane.xlu0 %80
    %v82 = vmul.f32 %v72, %v57
    %v83 = vmul.f32 %v75, %v57
    %v84 = vmul.f32 %v78, %v57
    %v85 = vmul.f32 %v81, %v57
    %v86 = vadd.f32 %v82, 1e-06
    %v87 = vadd.f32 %v83, 1e-06
    %v88 = vadd.f32 %v84, 1e-06
    %v89 = vadd.f32 %v85, 1e-06
    %v90 = vrsqrt.pop %v86
    %v91 = vrsqrt.pop %v87
    %v92 = vrsqrt.pop %v88
    %v93 = vrsqrt.pop %v89
    %v94 = vmul.f32 %v62, %v90
    %v95 = vmul.f32 %v63, %v91
    %v96 = vmul.f32 %v64, %v92
    %v97 = vmul.f32 %v65, %v93
    %v98 = vld [vmem:[%s1] sm:$0x1]
    %v100 = vlaneseq
    %v101 = vshrl.u32 %v100, 7
    %v102 = vsub.s32 0, %v101
    %v103 = vrot.slane %v98, %v102
    %v105 = vmul.f32 %v94, %v103
    %v106 = vmul.f32 %v95, %v103
    %v107 = vmul.f32 %v96, %v103
    %v108 = vmul.f32 %v97, %v103
    %v109 = vld [vmem:[%s2] sm:$0x1]
    %v111 = vlaneseq
    %v112 = vshrl.u32 %v111, 7
    %v113 = vsub.s32 0, %v112
    %v114 = vrot.slane %v109, %v113
    %v116 = vadd.f32 %v105, %v114
    %v117 = vadd.f32 %v106, %v114
    %v118 = vadd.f32 %v107, %v114
    %v119 = vadd.f32 %v108, %v114
    %120 = vst.msk [vmem:[#allocation3] sm:$0xff] %vm36, %v116
    %121 = vst.msk [vmem:[#allocation3 + $0x8] sm:$0xff] %vm36, %v117
    %122 = vst.msk [vmem:[#allocation3 + $0x10] sm:$0xff] %vm36, %v118
    %123 = vst.msk [vmem:[#allocation3 + $0x18] sm:$0xff] %vm36, %v119
  $region41: #{vit_forward.13} parent=0 // pred_fallthru
    _
  %v124 = vld [vmem:[#allocation3] sm:$0xff]
  %v125 = vld [vmem:[#allocation3 + $0x8] sm:$0xff]
  %v126 = vld [vmem:[#allocation3 + $0x10] sm:$0xff]
  %v127 = vld [vmem:[#allocation3 + $0x18] sm:$0xff]
  %v128 = vld [vmem:[%s3] sm:$0xff]
  %v129 = vld [vmem:[%s3 + $0x8] sm:$0xff]
  %v130 = vld [vmem:[%s3 + $0x10] sm:$0xff]
  %v131 = vld [vmem:[%s3 + $0x18] sm:$0xff]
  %v132 = vld [vmem:[%s4] sm:$0x1]
  %v134 = vlaneseq
  %v135 = vshrl.u32 %v134, 7
  %v136 = vsub.s32 0, %v135
  %v137 = vrot.slane %v132, %v136
  %vm139 = vcmask 261120
  %v141 = vsel %vm139, %v124, 0
  %v144 = vsel %vm139, %v125, 0
  %v147 = vsel %vm139, %v126, 0
  %v150 = vsel %vm139, %v127, 0
  %152 = vmatprep.subr.mxu0 0.0
  %153 = vmatpush1.msra.mxu0 0.0
  %154 = vmatprep.subr.mxu0 0.0
  %155 = vmatpush1.msra.mxu0 0.0
  %156 = vmatprep.subr.mxu0 0.0
  %157 = vmatpush1.msra.mxu0 0.0
  %158 = vmatprep.subr.mxu0 0.0
  %159 = vmatpush1.msra.mxu0 0.0
  %160 = vmatprep.subr.mxu0 0.0
  %161 = vmatpush1.msra.mxu0 0.0
  %162 = vmatprep.subr.mxu0 0.0
  %163 = vmatpush1.msra.mxu0 0.0
  %164 = vmatprep.subr.mxu0 0.0
  %165 = vmatpush1.msra.mxu0 0.0
  %166 = vmatprep.subr.mxu0 0.0
  %167 = vmatpush1.msra.mxu0 0.0
  %168 = vmatprep.subr.mxu0 0.0
  %169 = vmatpush1.msra.mxu0 0.0
  %170 = vmatprep.subr.mxu0 0.0
  %171 = vmatpush1.msra.mxu0 0.0
  %172 = vmatprep.subr.mxu0 0.0
  %173 = vmatpush1.msra.mxu0 0.0
  %174 = vmatprep.subr.mxu0 0.0
  %175 = vmatpush1.msra.mxu0 0.0
  %176 = vmatprep.subr.mxu0 0.0
  %177 = vmatpush1.msra.mxu0 %v131
  %178 = vmatprep.subr.mxu0 0.0
  %179 = vmatpush1.msra.mxu0 %v130
  %180 = vmatprep.subr.mxu0 0.0
  %181 = vmatpush1.msra.mxu0 %v129
  %182 = vmatprep.subr.mxu0 0.0
  %183 = vmatpush1.msra.mxu0 %v128
  %184 = vmatprep.subr.mxu0 0.0
  %185 = vmatpush2.msra.mxu0 0.0
  %186 = vmatprep.subr.mxu0 0.0
  %187 = vmatpush2.msra.mxu0 0.0
  %188 = vmatprep.subr.mxu0 0.0
  %189 = vmatpush2.msra.mxu0 0.0
  %190 = vmatprep.subr.mxu0 0.0
  %191 = vmatpush2.msra.mxu0 0.0
  %192 = vmatprep.subr.mxu0 0.0
  %193 = vmatpush2.msra.mxu0 0.0
  %194 = vmatprep.subr.mxu0 0.0
  %195 = vmatpush2.msra.mxu0 0.0
  %196 = vmatprep.subr.mxu0 0.0
  %197 = vmatpush2.msra.mxu0 0.0
  %198 = vmatprep.subr.mxu0 0.0
  %199 = vmatpush2.msra.mxu0 0.0
  %200 = vmatprep.subr.mxu0 0.0
  %201 = vmatpush2.msra.mxu0 0.0
  %202 = vmatprep.subr.mxu0 0.0
  %203 = vmatpush2.msra.mxu0 0.0
  %204 = vmatprep.subr.mxu0 0.0
  %205 = vmatpush2.msra.mxu0 0.0
  %206 = vmatprep.subr.mxu0 0.0
  %207 = vmatpush2.msra.mxu0 0.0
  %208 = vmatprep.subr.mxu0 0.0
  %209 = vmatpush2.msra.mxu0 0.0
  %210 = vmatprep.subr.mxu0 0.0
  %211 = vmatpush2.msra.mxu0 0.0
  %212 = vmatprep.subr.mxu0 0.0
  %213 = vmatpush2.msra.mxu0 0.0
  %214 = vmatprep.subr.mxu0 0.0
  %215 = vmatpush2.msra.mxu0 0.0
  %216 = vmatprep.mubr.f32.mxu0 0.0
  %217 = vmatmul.mubr.f32.gmra.mxu0 %v141
  %v218 = vpop.f32.mrf.mxu0
  %v219 = vadd.f32 %v137, %v218
  %v220 = vpop.f32.mrf.mxu0
  %221 = vmatprep.mubr.f32.mxu0 0.0
  %222 = vmatmul.mubr.f32.gmra.mxu0 %v144
  %v223 = vpop.f32.mrf.mxu0
  %v224 = vadd.f32 %v137, %v223
  %v225 = vpop.f32.mrf.mxu0
  %226 = vmatprep.mubr.f32.mxu0 0.0
  %227 = vmatmul.mubr.f32.gmra.mxu0 %v147
  %v228 = vpop.f32.mrf.mxu0
  %v229 = vadd.f32 %v137, %v228
  %v230 = vpop.f32.mrf.mxu0
  %231 = vmatprep.mubr.f32.mxu0 0.0
  %232 = vmatmul.mubr.f32.gmra.mxu0 %v150
  %v233 = vpop.f32.mrf.mxu0
  %v234 = vadd.f32 %v137, %v233
  %v235 = vpop.f32.mrf.mxu0
  %236 = vdwg.mxu0
  %v237 = vld [vmem:[%s5] sm:$0xff]
  %v238 = vld [vmem:[%s5 + $0x8] sm:$0xff]
  %v239 = vld [vmem:[%s5 + $0x10] sm:$0xff]
  %v240 = vld [vmem:[%s5 + $0x18] sm:$0xff]
  %v241 = vld [vmem:[%s6] sm:$0x1]
  %v243 = vlaneseq
  %v244 = vshrl.u32 %v243, 7
  %v245 = vsub.s32 0, %v244
  %v246 = vrot.slane %v241, %v245
  %248 = vmatprep.subr.mxu0 0.0
  %249 = vmatpush1.msra.mxu0 0.0
  %250 = vmatprep.subr.mxu0 0.0
  %251 = vmatpush1.msra.mxu0 0.0
  %252 = vmatprep.subr.mxu0 0.0
  %253 = vmatpush1.msra.mxu0 0.0
  %254 = vmatprep.subr.mxu0 0.0
  %255 = vmatpush1.msra.mxu0 0.0
  %256 = vmatprep.subr.mxu0 0.0
  %257 = vmatpush1.msra.mxu0 0.0
  %258 = vmatprep.subr.mxu0 0.0
  %259 = vmatpush1.msra.mxu0 0.0
  %260 = vmatprep.subr.mxu0 0.0
  %261 = vmatpush1.msra.mxu0 0.0
  %262 = vmatprep.subr.mxu0 0.0
  %263 = vmatpush1.msra.mxu0 0.0
  %264 = vmatprep.subr.mxu0 0.0
  %265 = vmatpush1.msra.mxu0 0.0
  %266 = vmatprep.subr.mxu0 0.0
  %267 = vmatpush1.msra.mxu0 0.0
  %268 = vmatprep.subr.mxu0 0.0
  %269 = vmatpush1.msra.mxu0 0.0
  %270 = vmatprep.subr.mxu0 0.0
  %271 = vmatpush1.msra.mxu0 0.0
  %272 = vmatprep.subr.mxu0 0.0
  %273 = vmatpush1.msra.mxu0 %v240
  %274 = vmatprep.subr.mxu0 0.0
  %275 = vmatpush1.msra.mxu0 %v239
  %276 = vmatprep.subr.mxu0 0.0
  %277 = vmatpush1.msra.mxu0 %v238
  %278 = vmatprep.subr.mxu0 0.0
  %279 = vmatpush1.msra.mxu0 %v237
  %280 = vmatprep.subr.mxu0 0.0
  %281 = vmatpush2.msra.mxu0 0.0
  %282 = vmatprep.subr.mxu0 0.0
  %283 = vmatpush2.msra.mxu0 0.0
  %284 = vmatprep.subr.mxu0 0.0
  %285 = vmatpush2.msra.mxu0 0.0
  %286 = vmatprep.subr.mxu0 0.0
  %287 = vmatpush2.msra.mxu0 0.0
  %288 = vmatprep.subr.mxu0 0.0
  %289 = vmatpush2.msra.mxu0 0.0
  %290 = vmatprep.subr.mxu0 0.0
  %291 = vmatpush2.msra.mxu0 0.0
  %292 = vmatprep.subr.mxu0 0.0
  %293 = vmatpush2.msra.mxu0 0.0
  %294 = vmatprep.subr.mxu0 0.0
  %295 = vmatpush2.msra.mxu0 0.0
  %296 = vmatprep.subr.mxu0 0.0
  %297 = vmatpush2.msra.mxu0 0.0
  %298 = vmatprep.subr.mxu0 0.0
  %299 = vmatpush2.msra.mxu0 0.0
  %300 = vmatprep.subr.mxu0 0.0
  %301 = vmatpush2.msra.mxu0 0.0
  %302 = vmatprep.subr.mxu0 0.0
  %303 = vmatpush2.msra.mxu0 0.0
  %304 = vmatprep.subr.mxu0 0.0
  %305 = vmatpush2.msra.mxu0 0.0
  %306 = vmatprep.subr.mxu0 0.0
  %307 = vmatpush2.msra.mxu0 0.0
  %308 = vmatprep.subr.mxu0 0.0
  %309 = vmatpush2.msra.mxu0 0.0
  %310 = vmatprep.subr.mxu0 0.0
  %311 = vmatpush2.msra.mxu0 0.0
  %312 = vmatprep.mubr.f32.mxu0 0.0
  %313 = vmatmul.mubr.f32.gmra.mxu0 %v141
  %v314 = vpop.f32.mrf.mxu0
  %v315 = vadd.f32 %v246, %v314
  %v316 = vpop.f32.mrf.mxu0
  %317 = vmatprep.mubr.f32.mxu0 0.0
  %318 = vmatmul.mubr.f32.gmra.mxu0 %v144
  %v319 = vpop.f32.mrf.mxu0
  %v320 = vadd.f32 %v246, %v319
  %v321 = vpop.f32.mrf.mxu0
  %322 = vmatprep.mubr.f32.mxu0 0.0
  %323 = vmatmul.mubr.f32.gmra.mxu0 %v147
  %v324 = vpop.f32.mrf.mxu0
  %v325 = vadd.f32 %v246, %v324
  %v326 = vpop.f32.mrf.mxu0
  %327 = vmatprep.mubr.f32.mxu0 0.0
  %328 = vmatmul.mubr.f32.gmra.mxu0 %v150
  %v329 = vpop.f32.mrf.mxu0
  %v330 = vadd.f32 %v246, %v329
  %v331 = vpop.f32.mrf.mxu0
  %332 = vdwg.mxu0
  %v333 = vxor.u32 %v219, 2147483648
  %v334 = vxor.u32 %v224, 2147483648
  %v335 = vxor.u32 %v229, 2147483648
  %v336 = vxor.u32 %v234, 2147483648
  %v337 = vmul.f32 %v333, 1.442695
  %v338 = vpow.pop %v337
  %v339 = vmul.f32 %v334, 1.442695
  %v340 = vpow.pop %v339
  %v341 = vmul.f32 %v335, 1.442695
  %v342 = vpow.pop %v341
  %v343 = vmul.f32 %v336, 1.442695
  %v344 = vpow.pop %v343
  %v345 = vadd.f32 %v338, 1.0
  %v346 = vadd.f32 %v340, 1.0
  %v347 = vadd.f32 %v342, 1.0
  %v348 = vadd.f32 %v344, 1.0
  %v349 = vrcp.pop %v345
  %v350 = vmul.f32 1.0, %v349
  %v351 = vrcp.pop %v346
  %v352 = vmul.f32 1.0, %v351
  %v353 = vrcp.pop %v347
  %v354 = vmul.f32 1.0, %v353
  %v355 = vrcp.pop %v348
  %v356 = vmul.f32 1.0, %v355
  %v357 = vmul.f32 %v219, %v350
  %v358 = vmul.f32 %v224, %v352
  %v359 = vmul.f32 %v229, %v354
  %v360 = vmul.f32 %v234, %v356
  %v361 = vmul.f32 %v357, %v315
  %v362 = vmul.f32 %v358, %v320
  %v363 = vmul.f32 %v359, %v325
  %v364 = vmul.f32 %v360, %v330
  %v365 = vld [vmem:[#allocation2] sm:$0xff]
  %v366 = vld [vmem:[#allocation2 + $0x8] sm:$0xff]
  %v367 = vld [vmem:[#allocation2 + $0x10] sm:$0xff]
  %v368 = vld [vmem:[#allocation2 + $0x18] sm:$0xff]
  %v369 = vld [vmem:[%s7] sm:$0xff]
  %v370 = vld [vmem:[%s7 + $0x8] sm:$0xff]
  %v371 = vld [vmem:[%s7 + $0x10] sm:$0xff]
  %v372 = vld [vmem:[%s7 + $0x18] sm:$0xff]
  %v373 = vld [vmem:[%s7 + $0x20] sm:$0xff]
  %v374 = vld [vmem:[%s7 + $0x28] sm:$0xff]
  %v375 = vld [vmem:[%s7 + $0x30] sm:$0xff]
  %v376 = vld [vmem:[%s7 + $0x38] sm:$0xff]
  %v377 = vld [vmem:[%s7 + $0x40] sm:$0xff]
  %v378 = vld [vmem:[%s7 + $0x48] sm:$0xff]
  %v379 = vld [vmem:[%s7 + $0x50] sm:$0x1f]
  %vm380 = vcmask 695296
  %v382 = vsel %vm380, %v361, 0
  %v385 = vsel %vm380, %v362, 0
  %v388 = vsel %vm380, %v363, 0
  %v391 = vsel %vm380, %v364, 0
  %vm393 = vcmask 1044480
  %v395 = vsel %vm393, %v379, 0
  %397 = vmatprep.subr.mxu0 0.0
  %398 = vmatpush1.msra.mxu0 0.0
  %399 = vmatprep.subr.mxu0 0.0
  %400 = vmatpush1.msra.mxu0 0.0
  %401 = vmatprep.subr.mxu0 0.0
  %402 = vmatpush1.msra.mxu0 0.0
  %403 = vmatprep.subr.mxu0 0.0
  %404 = vmatpush1.msra.mxu0 0.0
  %405 = vmatprep.subr.mxu0 0.0
  %406 = vmatpush1.msra.mxu0 0.0
  %407 = vmatprep.subr.mxu0 0.0
  %408 = vmatpush1.msra.mxu0 %v395
  %409 = vmatprep.subr.mxu0 0.0
  %410 = vmatpush1.msra.mxu0 %v378
  %411 = vmatprep.subr.mxu0 0.0
  %412 = vmatpush1.msra.mxu0 %v377
  %413 = vmatprep.subr.mxu0 0.0
  %414 = vmatpush1.msra.mxu0 %v376
  %415 = vmatprep.subr.mxu0 0.0
  %416 = vmatpush1.msra.mxu0 %v375
  %417 = vmatprep.subr.mxu0 0.0
  %418 = vmatpush1.msra.mxu0 %v374
  %419 = vmatprep.subr.mxu0 0.0
  %420 = vmatpush1.msra.mxu0 %v373
  %421 = vmatprep.subr.mxu0 0.0
  %422 = vmatpush1.msra.mxu0 %v372
  %423 = vmatprep.subr.mxu0 0.0
  %424 = vmatpush1.msra.mxu0 %v371
  %425 = vmatprep.subr.mxu0 0.0
  %426 = vmatpush1.msra.mxu0 %v370
  %427 = vmatprep.subr.mxu0 0.0
  %428 = vmatpush1.msra.mxu0 %v369
  %429 = vmatprep.subr.mxu0 0.0
  %430 = vmatpush2.msra.mxu0 0.0
  %431 = vmatprep.subr.mxu0 0.0
  %432 = vmatpush2.msra.mxu0 0.0
  %433 = vmatprep.subr.mxu0 0.0
  %434 = vmatpush2.msra.mxu0 0.0
  %435 = vmatprep.subr.mxu0 0.0
  %436 = vmatpush2.msra.mxu0 0.0
  %437 = vmatprep.subr.mxu0 0.0
  %438 = vmatpush2.msra.mxu0 0.0
  %439 = vmatprep.subr.mxu0 0.0
  %440 = vmatpush2.msra.mxu0 0.0
  %441 = vmatprep.subr.mxu0 0.0
  %442 = vmatpush2.msra.mxu0 0.0
  %443 = vmatprep.subr.mxu0 0.0
  %444 = vmatpush2.msra.mxu0 0.0
  %445 = vmatprep.subr.mxu0 0.0
  %446 = vmatpush2.msra.mxu0 0.0
  %447 = vmatprep.subr.mxu0 0.0
  %448 = vmatpush2.msra.mxu0 0.0
  %449 = vmatprep.subr.mxu0 0.0
  %450 = vmatpush2.msra.mxu0 0.0
  %451 = vmatprep.subr.mxu0 0.0
  %452 = vmatpush2.msra.mxu0 0.0
  %453 = vmatprep.subr.mxu0 0.0
  %454 = vmatpush2.msra.mxu0 0.0
  %455 = vmatprep.subr.mxu0 0.0
  %456 = vmatpush2.msra.mxu0 0.0
  %457 = vmatprep.subr.mxu0 0.0
  %458 = vmatpush2.msra.mxu0 0.0
  %459 = vmatprep.subr.mxu0 0.0
  %460 = vmatpush2.msra.mxu0 0.0
  %461 = vmatprep.mubr.f32.mxu0 0.0
  %462 = vmatmul.mubr.f32.gmra.mxu0 %v382
  %v463 = vpop.f32.mrf.mxu0
  %v464 = vadd.f32 0.0, %v463
  %v465 = vpop.f32.mrf.mxu0
  %466 = vmatprep.mubr.f32.mxu0 0.0
  %467 = vmatmul.mubr.f32.gmra.mxu0 %v385
  %v468 = vpop.f32.mrf.mxu0
  %v469 = vadd.f32 0.0, %v468
  %v470 = vpop.f32.mrf.mxu0
  %471 = vmatprep.mubr.f32.mxu0 0.0
  %472 = vmatmul.mubr.f32.gmra.mxu0 %v388
  %v473 = vpop.f32.mrf.mxu0
  %v474 = vadd.f32 0.0, %v473
  %v475 = vpop.f32.mrf.mxu0
  %476 = vmatprep.mubr.f32.mxu0 0.0
  %477 = vmatmul.mubr.f32.gmra.mxu0 %v391
  %v478 = vpop.f32.mrf.mxu0
  %v479 = vadd.f32 0.0, %v478
  %v480 = vpop.f32.mrf.mxu0
  %481 = vdwg.mxu0
  %v482 = vadd.f32 %v365, %v464
  %v483 = vadd.f32 %v366, %v469
  %v484 = vadd.f32 %v367, %v474
  %v485 = vadd.f32 %v368, %v479
  %486 = vst.msk [vmem:[#allocation2] sm:$0xff] %vm139, %v482
  %487 = vst.msk [vmem:[#allocation2 + $0x8] sm:$0xff] %vm139, %v483
  %488 = vst.msk [vmem:[#allocation2 + $0x10] sm:$0xff] %vm139, %v484
  %489 = vst.msk [vmem:[#allocation2 + $0x18] sm:$0xff] %vm139, %v485
  // Predicated region
  $region42: #{vit_forward.13} parent=0 // pred_check
    %p490 = pneg %p32
  $region43: #{vit_forward.13} parent=0 // pred_check_branch
    %492 = sbr.rel (%p490) target = $region45
  $region44: #{vit_forward.13} parent=0 // pred_region
    %v493 = vld [vmem:[#allocation2] sm:$0xff]
    %v494 = vld [vmem:[#allocation2 + $0x8] sm:$0xff]
    %v495 = vld [vmem:[#allocation2 + $0x10] sm:$0xff]
    %v496 = vld [vmem:[#allocation2 + $0x18] sm:$0xff]
    %v497 = vld [vmem:[%s8] sm:$0x1]
    %v499 = vlaneseq
    %v500 = vshrl.u32 %v499, 7
    %v501 = vsub.s32 0, %v500
    %v502 = vrot.slane %v497, %v501
    %v504 = vadd.f32 %v493, %v502
    %v505 = vadd.f32 %v494, %v502
    %v506 = vadd.f32 %v495, %v502
    %v507 = vadd.f32 %v496, %v502
    %v508 = vld [vmem:[%s0] sm:$0xff]
    %v509 = vld [vmem:[%s0 + $0x8] sm:$0xff]
    %v510 = vld [vmem:[%s0 + $0x10] sm:$0xff]
    %v511 = vld [vmem:[%s0 + $0x18] sm:$0xff]
    %v512 = vadd.f32 %v504, %v508
    %v513 = vadd.f32 %v505, %v509
    %v514 = vadd.f32 %v506, %v510
    %v515 = vadd.f32 %v507, %v511
    %516 = vst.msk [vmem:[%s9] sm:$0xff] %vm139, %v512
    %517 = vst.msk [vmem:[%s9 + $0x8] sm:$0xff] %vm139, %v513
    %518 = vst.msk [vmem:[%s9 + $0x10] sm:$0xff] %vm139, %v514
    %519 = vst.msk [vmem:[%s9 + $0x18] sm:$0xff] %vm139, %v515
  $region45: #{vit_forward.13} parent=0 // pred_fallthru
    _
  // Predicated region
  $region46: #{vit_forward.13} parent=0 // pred_check
    _
  $region47: #{vit_forward.13} parent=0 // pred_check_branch
    %521 = sbr.rel (0) target = $region49
  $region48: #{vit_forward.13} parent=0 // pred_region
    _
  $region49: #{vit_forward.13} parent=0 // pred_fallthru
    _
  // Predicated region
  $region50: #{vit_forward.13} parent=0 // pred_check
    _
  $region51: #{vit_forward.13} parent=0 // pred_check_branch
    %523 = sbr.rel (0) target = $region53
  $region52: #{vit_forward.13} parent=0 // pred_region
    _
  $region53: #{vit_forward.13} parent=0 // pred_fallthru
    _

// kernel: vit_forward.11
$region0: #{vit_forward.11}
  #allocation0 [shape = 'u32[]', space=smem, size = 0x4, offset = 0x4, fixed_abs, tag = 'smem constant byte address 0x4 - core index']
  #allocation1 [shape = 'u32[144,128]{1,0:T(1,128)}', space=vmem, size = 0x12000, scoped, tag = 'internal scratch']
  #allocation2 [shape = 'f32[4,16,1]{2,1,0:T(8,128)}', space=vmem, size = 0x8000, scoped, tag = 'scratch operand']
  #allocation3 [shape = 'f32[4,16,1]{2,1,0:T(8,128)}', space=vmem, size = 0x8000, scoped, tag = 'scratch operand']
  #allocation4 [shape = 'f32[4,16,8]{2,1,0:T(8,128)}', space=vmem, size = 0x8000, scoped, tag = 'scratch operand']
  %s0 = inlined_call_operand.vmem [shape: f32[8,16,8], index: 0, kind: input, shape index: {}]
  %s1 = inlined_call_operand.vmem [shape: f32[8,16,8], index: 1, kind: input, shape index: {}]
  %s2 = inlined_call_operand.vmem [shape: f32[8,16,8], index: 2, kind: input, shape index: {}]
  %s3 = inlined_call_operand.vmem [shape: f32[8,16,8], index: 3, kind: output, shape index: {}]
  %s4 = sld [smem:[#allocation0]]
  $region53: #{vit_forward.11} parent=0
    _
  %s6 = ssub.s32 1, %s4
  %s7 = scalar_select 0, %s6, %s4
  loop: start=0, step=1, limit=4
  $region2: #{vit_forward.11} parent=0 // loop_pre_header
    _
  $region3: #{vit_forward.11} parent=0 // loop_header
    %s9 = sphi 0, %s13
    %p10 = scmp.ge.s32.totalorder %s9, 4
    %s16 = sphi 0, %s35
    %s17 = sphi 0, %s31
    %s18 = sphi 0, %s27
    %s19 = sphi 0, %s16
    %s20 = sphi 0, %s17
    %s21 = sphi 0, %s18
    %s22 = sphi 0, %s19
    %s23 = sphi 0, %s20
    %s24 = sphi 0, %s21
    %s40 = sphi 0, %s42
    %s43 = sphi 0, %s40
    %s44 = sphi 0, %s43
    %s60 = sphi 0, %s44
    %s68 = sphi 0, %s70
    %s71 = sphi 0, %s68
    %s72 = sphi 0, %s71
    %s88 = sphi 0, %s72
    %s96 = sphi 0, %s98
    %s99 = sphi 0, %s96
    %s100 = sphi 0, %s99
    %s116 = sphi 0, %s100
    %s124 = sphi 0, %s126
    %s127 = sphi 0, %s124
    %s128 = sphi 0, %s127
    %s144 = sphi 0, %s128
  $region4: #{vit_forward.11} parent=0 // loop_header_branch
    %12 = sbr.rel (%p10) target = $region8
  $region5: #{vit_forward.11} parent=0 // loop_body
    %s14 = ssub.s32 %s9, 1
    %s15 = ssub.s32 %s9, 2
    %s25 = sadd.s32 1, %s18
    %p26 = scmp.ge.s32.totalorder %s25, 1
    %s27 = scalar_select %p26, 0, %s25
    %s28 = sadd.s32 1, %s17
    %s29 = scalar_select %p26, %s28, %s17
    %p30 = scmp.ge.s32.totalorder %s29, 1
    %s31 = scalar_select %p30, 0, %s29
    %s32 = sadd.s32 1, %s16
    %s33 = scalar_select %p30, %s32, %s16
    %p34 = scmp.ge.s32.totalorder %s33, 2
    %s35 = scalar_select %p34, 0, %s33
    %s36 = ssub.s32 %s16, %s35
    %s37 = ssub.s32 %s17, %s31
    %s38 = sor.u32 %s36, %s37
    %p39 = scmp.eq.s32.totalorder %s38, 0
    %s41 = sadd.s32 %s40, 1
    %s42 = scalar_select %p39, %s40, %s41
    %p45 = pneg %p39
    %p46 = scmp.eq.s32.totalorder %s9, 1
    %p47 = por %p45, %p46
    %p48 = scmp.ne.s32.totalorder %s40, %s43
    %p49 = scmp.eq.s32.totalorder %s9, 0
    %p50 = por %p48, %p49
    %p51 = scmp.ne.s32.totalorder %s40, %s43
    %p52 = scmp.eq.s32.totalorder %s14, 1
    %p53 = por %p51, %p52
    %p54 = scmp.ne.s32.totalorder %s43, %s44
    %p55 = scmp.eq.s32.totalorder %s14, 0
    %p56 = por %p54, %p55
    %p57 = scmp.ne.s32.totalorder %s43, %s44
    %p58 = scmp.eq.s32.totalorder %s15, 1
    %p59 = por %p57, %p58
    %p61 = scmp.ne.s32.totalorder %s44, %s60
    %p62 = scmp.eq.s32.totalorder %s15, 0
    %p63 = por %p61, %p62
    %s64 = ssub.s32 %s16, %s35
    %s65 = ssub.s32 %s18, %s27
    %s66 = sor.u32 %s64, %s65
    %p67 = scmp.eq.s32.totalorder %s66, 0
    %s69 = sadd.s32 %s68, 1
    %s70 = scalar_select %p67, %s68, %s69
    %p73 = pneg %p67
    %p74 = scmp.eq.s32.totalorder %s9, 1
    %p75 = por %p73, %p74
    %p76 = scmp.ne.s32.totalorder %s68, %s71
    %p77 = scmp.eq.s32.totalorder %s9, 0
    %p78 = por %p76, %p77
    %p79 = scmp.ne.s32.totalorder %s68, %s71
    %p80 = scmp.eq.s32.totalorder %s14, 1
    %p81 = por %p79, %p80
    %p82 = scmp.ne.s32.totalorder %s71, %s72
    %p83 = scmp.eq.s32.totalorder %s14, 0
    %p84 = por %p82, %p83
    %p85 = scmp.ne.s32.totalorder %s71, %s72
    %p86 = scmp.eq.s32.totalorder %s15, 1
    %p87 = por %p85, %p86
    %p89 = scmp.ne.s32.totalorder %s72, %s88
    %p90 = scmp.eq.s32.totalorder %s15, 0
    %p91 = por %p89, %p90
    %s92 = ssub.s32 %s16, %s35
    %s93 = ssub.s32 %s18, %s27
    %s94 = sor.u32 %s92, %s93
    %p95 = scmp.eq.s32.totalorder %s94, 0
    %s97 = sadd.s32 %s96, 1
    %s98 = scalar_select %p95, %s96, %s97
    %p101 = pneg %p95
    %p102 = scmp.eq.s32.totalorder %s9, 1
    %p103 = por %p101, %p102
    %p104 = scmp.ne.s32.totalorder %s96, %s99
    %p105 = scmp.eq.s32.totalorder %s9, 0
    %p106 = por %p104, %p105
    %p107 = scmp.ne.s32.totalorder %s96, %s99
    %p108 = scmp.eq.s32.totalorder %s14, 1
    %p109 = por %p107, %p108
    %p110 = scmp.ne.s32.totalorder %s99, %s100
    %p111 = scmp.eq.s32.totalorder %s14, 0
    %p112 = por %p110, %p111
    %p113 = scmp.ne.s32.totalorder %s99, %s100
    %p114 = scmp.eq.s32.totalorder %s15, 1
    %p115 = por %p113, %p114
    %p117 = scmp.ne.s32.totalorder %s100, %s116
    %p118 = scmp.eq.s32.totalorder %s15, 0
    %p119 = por %p117, %p118
    %s120 = ssub.s32 %s16, %s35
    %s121 = ssub.s32 %s17, %s31
    %s122 = sor.u32 %s120, %s121
    %p123 = scmp.eq.s32.totalorder %s122, 0
    %s125 = sadd.s32 %s124, 1
    %s126 = scalar_select %p123, %s124, %s125
    %p129 = pneg %p123
    %p130 = scmp.eq.s32.totalorder %s9, 1
    %p131 = por %p129, %p130
    %p132 = scmp.ne.s32.totalorder %s124, %s127
    %p133 = scmp.eq.s32.totalorder %s9, 0
    %p134 = por %p132, %p133
    %p135 = scmp.ne.s32.totalorder %s124, %s127
    %p136 = scmp.eq.s32.totalorder %s14, 1
    %p137 = por %p135, %p136
    %p138 = scmp.ne.s32.totalorder %s127, %s128
    %p139 = scmp.eq.s32.totalorder %s14, 0
    %p140 = por %p138, %p139
    %p141 = scmp.ne.s32.totalorder %s127, %s128
    %p142 = scmp.eq.s32.totalorder %s15, 1
    %p143 = por %p141, %p142
    %p145 = scmp.ne.s32.totalorder %s128, %s144
    %p146 = scmp.eq.s32.totalorder %s15, 0
    %p147 = por %p145, %p146
    %p148 = scmp.le.s32.totalorder 1, %s9
    %p149 = scmp.lt.s32.totalorder %s9, 3
    %p150 = pnand %p148, %p149
    %p151 = pneg %p150
    // Predicated region
    $region9: #{vit_forward.11} parent=5 // pred_check
      _
    $region10: #{vit_forward.11} parent=5 // pred_check_branch
      %153 = sbr.rel (%p150) target = $region12
    $region11: #{vit_forward.11} parent=5 // pred_region
      %s154 = ssub.s32 %s9, 1
    $region12: #{vit_forward.11} parent=5 // pred_fallthru
      _
    %p155 = scmp.lt.s32.totalorder %s9, 2
    // Predicated region
    $region13: #{vit_forward.11} parent=5 // pred_check
      %p156 = pneg %p155
    $region14: #{vit_forward.11} parent=5 // pred_check_branch
      %158 = sbr.rel (%p156) target = $region16
    $region15: #{vit_forward.11} parent=5 // pred_region
      // Predicated region
      $region17: #{vit_forward.11} parent=15 // pred_check
        %p159 = pneg %p50
      $region18: #{vit_forward.11} parent=15 // pred_check_branch
        %161 = sbr.rel (%p159) target = $region20
      $region19: #{vit_forward.11} parent=15 // pred_region
        %s162 = smul.u32 4, %s16
        %s163 = smul.u32 2, %s17
        %p164 = scmp.lt.s32.totalorder %s162, 7
        %s165 = scalar_select %p164, %s162, 7
        %p166 = scmp.lt.s32.totalorder %s163, 1
        %s167 = scalar_select %p166, %s163, 1
        %s168 = smul.addr %s165, 2
        %s169 = sadd.s32 %s167, %s168
        %s170 = smul.addr %s169, 8
        %s171 = scalar_lea.vmem %s0, %s170
        %s172 = smul.u32 4, %s16
        %s173 = smul.u32 2, %s17
      $region20: #{vit_forward.11} parent=15 // pred_fallthru
        _
      // Predicated region
      $region21: #{vit_forward.11} parent=15 // pred_check
        %p174 = pneg %p78
      $region22: #{vit_forward.11} parent=15 // pred_check_branch
        %176 = sbr.rel (%p174) target = $region24
      $region23: #{vit_forward.11} parent=15 // pred_region
        %s177 = smul.u32 4, %s16
        %s178 = smul.u32 2, %s18
        %p179 = scmp.lt.s32.totalorder %s177, 7
        %s180 = scalar_select %p179, %s177, 7
        %p181 = scmp.lt.s32.totalorder %s178, 1
        %s182 = scalar_select %p181, %s178, 1
        %s183 = smul.addr %s180, 2
        %s184 = sadd.s32 %s182, %s183
        %s185 = smul.addr %s184, 8
        %s186 = scalar_lea.vmem %s1, %s185
        %s187 = smul.u32 4, %s16
        %s188 = smul.u32 2, %s18
      $region24: #{vit_forward.11} parent=15 // pred_fallthru
        _
      // Predicated region
      $region25: #{vit_forward.11} parent=15 // pred_check
        %p189 = pneg %p106
      $region26: #{vit_forward.11} parent=15 // pred_check_branch
        %191 = sbr.rel (%p189) target = $region28
      $region27: #{vit_forward.11} parent=15 // pred_region
        %s192 = smul.u32 4, %s16
        %s193 = smul.u32 2, %s18
        %p194 = scmp.lt.s32.totalorder %s192, 7
        %s195 = scalar_select %p194, %s192, 7
        %p196 = scmp.lt.s32.totalorder %s193, 1
        %s197 = scalar_select %p196, %s193, 1
        %s198 = smul.addr %s195, 2
        %s199 = sadd.s32 %s197, %s198
        %s200 = smul.addr %s199, 8
        %s201 = scalar_lea.vmem %s2, %s200
        %s202 = smul.u32 4, %s16
        %s203 = smul.u32 2, %s18
      $region28: #{vit_forward.11} parent=15 // pred_fallthru
        _
    $region16: #{vit_forward.11} parent=5 // pred_fallthru
      _
    %p204 = scmp.le.s32.totalorder 1, %s9
    %p205 = scmp.lt.s32.totalorder %s9, 3
    %p206 = pnand %p204, %p205
    %p207 = pneg %p206
    // Predicated region
    $region29: #{vit_forward.11} parent=5 // pred_check
      _
    $region30: #{vit_forward.11} parent=5 // pred_check_branch
      %209 = sbr.rel (%p206) target = $region32
    $region31: #{vit_forward.11} parent=5 // pred_region
      %s210 = ssub.s32 %s9, 1
      %s211 = smul.u32 4, %s19
      %s212 = smul.u32 2, %s20
      %p213 = scmp.lt.s32.totalorder %s211, 7
      %s214 = scalar_select %p213, %s211, 7
      %p215 = scmp.lt.s32.totalorder %s212, 1
      %s216 = scalar_select %p215, %s212, 1
      %s217 = smul.addr %s214, 2
      %s218 = sadd.s32 %s216, %s217
      %s219 = smul.addr %s218, 8
      %s220 = scalar_lea.vmem %s0, %s219
      %p221 = pneg %p56
      %p222 = pneg %p53
      %s223 = smul.u32 4, %s19
      %s224 = smul.u32 2, %s21
      %p225 = scmp.lt.s32.totalorder %s223, 7
      %s226 = scalar_select %p225, %s223, 7
      %p227 = scmp.lt.s32.totalorder %s224, 1
      %s228 = scalar_select %p227, %s224, 1
      %s229 = smul.addr %s226, 2
      %s230 = sadd.s32 %s228, %s229
      %s231 = smul.addr %s230, 8
      %s232 = scalar_lea.vmem %s1, %s231
      %p233 = pneg %p84
      %p234 = pneg %p81
      %s235 = smul.u32 4, %s19
      %s236 = smul.u32 2, %s21
      %p237 = scmp.lt.s32.totalorder %s235, 7
      %s238 = scalar_select %p237, %s235, 7
      %p239 = scmp.lt.s32.totalorder %s236, 1
      %s240 = scalar_select %p239, %s236, 1
      %s241 = smul.addr %s238, 2
      %s242 = sadd.s32 %s240, %s241
      %s243 = smul.addr %s242, 8
      %s244 = scalar_lea.vmem %s2, %s243
      %p245 = pneg %p112
      %p246 = pneg %p109
      %p247 = pneg %p140
      %p248 = pneg %p137
      %s249 = smul.u32 4, %s19
      %s250 = smul.u32 2, %s20
      %p251 = scmp.lt.s32.totalorder %s249, 7
      %s252 = scalar_select %p251, %s249, 7
      %p253 = scmp.lt.s32.totalorder %s250, 1
      %s254 = scalar_select %p253, %s250, 1
      %s255 = smul.addr %s252, 2
      %s256 = sadd.s32 %s254, %s255
      %s257 = smul.addr %s256, 8
      %s258 = scalar_lea.vmem %s3, %s257
      %s259 = smul.u32 4, %s19
      %s260 = smul.u32 2, %s20
      %p261 = scmp.lt.s32.totalorder %s259, 7
      %s262 = scalar_select %p261, %s259, 7
      %p263 = scmp.lt.s32.totalorder %s260, 1
      %s264 = scalar_select %p263, %s260, 1
      %s265 = smul.addr %s262, 2
      %s266 = sadd.s32 %s264, %s265
      %s267 = smul.addr %s266, 8
      %s268 = scalar_lea.vmem %s0, %s267
      %s269 = smul.u32 4, %s19
      %s270 = smul.u32 2, %s20
      %s271 = smul.u32 4, %s19
      %s272 = smul.u32 2, %s21
      %p273 = scmp.lt.s32.totalorder %s271, 7
      %s274 = scalar_select %p273, %s271, 7
      %p275 = scmp.lt.s32.totalorder %s272, 1
      %s276 = scalar_select %p275, %s272, 1
      %s277 = smul.addr %s274, 2
      %s278 = sadd.s32 %s276, %s277
      %s279 = smul.addr %s278, 8
      %s280 = scalar_lea.vmem %s1, %s279
      %s281 = smul.u32 4, %s19
      %s282 = smul.u32 2, %s21
      %s283 = smul.u32 4, %s19
      %s284 = smul.u32 2, %s21
      %p285 = scmp.lt.s32.totalorder %s283, 7
      %s286 = scalar_select %p285, %s283, 7
      %p287 = scmp.lt.s32.totalorder %s284, 1
      %s288 = scalar_select %p287, %s284, 1
      %s289 = smul.addr %s286, 2
      %s290 = sadd.s32 %s288, %s289
      %s291 = smul.addr %s290, 8
      %s292 = scalar_lea.vmem %s2, %s291
      %s293 = smul.u32 4, %s19
      %s294 = smul.u32 2, %s21
      %s295 = smul.u32 4, %s19
      %s296 = smul.u32 2, %s20
      %p297 = scmp.lt.s32.totalorder %s295, 7
      %s298 = scalar_select %p297, %s295, 7
      %p299 = scmp.lt.s32.totalorder %s296, 1
      %s300 = scalar_select %p299, %s296, 1
      %s301 = smul.addr %s298, 2
      %s302 = sadd.s32 %s300, %s301
      %s303 = smul.addr %s302, 8
      %s304 = scalar_lea.vmem %s3, %s303
      %s305 = smul.u32 4, %s19
      %s306 = smul.u32 2, %s20
      %p307 = scmp.eq.s32.totalorder %s21, 0
      // Predicated region
      $region33: #{vit_forward.11} parent=31 // pred_check
        %p308 = pneg %p307
      $region34: #{vit_forward.11} parent=31 // pred_check_branch
        %310 = sbr.rel (%p308) target = $region36
      $region35: #{vit_forward.11} parent=31 // pred_region
        %vm311 = vcmask 7168
        %312 = vst.msk [vmem:[#allocation2] sm:$0xff] %vm311, -inf
        %313 = vst.msk [vmem:[#allocation2 + $0x8] sm:$0xff] %vm311, -inf
        %314 = vst.msk [vmem:[#allocation2 + $0x10] sm:$0xff] %vm311, -inf
        %315 = vst.msk [vmem:[#allocation2 + $0x18] sm:$0xff] %vm311, -inf
        %316 = vst.msk [vmem:[#allocation2 + $0x20] sm:$0xff] %vm311, -inf
        %317 = vst.msk [vmem:[#allocation2 + $0x28] sm:$0xff] %vm311, -inf
        %318 = vst.msk [vmem:[#allocation2 + $0x30] sm:$0xff] %vm311, -inf
        %319 = vst.msk [vmem:[#allocation2 + $0x38] sm:$0xff] %vm311, -inf
        %320 = vst.msk [vmem:[#allocation3] sm:$0xff] %vm311, 0.0
        %321 = vst.msk [vmem:[#allocation3 + $0x8] sm:$0xff] %vm311, 0.0
        %322 = vst.msk [vmem:[#allocation3 + $0x10] sm:$0xff] %vm311, 0.0
        %323 = vst.msk [vmem:[#allocation3 + $0x18] sm:$0xff] %vm311, 0.0
        %324 = vst.msk [vmem:[#allocation3 + $0x20] sm:$0xff] %vm311, 0.0
        %325 = vst.msk [vmem:[#allocation3 + $0x28] sm:$0xff] %vm311, 0.0
        %326 = vst.msk [vmem:[#allocation3 + $0x30] sm:$0xff] %vm311, 0.0
        %327 = vst.msk [vmem:[#allocation3 + $0x38] sm:$0xff] %vm311, 0.0
        %vm328 = vcmask 64512
        %329 = vst.msk [vmem:[#allocation4] sm:$0xff] %vm328, 0.0
        %330 = vst.msk [vmem:[#allocation4 + $0x8] sm:$0xff] %vm328, 0.0
        %331 = vst.msk [vmem:[#allocation4 + $0x10] sm:$0xff] %vm328, 0.0
        %332 = vst.msk [vmem:[#allocation4 + $0x18] sm:$0xff] %vm328, 0.0
        %333 = vst.msk [vmem:[#allocation4 + $0x20] sm:$0xff] %vm328, 0.0
        %334 = vst.msk [vmem:[#allocation4 + $0x28] sm:$0xff] %vm328, 0.0
        %335 = vst.msk [vmem:[#allocation4 + $0x30] sm:$0xff] %vm328, 0.0
        %336 = vst.msk [vmem:[#allocation4 + $0x38] sm:$0xff] %vm328, 0.0
      $region36: #{vit_forward.11} parent=31 // pred_fallthru
        _
      %v337 = vld [vmem:[%s268] sm:$0xff]
      %v338 = vld [vmem:[%s268 + $0x8] sm:$0xff]
      %v339 = vld [vmem:[%s268 + $0x10] sm:$0xff]
      %v340 = vld [vmem:[%s268 + $0x18] sm:$0xff]
      %v341 = vld [vmem:[%s268 + $0x20] sm:$0xff]
      %v342 = vld [vmem:[%s268 + $0x28] sm:$0xff]
      %v343 = vld [vmem:[%s268 + $0x30] sm:$0xff]
      %v344 = vld [vmem:[%s268 + $0x38] sm:$0xff]
      %v345 = vld [vmem:[%s280] sm:$0xff]
      %v346 = vld [vmem:[%s280 + $0x8] sm:$0xff]
      %v347 = vld [vmem:[%s280 + $0x10] sm:$0xff]
      %v348 = vld [vmem:[%s280 + $0x18] sm:$0xff]
      %v349 = vld [vmem:[%s280 + $0x20] sm:$0xff]
      %v350 = vld [vmem:[%s280 + $0x28] sm:$0xff]
      %v351 = vld [vmem:[%s280 + $0x30] sm:$0xff]
      %v352 = vld [vmem:[%s280 + $0x38] sm:$0xff]
      %vm353 = vcmask 64512
      %v355 = vsel %vm353, %v337, 0
      %v358 = vsel %vm353, %v338, 0
      %v361 = vsel %vm353, %v345, 0
      %v364 = vsel %vm353, %v346, 0
      %366 = vmatprep.subr.mxu0 0.0
      %367 = vmatpush1.xpose.msra.mxu0 0.0
      %368 = vmatprep.subr.mxu0 0.0
      %369 = vmatpush1.xpose.msra.mxu0 0.0
      %370 = vmatprep.subr.mxu0 0.0
      %371 = vmatpush1.xpose.msra.mxu0 0.0
      %372 = vmatprep.subr.mxu0 0.0
      %373 = vmatpush1.xpose.msra.mxu0 0.0
      %374 = vmatprep.subr.mxu0 0.0
      %375 = vmatpush1.xpose.msra.mxu0 0.0
      %376 = vmatprep.subr.mxu0 0.0
      %377 = vmatpush1.xpose.msra.mxu0 0.0
      %378 = vmatprep.subr.mxu0 0.0
      %379 = vmatpush1.xpose.msra.mxu0 0.0
      %380 = vmatprep.subr.mxu0 0.0
      %381 = vmatpush1.xpose.msra.mxu0 0.0
      %382 = vmatprep.subr.mxu0 0.0
      %383 = vmatpush1.xpose.msra.mxu0 0.0
      %384 = vmatprep.subr.mxu0 0.0
      %385 = vmatpush1.xpose.msra.mxu0 0.0
      %386 = vmatprep.subr.mxu0 0.0
      %387 = vmatpush1.xpose.msra.mxu0 0.0
      %388 = vmatprep.subr.mxu0 0.0
      %389 = vmatpush1.xpose.msra.mxu0 0.0
      %390 = vmatprep.subr.mxu0 0.0
      %391 = vmatpush1.xpose.msra.mxu0 0.0
      %392 = vmatprep.subr.mxu0 0.0
      %393 = vmatpush1.xpose.msra.mxu0 0.0
      %394 = vmatprep.subr.mxu0 0.0
      %395 = vmatpush1.xpose.msra.mxu0 %v364
      %396 = vmatprep.subr.mxu0 0.0
      %397 = vmatpush1.xpose.msra.mxu0 %v361
      %398 = vmatprep.subr.mxu0 0.0
      %399 = vmatpush2.xpose.msra.mxu0 0.0
      %400 = vmatprep.subr.mxu0 0.0
      %401 = vmatpush2.xpose.msra.mxu0 0.0
      %402 = vmatprep.subr.mxu0 0.0
      %403 = vmatpush2.xpose.msra.mxu0 0.0
      %404 = vmatprep.subr.mxu0 0.0
      %405 = vmatpush2.xpose.msra.mxu0 0.0
      %406 = vmatprep.subr.mxu0 0.0
      %407 = vmatpush2.xpose.msra.mxu0 0.0
      %408 = vmatprep.subr.mxu0 0.0
      %409 = vmatpush2.xpose.msra.mxu0 0.0
      %410 = vmatprep.subr.mxu0 0.0
      %411 = vmatpush2.xpose.msra.mxu0 0.0
      %412 = vmatprep.subr.mxu0 0.0
      %413 = vmatpush2.xpose.msra.mxu0 0.0
      %414 = vmatprep.subr.mxu0 0.0
      %415 = vmatpush2.xpose.msra.mxu0 0.0
      %416 = vmatprep.subr.mxu0 0.0
      %417 = vmatpush2.xpose.msra.mxu0 0.0
      %418 = vmatprep.subr.mxu0 0.0
      %419 = vmatpush2.xpose.msra.mxu0 0.0
      %420 = vmatprep.subr.mxu0 0.0
      %421 = vmatpush2.xpose.msra.mxu0 0.0
      %422 = vmatprep.subr.mxu0 0.0
      %423 = vmatpush2.xpose.msra.mxu0 0.0
      %424 = vmatprep.subr.mxu0 0.0
      %425 = vmatpush2.xpose.msra.mxu0 0.0
      %426 = vmatprep.subr.mxu0 0.0
      %427 = vmatpush2.xpose.msra.mxu0 0.0
      %428 = vmatprep.subr.mxu0 0.0
      %429 = vmatpush2.xpose.msra.mxu0 0.0
      %430 = vmatprep.mubr.f32.mxu0 0.0
      %431 = vmatmul.mubr.f32.gmra.mxu0 %v355
      %v432 = vpop.f32.mrf.mxu0
      %v433 = vadd.f32 0.0, %v432
      %v434 = vpop.f32.mrf.mxu0
      %435 = vmatprep.mubr.f32.mxu0 0.0
      %436 = vmatmul.mubr.f32.gmra.mxu0 %v358
      %v437 = vpop.f32.mrf.mxu0
      %v438 = vadd.f32 0.0, %v437
      %v439 = vpop.f32.mrf.mxu0
      %440 = vdwg.mxu0
      %v442 = vsel %vm353, %v339, 0
      %v445 = vsel %vm353, %v340, 0
      %v448 = vsel %vm353, %v347, 0
      %v451 = vsel %vm353, %v348, 0
      %453 = vmatprep.subr.mxu0 0.0
      %454 = vmatpush1.xpose.msra.mxu0 0.0
      %455 = vmatprep.subr.mxu0 0.0
      %456 = vmatpush1.xpose.msra.mxu0 0.0
      %457 = vmatprep.subr.mxu0 0.0
      %458 = vmatpush1.xpose.msra.mxu0 0.0
      %459 = vmatprep.subr.mxu0 0.0
      %460 = vmatpush1.xpose.msra.mxu0 0.0
      %461 = vmatprep.subr.mxu0 0.0
      %462 = vmatpush1.xpose.msra.mxu0 0.0
      %463 = vmatprep.subr.mxu0 0.0
      %464 = vmatpush1.xpose.msra.mxu0 0.0
      %465 = vmatprep.subr.mxu0 0.0
      %466 = vmatpush1.xpose.msra.mxu0 0.0
      %467 = vmatprep.subr.mxu0 0.0
      %468 = vmatpush1.xpose.msra.mxu0 0.0
      %469 = vmatprep.subr.mxu0 0.0
      %470 = vmatpush1.xpose.msra.mxu0 0.0
      %471 = vmatprep.subr.mxu0 0.0
      %472 = vmatpush1.xpose.msra.mxu0 0.0
      %473 = vmatprep.subr.mxu0 0.0
      %474 = vmatpush1.xpose.msra.mxu0 0.0
      %475 = vmatprep.subr.mxu0 0.0
      %476 = vmatpush1.xpose.msra.mxu0 0.0
      %477 = vmatprep.subr.mxu0 0.0
      %478 = vmatpush1.xpose.msra.mxu0 0.0
      %479 = vmatprep.subr.mxu0 0.0
      %480 = vmatpush1.xpose.msra.mxu0 0.0
      %481 = vmatprep.subr.mxu0 0.0
      %482 = vmatpush1.xpose.msra.mxu0 %v451
      %483 = vmatprep.subr.mxu0 0.0
      %484 = vmatpush1.xpose.msra.mxu0 %v448
      %485 = vmatprep.subr.mxu0 0.0
      %486 = vmatpush2.xpose.msra.mxu0 0.0
      %487 = vmatprep.subr.mxu0 0.0
      %488 = vmatpush2.xpose.msra.mxu0 0.0
      %489 = vmatprep.subr.mxu0 0.0
      %490 = vmatpush2.xpose.msra.mxu0 0.0
      %491 = vmatprep.subr.mxu0 0.0
      %492 = vmatpush2.xpose.msra.mxu0 0.0
      %493 = vmatprep.subr.mxu0 0.0
      %494 = vmatpush2.xpose.msra.mxu0 0.0
      %495 = vmatprep.subr.mxu0 0.0
      %496 = vmatpush2.xpose.msra.mxu0 0.0
      %497 = vmatprep.subr.mxu0 0.0
      %498 = vmatpush2.xpose.msra.mxu0 0.0
      %499 = vmatprep.subr.mxu0 0.0
      %500 = vmatpush2.xpose.msra.mxu0 0.0
      %501 = vmatprep.subr.mxu0 0.0
      %502 = vmatpush2.xpose.msra.mxu0 0.0
      %503 = vmatprep.subr.mxu0 0.0
      %504 = vmatpush2.xpose.msra.mxu0 0.0
      %505 = vmatprep.subr.mxu0 0.0
      %506 = vmatpush2.xpose.msra.mxu0 0.0
      %507 = vmatprep.subr.mxu0 0.0
      %508 = vmatpush2.xpose.msra.mxu0 0.0
      %509 = vmatprep.subr.mxu0 0.0
      %510 = vmatpush2.xpose.msra.mxu0 0.0
      %511 = vmatprep.subr.mxu0 0.0
      %512 = vmatpush2.xpose.msra.mxu0 0.0
      %513 = vmatprep.subr.mxu0 0.0
      %514 = vmatpush2.xpose.msra.mxu0 0.0
      %515 = vmatprep.subr.mxu0 0.0
      %516 = vmatpush2.xpose.msra.mxu0 0.0
      %517 = vmatprep.mubr.f32.mxu0 0.0
      %518 = vmatmul.mubr.f32.gmra.mxu0 %v442
      %v519 = vpop.f32.mrf.mxu0
      %v520 = vadd.f32 0.0, %v519
      %v521 = vpop.f32.mrf.mxu0
      %522 = vmatprep.mubr.f32.mxu0 0.0
      %523 = vmatmul.mubr.f32.gmra.mxu0 %v445
      %v524 = vpop.f32.mrf.mxu0
      %v525 = vadd.f32 0.0, %v524
      %v526 = vpop.f32.mrf.mxu0
      %527 = vdwg.mxu0
      %v529 = vsel %vm353, %v341, 0
      %v532 = vsel %vm353, %v342, 0
      %v535 = vsel %vm353, %v349, 0
      %v538 = vsel %vm353, %v350, 0
      %540 = vmatprep.subr.mxu0 0.0
      %541 = vmatpush1.xpose.msra.mxu0 0.0
      %542 = vmatprep.subr.mxu0 0.0
      %543 = vmatpush1.xpose.msra.mxu0 0.0
      %544 = vmatprep.subr.mxu0 0.0
      %545 = vmatpush1.xpose.msra.mxu0 0.0
      %546 = vmatprep.subr.mxu0 0.0
      %547 = vmatpush1.xpose.msra.mxu0 0.0
      %548 = vmatprep.subr.mxu0 0.0
      %549 = vmatpush1.xpose.msra.mxu0 0.0
      %550 = vmatprep.subr.mxu0 0.0
      %551 = vmatpush1.xpose.msra.mxu0 0.0
      %552 = vmatprep.subr.mxu0 0.0
      %553 = vmatpush1.xpose.msra.mxu0 0.0
      %554 = vmatprep.subr.mxu0 0.0
      %555 = vmatpush1.xpose.msra.mxu0 0.0
      %556 = vmatprep.subr.mxu0 0.0
      %557 = vmatpush1.xpose.msra.mxu0 0.0
      %558 = vmatprep.subr.mxu0 0.0
      %559 = vmatpush1.xpose.msra.mxu0 0.0
      %560 = vmatprep.subr.mxu0 0.0
      %561 = vmatpush1.xpose.msra.mxu0 0.0
      %562 = vmatprep.subr.mxu0 0.0
      %563 = vmatpush1.xpose.msra.mxu0 0.0
      %564 = vmatprep.subr.mxu0 0.0
      %565 = vmatpush1.xpose.msra.mxu0 0.0
      %566 = vmatprep.subr.mxu0 0.0
      %567 = vmatpush1.xpose.msra.mxu0 0.0
      %568 = vmatprep.subr.mxu0 0.0
      %569 = vmatpush1.xpose.msra.mxu0 %v538
      %570 = vmatprep.subr.mxu0 0.0
      %571 = vmatpush1.xpose.msra.mxu0 %v535
      %572 = vmatprep.subr.mxu0 0.0
      %573 = vmatpush2.xpose.msra.mxu0 0.0
      %574 = vmatprep.subr.mxu0 0.0
      %575 = vmatpush2.xpose.msra.mxu0 0.0
      %576 = vmatprep.subr.mxu0 0.0
      %577 = vmatpush2.xpose.msra.mxu0 0.0
      %578 = vmatprep.subr.mxu0 0.0
      %579 = vmatpush2.xpose.msra.mxu0 0.0
      %580 = vmatprep.subr.mxu0 0.0
      %581 = vmatpush2.xpose.msra.mxu0 0.0
      %582 = vmatprep.subr.mxu0 0.0
      %583 = vmatpush2.xpose.msra.mxu0 0.0
      %584 = vmatprep.subr.mxu0 0.0
      %585 = vmatpush2.xpose.msra.mxu0 0.0
      %586 = vmatprep.subr.mxu0 0.0
      %587 = vmatpush2.xpose.msra.mxu0 0.0
      %588 = vmatprep.subr.mxu0 0.0
      %589 = vmatpush2.xpose.msra.mxu0 0.0
      %590 = vmatprep.subr.mxu0 0.0
      %591 = vmatpush2.xpose.msra.mxu0 0.0
      %592 = vmatprep.subr.mxu0 0.0
      %593 = vmatpush2.xpose.msra.mxu0 0.0
      %594 = vmatprep.subr.mxu0 0.0
      %595 = vmatpush2.xpose.msra.mxu0 0.0
      %596 = vmatprep.subr.mxu0 0.0
      %597 = vmatpush2.xpose.msra.mxu0 0.0
      %598 = vmatprep.subr.mxu0 0.0
      %599 = vmatpush2.xpose.msra.mxu0 0.0
      %600 = vmatprep.subr.mxu0 0.0
      %601 = vmatpush2.xpose.msra.mxu0 0.0
      %602 = vmatprep.subr.mxu0 0.0
      %603 = vmatpush2.xpose.msra.mxu0 0.0
      %604 = vmatprep.mubr.f32.mxu0 0.0
      %605 = vmatmul.mubr.f32.gmra.mxu0 %v529
      %v606 = vpop.f32.mrf.mxu0
      %v607 = vadd.f32 0.0, %v606
      %v608 = vpop.f32.mrf.mxu0
      %609 = vmatprep.mubr.f32.mxu0 0.0
      %610 = vmatmul.mubr.f32.gmra.mxu0 %v532
      %v611 = vpop.f32.mrf.mxu0
      %v612 = vadd.f32 0.0, %v611
      %v613 = vpop.f32.mrf.mxu0
      %614 = vdwg.mxu0
      %v616 = vsel %vm353, %v343, 0
      %v619 = vsel %vm353, %v344, 0
      %v622 = vsel %vm353, %v351, 0
      %v625 = vsel %vm353, %v352, 0
      %627 = vmatprep.subr.mxu0 0.0
      %628 = vmatpush1.xpose.msra.mxu0 0.0
      %629 = vmatprep.subr.mxu0 0.0
      %630 = vmatpush1.xpose.msra.mxu0 0.0
      %631 = vmatprep.subr.mxu0 0.0
      %632 = vmatpush1.xpose.msra.mxu0 0.0
      %633 = vmatprep.subr.mxu0 0.0
      %634 = vmatpush1.xpose.msra.mxu0 0.0
      %635 = vmatprep.subr.mxu0 0.0
      %636 = vmatpush1.xpose.msra.mxu0 0.0
      %637 = vmatprep.subr.mxu0 0.0
      %638 = vmatpush1.xpose.msra.mxu0 0.0
      %639 = vmatprep.subr.mxu0 0.0
      %640 = vmatpush1.xpose.msra.mxu0 0.0
      %641 = vmatprep.subr.mxu0 0.0
      %642 = vmatpush1.xpose.msra.mxu0 0.0
      %643 = vmatprep.subr.mxu0 0.0
      %644 = vmatpush1.xpose.msra.mxu0 0.0
      %645 = vmatprep.subr.mxu0 0.0
      %646 = vmatpush1.xpose.msra.mxu0 0.0
      %647 = vmatprep.subr.mxu0 0.0
      %648 = vmatpush1.xpose.msra.mxu0 0.0
      %649 = vmatprep.subr.mxu0 0.0
      %650 = vmatpush1.xpose.msra.mxu0 0.0
      %651 = vmatprep.subr.mxu0 0.0
      %652 = vmatpush1.xpose.msra.mxu0 0.0
      %653 = vmatprep.subr.mxu0 0.0
      %654 = vmatpush1.xpose.msra.mxu0 0.0
      %655 = vmatprep.subr.mxu0 0.0
      %656 = vmatpush1.xpose.msra.mxu0 %v625
      %657 = vmatprep.subr.mxu0 0.0
      %658 = vmatpush1.xpose.msra.mxu0 %v622
      %659 = vmatprep.subr.mxu0 0.0
      %660 = vmatpush2.xpose.msra.mxu0 0.0
      %661 = vmatprep.subr.mxu0 0.0
      %662 = vmatpush2.xpose.msra.mxu0 0.0
      %663 = vmatprep.subr.mxu0 0.0
      %664 = vmatpush2.xpose.msra.mxu0 0.0
      %665 = vmatprep.subr.mxu0 0.0
      %666 = vmatpush2.xpose.msra.mxu0 0.0
      %667 = vmatprep.subr.mxu0 0.0
      %668 = vmatpush2.xpose.msra.mxu0 0.0
      %669 = vmatprep.subr.mxu0 0.0
      %670 = vmatpush2.xpose.msra.mxu0 0.0
      %671 = vmatprep.subr.mxu0 0.0
      %672 = vmatpush2.xpose.msra.mxu0 0.0
      %673 = vmatprep.subr.mxu0 0.0
      %674 = vmatpush2.xpose.msra.mxu0 0.0
      %675 = vmatprep.subr.mxu0 0.0
      %676 = vmatpush2.xpose.msra.mxu0 0.0
      %677 = vmatprep.subr.mxu0 0.0
      %678 = vmatpush2.xpose.msra.mxu0 0.0
      %679 = vmatprep.subr.mxu0 0.0
      %680 = vmatpush2.xpose.msra.mxu0 0.0
      %681 = vmatprep.subr.mxu0 0.0
      %682 = vmatpush2.xpose.msra.mxu0 0.0
      %683 = vmatprep.subr.mxu0 0.0
      %684 = vmatpush2.xpose.msra.mxu0 0.0
      %685 = vmatprep.subr.mxu0 0.0
      %686 = vmatpush2.xpose.msra.mxu0 0.0
      %687 = vmatprep.subr.mxu0 0.0
      %688 = vmatpush2.xpose.msra.mxu0 0.0
      %689 = vmatprep.subr.mxu0 0.0
      %690 = vmatpush2.xpose.msra.mxu0 0.0
      %691 = vmatprep.mubr.f32.mxu0 0.0
      %692 = vmatmul.mubr.f32.gmra.mxu0 %v616
      %v693 = vpop.f32.mrf.mxu0
      %v694 = vadd.f32 0.0, %v693
      %v695 = vpop.f32.mrf.mxu0
      %696 = vmatprep.mubr.f32.mxu0 0.0
      %697 = vmatmul.mubr.f32.gmra.mxu0 %v619
      %v698 = vpop.f32.mrf.mxu0
      %v699 = vadd.f32 0.0, %v698
      %v700 = vpop.f32.mrf.mxu0
      %701 = vdwg.mxu0
      %v702 = vld [vmem:[#allocation2] sm:$0xff]
      %v703 = vld [vmem:[#allocation2 + $0x8] sm:$0xff]
      %v704 = vld [vmem:[#allocation2 + $0x10] sm:$0xff]
      %v705 = vld [vmem:[#allocation2 + $0x18] sm:$0xff]
      %v706 = vld [vmem:[#allocation2 + $0x20] sm:$0xff]
      %v707 = vld [vmem:[#allocation2 + $0x28] sm:$0xff]
      %v708 = vld [vmem:[#allocation2 + $0x30] sm:$0xff]
      %v709 = vld [vmem:[#allocation2 + $0x38] sm:$0xff]
      %vm710 = vcmask 130048
      %v711 = vsel %vm710, %v433, -inf
      %712 = vmax.xlane.f32.xlu0 %v711
      %v713 = vpop.xlane.xlu0 %712
      %v714 = vsel %vm710, %v438, -inf
      %715 = vmax.xlane.f32.xlu0 %v714
      %v716 = vpop.xlane.xlu0 %715
      %v717 = vsel %vm710, %v520, -inf
      %718 = vmax.xlane.f32.xlu0 %v717
      %v719 = vpop.xlane.xlu0 %718
      %v720 = vsel %vm710, %v525, -inf
      %721 = vmax.xlane.f32.xlu0 %v720
      %v722 = vpop.xlane.xlu0 %721
      %v723 = vsel %vm710, %v607, -inf
      %724 = vmax.xlane.f32.xlu0 %v723
      %v725 = vpop.xlane.xlu0 %724
      %v726 = vsel %vm710, %v612, -inf
      %727 = vmax.xlane.f32.xlu0 %v726
      %v728 = vpop.xlane.xlu0 %727
      %v729 = vsel %vm710, %v694, -inf
      %730 = vmax.xlane.f32.xlu0 %v729
      %v731 = vpop.xlane.xlu0 %730
      %v732 = vsel %vm710, %v699, -inf
      %733 = vmax.xlane.f32.xlu0 %v732
      %v734 = vpop.xlane.xlu0 %733
      %v735 = vmax.f32 %v702, %v713
      %v736 = vmax.f32 %v703, %v716
      %v737 = vmax.f32 %v704, %v719
      %v738 = vmax.f32 %v705, %v722
      %v739 = vmax.f32 %v706, %v725
      %v740 = vmax.f32 %v707, %v728
      %v741 = vmax.f32 %v708, %v731
      %v742 = vmax.f32 %v709, %v734
      %v743 = vsub.f32 %v702, %v735
      %v744 = vsub.f32 %v703, %v736
      %v745 = vsub.f32 %v704, %v737
      %v746 = vsub.f32 %v705, %v738
      %v747 = vsub.f32 %v706, %v739
      %v748 = vsub.f32 %v707, %v740
      %v749 = vsub.f32 %v708, %v741
      %v750 = vsub.f32 %v709, %v742
      %v751 = vmul.f32 %v743, 1.442695
      %v752 = vpow.pop %v751
      %v753 = vmul.f32 %v744, 1.442695
      %v754 = vpow.pop %v753
      %v755 = vmul.f32 %v745, 1.442695
      %v756 = vpow.pop %v755
      %v757 = vmul.f32 %v746, 1.442695
      %v758 = vpow.pop %v757
      %v759 = vmul.f32 %v747, 1.442695
      %v760 = vpow.pop %v759
      %v761 = vmul.f32 %v748, 1.442695
      %v762 = vpow.pop %v761
      %v763 = vmul.f32 %v749, 1.442695
      %v764 = vpow.pop %v763
      %v765 = vmul.f32 %v750, 1.442695
      %v766 = vpow.pop %v765
      %768 = vset.pattern.permute.xlu0 0
      %769 = vperm.xlu0 %768, %v735
      %v770 = vpop.permute.xlu0 %769
      %773 = vset.pattern.permute.xlu0 0
      %774 = vperm.xlu0 %773, %v736
      %v775 = vpop.permute.xlu0 %774
      %778 = vset.pattern.permute.xlu0 0
      %779 = vperm.xlu0 %778, %v737
      %v780 = vpop.permute.xlu0 %779
      %783 = vset.pattern.permute.xlu0 0
      %784 = vperm.xlu0 %783, %v738
      %v785 = vpop.permute.xlu0 %784
      %788 = vset.pattern.permute.xlu0 0
      %789 = vperm.xlu0 %788, %v739
      %v790 = vpop.permute.xlu0 %789
      %793 = vset.pattern.permute.xlu0 0
      %794 = vperm.xlu0 %793, %v740
      %v795 = vpop.permute.xlu0 %794
      %798 = vset.pattern.permute.xlu0 0
      %799 = vperm.xlu0 %798, %v741
      %v800 = vpop.permute.xlu0 %799
      %803 = vset.pattern.permute.xlu0 0
      %804 = vperm.xlu0 %803, %v742
      %v805 = vpop.permute.xlu0 %804
      %v807 = vsub.f32 %v433, %v770
      %v808 = vsub.f32 %v438, %v775
      %v809 = vsub.f32 %v520, %v780
      %v810 = vsub.f32 %v525, %v785
      %v811 = vsub.f32 %v607, %v790
      %v812 = vsub.f32 %v612, %v795
      %v813 = vsub.f32 %v694, %v800
      %v814 = vsub.f32 %v699, %v805
      %v815 = vmul.f32 %v807, 1.442695
      %v816 = vpow.pop %v815
      %v817 = vmul.f32 %v808, 1.442695
      %v818 = vpow.pop %v817
      %v819 = vmul.f32 %v809, 1.442695
      %v820 = vpow.pop %v819
      %v821 = vmul.f32 %v810, 1.442695
      %v822 = vpow.pop %v821
      %v823 = vmul.f32 %v811, 1.442695
      %v824 = vpow.pop %v823
      %v825 = vmul.f32 %v812, 1.442695
      %v826 = vpow.pop %v825
      %v827 = vmul.f32 %v813, 1.442695
      %v828 = vpow.pop %v827
      %v829 = vmul.f32 %v814, 1.442695
      %v830 = vpow.pop %v829
      %v831 = vld [vmem:[#allocation3] sm:$0xff]
      %v832 = vld [vmem:[#allocation3 + $0x8] sm:$0xff]
      %v833 = vld [vmem:[#allocation3 + $0x10] sm:$0xff]
      %v834 = vld [vmem:[#allocation3 + $0x18] sm:$0xff]
      %v835 = vld [vmem:[#allocation3 + $0x20] sm:$0xff]
      %v836 = vld [vmem:[#allocation3 + $0x28] sm:$0xff]
      %v837 = vld [vmem:[#allocation3 + $0x30] sm:$0xff]
      %v838 = vld [vmem:[#allocation3 + $0x38] sm:$0xff]
      %v839 = vmul.f32 %v752, %v831
      %v840 = vmul.f32 %v754, %v832
      %v841 = vmul.f32 %v756, %v833
      %v842 = vmul.f32 %v758, %v834
      %v843 = vmul.f32 %v760, %v835
      %v844 = vmul.f32 %v762, %v836
      %v845 = vmul.f32 %v764, %v837
      %v846 = vmul.f32 %v766, %v838
      %v847 = vsel %vm710, %v816, 0.0
      %848 = vadd.xlane.f32.xlu0 %v847
      %v849 = vpop.xlane.xlu0 %848
      %v850 = vsel %vm710, %v818, 0.0
      %851 = vadd.xlane.f32.xlu0 %v850
      %v852 = vpop.xlane.xlu0 %851
      %v853 = vsel %vm710, %v820, 0.0
      %854 = vadd.xlane.f32.xlu0 %v853
      %v855 = vpop.xlane.xlu0 %854
      %v856 = vsel %vm710, %v822, 0.0
      %857 = vadd.xlane.f32.xlu0 %v856
      %v858 = vpop.xlane.xlu0 %857
      %v859 = vsel %vm710, %v824, 0.0
      %860 = vadd.xlane.f32.xlu0 %v859
      %v861 = vpop.xlane.xlu0 %860
      %v862 = vsel %vm710, %v826, 0.0
      %863 = vadd.xlane.f32.xlu0 %v862
      %v864 = vpop.xlane.xlu0 %863
      %v865 = vsel %vm710, %v828, 0.0
      %866 = vadd.xlane.f32.xlu0 %v865
      %v867 = vpop.xlane.xlu0 %866
      %v868 = vsel %vm710, %v830, 0.0
      %869 = vadd.xlane.f32.xlu0 %v868
      %v870 = vpop.xlane.xlu0 %869
      %v871 = vadd.f32 %v839, %v849
      %v872 = vadd.f32 %v840, %v852
      %v873 = vadd.f32 %v841, %v855
      %v874 = vadd.f32 %v842, %v858
      %v875 = vadd.f32 %v843, %v861
      %v876 = vadd.f32 %v844, %v864
      %v877 = vadd.f32 %v845, %v867
      %v878 = vadd.f32 %v846, %v870
      %vm879 = vcmask 7168
      %880 = vst.msk [vmem:[#allocation3] sm:$0xff] %vm879, %v871
      %881 = vst.msk [vmem:[#allocation3 + $0x8] sm:$0xff] %vm879, %v872
      %882 = vst.msk [vmem:[#allocation3 + $0x10] sm:$0xff] %vm879, %v873
      %883 = vst.msk [vmem:[#allocation3 + $0x18] sm:$0xff] %vm879, %v874
      %884 = vst.msk [vmem:[#allocation3 + $0x20] sm:$0xff] %vm879, %v875
      %885 = vst.msk [vmem:[#allocation3 + $0x28] sm:$0xff] %vm879, %v876
      %886 = vst.msk [vmem:[#allocation3 + $0x30] sm:$0xff] %vm879, %v877
      %887 = vst.msk [vmem:[#allocation3 + $0x38] sm:$0xff] %vm879, %v878
      %v888 = vld [vmem:[#allocation4] sm:$0xff]
      %v889 = vld [vmem:[#allocation4 + $0x8] sm:$0xff]
      %v890 = vld [vmem:[#allocation4 + $0x10] sm:$0xff]
      %v891 = vld [vmem:[#allocation4 + $0x18] sm:$0xff]
      %v892 = vld [vmem:[#allocation4 + $0x20] sm:$0xff]
      %v893 = vld [vmem:[#allocation4 + $0x28] sm:$0xff]
      %v894 = vld [vmem:[#allocation4 + $0x30] sm:$0xff]
      %v895 = vld [vmem:[#allocation4 + $0x38] sm:$0xff]
      %897 = vset.pattern.permute.xlu0 0
      %898 = vperm.xlu0 %897, %v752
      %v899 = vpop.permute.xlu0 %898
      %902 = vset.pattern.permute.xlu0 0
      %903 = vperm.xlu0 %902, %v754
      %v904 = vpop.permute.xlu0 %903
      %907 = vset.pattern.permute.xlu0 0
      %908 = vperm.xlu0 %907, %v756
      %v909 = vpop.permute.xlu0 %908
      %912 = vset.pattern.permute.xlu0 0
      %913 = vperm.xlu0 %912, %v758
      %v914 = vpop.permute.xlu0 %913
      %917 = vset.pattern.permute.xlu0 0
      %918 = vperm.xlu0 %917, %v760
      %v919 = vpop.permute.xlu0 %918
      %922 = vset.pattern.permute.xlu0 0
      %923 = vperm.xlu0 %922, %v762
      %v924 = vpop.permute.xlu0 %923
      %927 = vset.pattern.permute.xlu0 0
      %928 = vperm.xlu0 %927, %v764
      %v929 = vpop.permute.xlu0 %928
      %932 = vset.pattern.permute.xlu0 0
      %933 = vperm.xlu0 %932, %v766
      %v934 = vpop.permute.xlu0 %933
      %v936 = vmul.f32 %v899, %v888
      %v937 = vmul.f32 %v904, %v889
      %v938 = vmul.f32 %v909, %v890
      %v939 = vmul.f32 %v914, %v891
      %v940 = vmul.f32 %v919, %v892
      %v941 = vmul.f32 %v924, %v893
      %v942 = vmul.f32 %v929, %v894
      %v943 = vmul.f32 %v934, %v895
      %v944 = vld [vmem:[%s292] sm:$0xff]
      %v945 = vld [vmem:[%s292 + $0x8] sm:$0xff]
      %v946 = vld [vmem:[%s292 + $0x10] sm:$0xff]
      %v947 = vld [vmem:[%s292 + $0x18] sm:$0xff]
      %v948 = vld [vmem:[%s292 + $0x20] sm:$0xff]
      %v949 = vld [vmem:[%s292 + $0x28] sm:$0xff]
      %v950 = vld [vmem:[%s292 + $0x30] sm:$0xff]
      %v951 = vld [vmem:[%s292 + $0x38] sm:$0xff]
      %v953 = vsel %vm710, %v816, 0
      %v956 = vsel %vm710, %v818, 0
      %958 = vmatprep.subr.mxu0 0.0
      %959 = vmatpush1.msra.mxu0 0.0
      %960 = vmatprep.subr.mxu0 0.0
      %961 = vmatpush1.msra.mxu0 0.0
      %962 = vmatprep.subr.mxu0 0.0
      %963 = vmatpush1.msra.mxu0 0.0
      %964 = vmatprep.subr.mxu0 0.0
      %965 = vmatpush1.msra.mxu0 0.0
      %966 = vmatprep.subr.mxu0 0.0
      %967 = vmatpush1.msra.mxu0 0.0
      %968 = vmatprep.subr.mxu0 0.0
      %969 = vmatpush1.msra.mxu0 0.0
      %970 = vmatprep.subr.mxu0 0.0
      %971 = vmatpush1.msra.mxu0 0.0
      %972 = vmatprep.subr.mxu0 0.0
      %973 = vmatpush1.msra.mxu0 0.0
      %974 = vmatprep.subr.mxu0 0.0
      %975 = vmatpush1.msra.mxu0 0.0
      %976 = vmatprep.subr.mxu0 0.0
      %977 = vmatpush1.msra.mxu0 0.0
      %978 = vmatprep.subr.mxu0 0.0
      %979 = vmatpush1.msra.mxu0 0.0
      %980 = vmatprep.subr.mxu0 0.0
      %981 = vmatpush1.msra.mxu0 0.0
      %982 = vmatprep.subr.mxu0 0.0
      %983 = vmatpush1.msra.mxu0 0.0
      %984 = vmatprep.subr.mxu0 0.0
      %985 = vmatpush1.msra.mxu0 0.0
      %986 = vmatprep.subr.mxu0 0.0
      %987 = vmatpush1.msra.mxu0 %v945
      %988 = vmatprep.subr.mxu0 0.0
      %989 = vmatpush1.msra.mxu0 %v944
      %990 = vmatprep.subr.mxu0 0.0
      %991 = vmatpush2.msra.mxu0 0.0
      %992 = vmatprep.subr.mxu0 0.0
      %993 = vmatpush2.msra.mxu0 0.0
      %994 = vmatprep.subr.mxu0 0.0
      %995 = vmatpush2.msra.mxu0 0.0
      %996 = vmatprep.subr.mxu0 0.0
      %997 = vmatpush2.msra.mxu0 0.0
      %998 = vmatprep.subr.mxu0 0.0
      %999 = vmatpush2.msra.mxu0 0.0
      %1000 = vmatprep.subr.mxu0 0.0
      %1001 = vmatpush2.msra.mxu0 0.0
      %1002 = vmatprep.subr.mxu0 0.0
      %1003 = vmatpush2.msra.mxu0 0.0
      %1004 = vmatprep.subr.mxu0 0.0
      %1005 = vmatpush2.msra.mxu0 0.0
      %1006 = vmatprep.subr.mxu0 0.0
      %1007 = vmatpush2.msra.mxu0 0.0
      %1008 = vmatprep.subr.mxu0 0.0
      %1009 = vmatpush2.msra.mxu0 0.0
      %1010 = vmatprep.subr.mxu0 0.0
      %1011 = vmatpush2.msra.mxu0 0.0
      %1012 = vmatprep.subr.mxu0 0.0
      %1013 = vmatpush2.msra.mxu0 0.0
      %1014 = vmatprep.subr.mxu0 0.0
      %1015 = vmatpush2.msra.mxu0 0.0
      %1016 = vmatprep.subr.mxu0 0.0
      %1017 = vmatpush2.msra.mxu0 0.0
      %1018 = vmatprep.subr.mxu0 0.0
      %1019 = vmatpush2.msra.mxu0 0.0
      %1020 = vmatprep.subr.mxu0 0.0
      %1021 = vmatpush2.msra.mxu0 0.0
      %1022 = vmatprep.mubr.f32.mxu0 0.0
      %1023 = vmatmul.mubr.f32.gmra.mxu0 %v953
      %v1024 = vpop.f32.mrf.mxu0
      %v1025 = vadd.f32 0.0, %v1024
      %v1026 = vpop.f32.mrf.mxu0
      %1027 = vmatprep.mubr.f32.mxu0 0.0
      %1028 = vmatmul.mubr.f32.gmra.mxu0 %v956
      %v1029 = vpop.f32.mrf.mxu0
      %v1030 = vadd.f32 0.0, %v1029
      %v1031 = vpop.f32.mrf.mxu0
      %1032 = vdwg.mxu0
      %v1034 = vsel %vm710, %v820, 0
      %v1037 = vsel %vm710, %v822, 0
      %1039 = vmatprep.subr.mxu0 0.0
      %1040 = vmatpush1.msra.mxu0 0.0
      %1041 = vmatprep.subr.mxu0 0.0
      %1042 = vmatpush1.msra.mxu0 0.0
      %1043 = vmatprep.subr.mxu0 0.0
      %1044 = vmatpush1.msra.mxu0 0.0
      %1045 = vmatprep.subr.mxu0 0.0
      %1046 = vmatpush1.msra.mxu0 0.0
      %1047 = vmatprep.subr.mxu0 0.0
      %1048 = vmatpush1.msra.mxu0 0.0
      %1049 = vmatprep.subr.mxu0 0.0
      %1050 = vmatpush1.msra.mxu0 0.0
      %1051 = vmatprep.subr.mxu0 0.0
      %1052 = vmatpush1.msra.mxu0 0.0
      %1053 = vmatprep.subr.mxu0 0.0
      %1054 = vmatpush1.msra.mxu0 0.0
      %1055 = vmatprep.subr.mxu0 0.0
      %1056 = vmatpush1.msra.mxu0 0.0
      %1057 = vmatprep.subr.mxu0 0.0
      %1058 = vmatpush1.msra.mxu0 0.0
      %1059 = vmatprep.subr.mxu0 0.0
      %1060 = vmatpush1.msra.mxu0 0.0
      %1061 = vmatprep.subr.mxu0 0.0
      %1062 = vmatpush1.msra.mxu0 0.0
      %1063 = vmatprep.subr.mxu0 0.0
      %1064 = vmatpush1.msra.mxu0 0.0
      %1065 = vmatprep.subr.mxu0 0.0
      %1066 = vmatpush1.msra.mxu0 0.0
      %1067 = vmatprep.subr.mxu0 0.0
      %1068 = vmatpush1.msra.mxu0 %v947
      %1069 = vmatprep.subr.mxu0 0.0
      %1070 = vmatpush1.msra.mxu0 %v946
      %1071 = vmatprep.subr.mxu0 0.0
      %1072 = vmatpush2.msra.mxu0 0.0
      %1073 = vmatprep.subr.mxu0 0.0
      %1074 = vmatpush2.msra.mxu0 0.0
      %1075 = vmatprep.subr.mxu0 0.0
      %1076 = vmatpush2.msra.mxu0 0.0
      %1077 = vmatprep.subr.mxu0 0.0
      %1078 = vmatpush2.msra.mxu0 0.0
      %1079 = vmatprep.subr.mxu0 0.0
      %1080 = vmatpush2.msra.mxu0 0.0
      %1081 = vmatprep.subr.mxu0 0.0
      %1082 = vmatpush2.msra.mxu0 0.0
      %1083 = vmatprep.subr.mxu0 0.0
      %1084 = vmatpush2.msra.mxu0 0.0
      %1085 = vmatprep.subr.mxu0 0.0
      %1086 = vmatpush2.msra.mxu0 0.0
      %1087 = vmatprep.subr.mxu0 0.0
      %1088 = vmatpush2.msra.mxu0 0.0
      %1089 = vmatprep.subr.mxu0 0.0
      %1090 = vmatpush2.msra.mxu0 0.0
      %1091 = vmatprep.subr.mxu0 0.0
      %1092 = vmatpush2.msra.mxu0 0.0
      %1093 = vmatprep.subr.mxu0 0.0
      %1094 = vmatpush2.msra.mxu0 0.0
      %1095 = vmatprep.subr.mxu0 0.0
      %1096 = vmatpush2.msra.mxu0 0.0
      %1097 = vmatprep.subr.mxu0 0.0
      %1098 = vmatpush2.msra.mxu0 0.0
      %1099 = vmatprep.subr.mxu0 0.0
      %1100 = vmatpush2.msra.mxu0 0.0
      %1101 = vmatprep.subr.mxu0 0.0
      %1102 = vmatpush2.msra.mxu0 0.0
      %1103 = vmatprep.mubr.f32.mxu0 0.0
      %1104 = vmatmul.mubr.f32.gmra.mxu0 %v1034
      %v1105 = vpop.f32.mrf.mxu0
      %v1106 = vadd.f32 0.0, %v1105
      %v1107 = vpop.f32.mrf.mxu0
      %1108 = vmatprep.mubr.f32.mxu0 0.0
      %1109 = vmatmul.mubr.f32.gmra.mxu0 %v1037
      %v1110 = vpop.f32.mrf.mxu0
      %v1111 = vadd.f32 0.0, %v1110
      %v1112 = vpop.f32.mrf.mxu0
      %1113 = vdwg.mxu0
      %v1115 = vsel %vm710, %v824, 0
      %v1118 = vsel %vm710, %v826, 0
      %1120 = vmatprep.subr.mxu0 0.0
      %1121 = vmatpush1.msra.mxu0 0.0
      %1122 = vmatprep.subr.mxu0 0.0
      %1123 = vmatpush1.msra.mxu0 0.0
      %1124 = vmatprep.subr.mxu0 0.0
      %1125 = vmatpush1.msra.mxu0 0.0
      %1126 = vmatprep.subr.mxu0 0.0
      %1127 = vmatpush1.msra.mxu0 0.0
      %1128 = vmatprep.subr.mxu0 0.0
      %1129 = vmatpush1.msra.mxu0 0.0
      %1130 = vmatprep.subr.mxu0 0.0
      %1131 = vmatpush1.msra.mxu0 0.0
      %1132 = vmatprep.subr.mxu0 0.0
      %1133 = vmatpush1.msra.mxu0 0.0
      %1134 = vmatprep.subr.mxu0 0.0
      %1135 = vmatpush1.msra.mxu0 0.0
      %1136 = vmatprep.subr.mxu0 0.0
      %1137 = vmatpush1.msra.mxu0 0.0
      %1138 = vmatprep.subr.mxu0 0.0
      %1139 = vmatpush1.msra.mxu0 0.0
      %1140 = vmatprep.subr.mxu0 0.0
      %1141 = vmatpush1.msra.mxu0 0.0
      %1142 = vmatprep.subr.mxu0 0.0
      %1143 = vmatpush1.msra.mxu0 0.0
      %1144 = vmatprep.subr.mxu0 0.0
      %1145 = vmatpush1.msra.mxu0 0.0
      %1146 = vmatprep.subr.mxu0 0.0
      %1147 = vmatpush1.msra.mxu0 0.0
      %1148 = vmatprep.subr.mxu0 0.0
      %1149 = vmatpush1.msra.mxu0 %v949
      %1150 = vmatprep.subr.mxu0 0.0
      %1151 = vmatpush1.msra.mxu0 %v948
      %1152 = vmatprep.subr.mxu0 0.0
      %1153 = vmatpush2.msra.mxu0 0.0
      %1154 = vmatprep.subr.mxu0 0.0
      %1155 = vmatpush2.msra.mxu0 0.0
      %1156 = vmatprep.subr.mxu0 0.0
      %1157 = vmatpush2.msra.mxu0 0.0
      %1158 = vmatprep.subr.mxu0 0.0
      %1159 = vmatpush2.msra.mxu0 0.0
      %1160 = vmatprep.subr.mxu0 0.0
      %1161 = vmatpush2.msra.mxu0 0.0
      %1162 = vmatprep.subr.mxu0 0.0
      %1163 = vmatpush2.msra.mxu0 0.0
      %1164 = vmatprep.subr.mxu0 0.0
      %1165 = vmatpush2.msra.mxu0 0.0
      %1166 = vmatprep.subr.mxu0 0.0
      %1167 = vmatpush2.msra.mxu0 0.0
      %1168 = vmatprep.subr.mxu0 0.0
      %1169 = vmatpush2.msra.mxu0 0.0
      %1170 = vmatprep.subr.mxu0 0.0
      %1171 = vmatpush2.msra.mxu0 0.0
      %1172 = vmatprep.subr.mxu0 0.0
      %1173 = vmatpush2.msra.mxu0 0.0
      %1174 = vmatprep.subr.mxu0 0.0
      %1175 = vmatpush2.msra.mxu0 0.0
      %1176 = vmatprep.subr.mxu0 0.0
      %1177 = vmatpush2.msra.mxu0 0.0
      %1178 = vmatprep.subr.mxu0 0.0
      %1179 = vmatpush2.msra.mxu0 0.0
      %1180 = vmatprep.subr.mxu0 0.0
      %1181 = vmatpush2.msra.mxu0 0.0
      %1182 = vmatprep.subr.mxu0 0.0
      %1183 = vmatpush2.msra.mxu0 0.0
      %1184 = vmatprep.mubr.f32.mxu0 0.0
      %1185 = vmatmul.mubr.f32.gmra.mxu0 %v1115
      %v1186 = vpop.f32.mrf.mxu0
      %v1187 = vadd.f32 0.0, %v1186
      %v1188 = vpop.f32.mrf.mxu0
      %1189 = vmatprep.mubr.f32.mxu0 0.0
      %1190 = vmatmul.mubr.f32.gmra.mxu0 %v1118
      %v1191 = vpop.f32.mrf.mxu0
      %v1192 = vadd.f32 0.0, %v1191
      %v1193 = vpop.f32.mrf.mxu0
      %1194 = vdwg.mxu0
      %v1196 = vsel %vm710, %v828, 0
      %v1199 = vsel %vm710, %v830, 0
      %1201 = vmatprep.subr.mxu0 0.0
      %1202 = vmatpush1.msra.mxu0 0.0
      %1203 = vmatprep.subr.mxu0 0.0
      %1204 = vmatpush1.msra.mxu0 0.0
      %1205 = vmatprep.subr.mxu0 0.0
      %1206 = vmatpush1.msra.mxu0 0.0
      %1207 = vmatprep.subr.mxu0 0.0
      %1208 = vmatpush1.msra.mxu0 0.0
      %1209 = vmatprep.subr.mxu0 0.0
      %1210 = vmatpush1.msra.mxu0 0.0
      %1211 = vmatprep.subr.mxu0 0.0
      %1212 = vmatpush1.msra.mxu0 0.0
      %1213 = vmatprep.subr.mxu0 0.0
      %1214 = vmatpush1.msra.mxu0 0.0
      %1215 = vmatprep.subr.mxu0 0.0
      %1216 = vmatpush1.msra.mxu0 0.0
      %1217 = vmatprep.subr.mxu0 0.0
      %1218 = vmatpush1.msra.mxu0 0.0
      %1219 = vmatprep.subr.mxu0 0.0
      %1220 = vmatpush1.msra.mxu0 0.0
      %1221 = vmatprep.subr.mxu0 0.0
      %1222 = vmatpush1.msra.mxu0 0.0
      %1223 = vmatprep.subr.mxu0 0.0
      %1224 = vmatpush1.msra.mxu0 0.0
      %1225 = vmatprep.subr.mxu0 0.0
      %1226 = vmatpush1.msra.mxu0 0.0
      %1227 = vmatprep.subr.mxu0 0.0
      %1228 = vmatpush1.msra.mxu0 0.0
      %1229 = vmatprep.subr.mxu0 0.0
      %1230 = vmatpush1.msra.mxu0 %v951
      %1231 = vmatprep.subr.mxu0 0.0
      %1232 = vmatpush1.msra.mxu0 %v950
      %1233 = vmatprep.subr.mxu0 0.0
      %1234 = vmatpush2.msra.mxu0 0.0
      %1235 = vmatprep.subr.mxu0 0.0
      %1236 = vmatpush2.msra.mxu0 0.0
      %1237 = vmatprep.subr.mxu0 0.0
      %1238 = vmatpush2.msra.mxu0 0.0
      %1239 = vmatprep.subr.mxu0 0.0
      %1240 = vmatpush2.msra.mxu0 0.0
      %1241 = vmatprep.subr.mxu0 0.0
      %1242 = vmatpush2.msra.mxu0 0.0
      %1243 = vmatprep.subr.mxu0 0.0
      %1244 = vmatpush2.msra.mxu0 0.0
      %1245 = vmatprep.subr.mxu0 0.0
      %1246 = vmatpush2.msra.mxu0 0.0
      %1247 = vmatprep.subr.mxu0 0.0
      %1248 = vmatpush2.msra.mxu0 0.0
      %1249 = vmatprep.subr.mxu0 0.0
      %1250 = vmatpush2.msra.mxu0 0.0
      %1251 = vmatprep.subr.mxu0 0.0
      %1252 = vmatpush2.msra.mxu0 0.0
      %1253 = vmatprep.subr.mxu0 0.0
      %1254 = vmatpush2.msra.mxu0 0.0
      %1255 = vmatprep.subr.mxu0 0.0
      %1256 = vmatpush2.msra.mxu0 0.0
      %1257 = vmatprep.subr.mxu0 0.0
      %1258 = vmatpush2.msra.mxu0 0.0
      %1259 = vmatprep.subr.mxu0 0.0
      %1260 = vmatpush2.msra.mxu0 0.0
      %1261 = vmatprep.subr.mxu0 0.0
      %1262 = vmatpush2.msra.mxu0 0.0
      %1263 = vmatprep.subr.mxu0 0.0
      %1264 = vmatpush2.msra.mxu0 0.0
      %1265 = vmatprep.mubr.f32.mxu0 0.0
      %1266 = vmatmul.mubr.f32.gmra.mxu0 %v1196
      %v1267 = vpop.f32.mrf.mxu0
      %v1268 = vadd.f32 0.0, %v1267
      %v1269 = vpop.f32.mrf.mxu0
      %1270 = vmatprep.mubr.f32.mxu0 0.0
      %1271 = vmatmul.mubr.f32.gmra.mxu0 %v1199
      %v1272 = vpop.f32.mrf.mxu0
      %v1273 = vadd.f32 0.0, %v1272
      %v1274 = vpop.f32.mrf.mxu0
      %1275 = vdwg.mxu0
      %v1276 = vadd.f32 %v936, %v1025
      %v1277 = vadd.f32 %v937, %v1030
      %v1278 = vadd.f32 %v938, %v1106
      %v1279 = vadd.f32 %v939, %v1111
      %v1280 = vadd.f32 %v940, %v1187
      %v1281 = vadd.f32 %v941, %v1192
      %v1282 = vadd.f32 %v942, %v1268
      %v1283 = vadd.f32 %v943, %v1273
      %1284 = vst.msk [vmem:[#allocation4] sm:$0xff] %vm353, %v1276
      %1285 = vst.msk [vmem:[#allocation4 + $0x8] sm:$0xff] %vm353, %v1277
      %1286 = vst.msk [vmem:[#allocation4 + $0x10] sm:$0xff] %vm353, %v1278
      %1287 = vst.msk [vmem:[#allocation4 + $0x18] sm:$0xff] %vm353, %v1279
      %1288 = vst.msk [vmem:[#allocation4 + $0x20] sm:$0xff] %vm353, %v1280
      %1289 = vst.msk [vmem:[#allocation4 + $0x28] sm:$0xff] %vm353, %v1281
      %1290 = vst.msk [vmem:[#allocation4 + $0x30] sm:$0xff] %vm353, %v1282
      %1291 = vst.msk [vmem:[#allocation4 + $0x38] sm:$0xff] %vm353, %v1283
      %1292 = vst.msk [vmem:[#allocation2] sm:$0xff] %vm879, %v735
      %1293 = vst.msk [vmem:[#allocation2 + $0x8] sm:$0xff] %vm879, %v736
      %1294 = vst.msk [vmem:[#allocation2 + $0x10] sm:$0xff] %vm879, %v737
      %1295 = vst.msk [vmem:[#allocation2 + $0x18] sm:$0xff] %vm879, %v738
      %1296 = vst.msk [vmem:[#allocation2 + $0x20] sm:$0xff] %vm879, %v739
      %1297 = vst.msk [vmem:[#allocation2 + $0x28] sm:$0xff] %vm879, %v740
      %1298 = vst.msk [vmem:[#allocation2 + $0x30] sm:$0xff] %vm879, %v741
      %1299 = vst.msk [vmem:[#allocation2 + $0x38] sm:$0xff] %vm879, %v742
      // Predicated region
      $region37: #{vit_forward.11} parent=31 // pred_check
        %p1300 = pneg %p307
      $region38: #{vit_forward.11} parent=31 // pred_check_branch
        %1302 = sbr.rel (%p1300) target = $region40
      $region39: #{vit_forward.11} parent=31 // pred_region
        %v1303 = vld [vmem:[#allocation3] sm:$0xff]
        %v1304 = vld [vmem:[#allocation3 + $0x8] sm:$0xff]
        %v1305 = vld [vmem:[#allocation3 + $0x10] sm:$0xff]
        %v1306 = vld [vmem:[#allocation3 + $0x18] sm:$0xff]
        %v1307 = vld [vmem:[#allocation3 + $0x20] sm:$0xff]
        %v1308 = vld [vmem:[#allocation3 + $0x28] sm:$0xff]
        %v1309 = vld [vmem:[#allocation3 + $0x30] sm:$0xff]
        %v1310 = vld [vmem:[#allocation3 + $0x38] sm:$0xff]
        %v1311 = vrcp.pop %v1303
        %v1312 = vrcp.pop %v1304
        %v1313 = vrcp.pop %v1305
        %v1314 = vrcp.pop %v1306
        %v1315 = vrcp.pop %v1307
        %v1316 = vrcp.pop %v1308
        %v1317 = vrcp.pop %v1309
        %v1318 = vrcp.pop %v1310
        %v1319 = vld [vmem:[#allocation4] sm:$0xff]
        %v1320 = vld [vmem:[#allocation4 + $0x8] sm:$0xff]
        %v1321 = vld [vmem:[#allocation4 + $0x10] sm:$0xff]
        %v1322 = vld [vmem:[#allocation4 + $0x18] sm:$0xff]
        %v1323 = vld [vmem:[#allocation4 + $0x20] sm:$0xff]
        %v1324 = vld [vmem:[#allocation4 + $0x28] sm:$0xff]
        %v1325 = vld [vmem:[#allocation4 + $0x30] sm:$0xff]
        %v1326 = vld [vmem:[#allocation4 + $0x38] sm:$0xff]
        %1328 = vset.pattern.permute.xlu0 0
        %1329 = vperm.xlu0 %1328, %v1311
        %v1330 = vpop.permute.xlu0 %1329
        %1333 = vset.pattern.permute.xlu0 0
        %1334 = vperm.xlu0 %1333, %v1312
        %v1335 = vpop.permute.xlu0 %1334
        %1338 = vset.pattern.permute.xlu0 0
        %1339 = vperm.xlu0 %1338, %v1313
        %v1340 = vpop.permute.xlu0 %1339
        %1343 = vset.pattern.permute.xlu0 0
        %1344 = vperm.xlu0 %1343, %v1314
        %v1345 = vpop.permute.xlu0 %1344
        %1348 = vset.pattern.permute.xlu0 0
        %1349 = vperm.xlu0 %1348, %v1315
        %v1350 = vpop.permute.xlu0 %1349
        %1353 = vset.pattern.permute.xlu0 0
        %1354 = vperm.xlu0 %1353, %v1316
        %v1355 = vpop.permute.xlu0 %1354
        %1358 = vset.pattern.permute.xlu0 0
        %1359 = vperm.xlu0 %1358, %v1317
        %v1360 = vpop.permute.xlu0 %1359
        %1363 = vset.pattern.permute.xlu0 0
        %1364 = vperm.xlu0 %1363, %v1318
        %v1365 = vpop.permute.xlu0 %1364
        %v1367 = vmul.f32 %v1319, %v1330
        %v1368 = vmul.f32 %v1320, %v1335
        %v1369 = vmul.f32 %v1321, %v1340
        %v1370 = vmul.f32 %v1322, %v1345
        %v1371 = vmul.f32 %v1323, %v1350
        %v1372 = vmul.f32 %v1324, %v1355
        %v1373 = vmul.f32 %v1325, %v1360
        %v1374 = vmul.f32 %v1326, %v1365
        %1375 = vst.msk [vmem:[%s304] sm:$0xff] %vm353, %v1367
        %1376 = vst.msk [vmem:[%s304 + $0x8] sm:$0xff] %vm353, %v1368
        %1377 = vst.msk [vmem:[%s304 + $0x10] sm:$0xff] %vm353, %v1369
        %1378 = vst.msk [vmem:[%s304 + $0x18] sm:$0xff] %vm353, %v1370
        %1379 = vst.msk [vmem:[%s304 + $0x20] sm:$0xff] %vm353, %v1371
        %1380 = vst.msk [vmem:[%s304 + $0x28] sm:$0xff] %vm353, %v1372
        %1381 = vst.msk [vmem:[%s304 + $0x30] sm:$0xff] %vm353, %v1373
        %1382 = vst.msk [vmem:[%s304 + $0x38] sm:$0xff] %vm353, %v1374
      $region40: #{vit_forward.11} parent=31 // pred_fallthru
        _
      %s1383 = smul.u32 4, %s19
      %s1384 = smul.u32 2, %s20
      %p1385 = scmp.lt.s32.totalorder %s1383, 7
      %s1386 = scalar_select %p1385, %s1383, 7
      %p1387 = scmp.lt.s32.totalorder %s1384, 1
      %s1388 = scalar_select %p1387, %s1384, 1
      %s1389 = smul.addr %s1386, 2
      %s1390 = sadd.s32 %s1388, %s1389
      %s1391 = smul.addr %s1390, 8
      %s1392 = scalar_lea.vmem %s3, %s1391
      // Predicated region
      $region41: #{vit_forward.11} parent=31 // pred_check
        %p1393 = pneg %p137
      $region42: #{vit_forward.11} parent=31 // pred_check_branch
        %1395 = sbr.rel (%p1393) target = $region44
      $region43: #{vit_forward.11} parent=31 // pred_region
        %s1396 = smul.u32 4, %s19
        %s1397 = smul.u32 2, %s20
      $region44: #{vit_forward.11} parent=31 // pred_fallthru
        _
    $region32: #{vit_forward.11} parent=5 // pred_fallthru
      _
    %p1398 = scmp.le.s32.totalorder 2, %s9
    // Predicated region
    $region45: #{vit_forward.11} parent=5 // pred_check
      %p1399 = pneg %p1398
    $region46: #{vit_forward.11} parent=5 // pred_check_branch
      %1401 = sbr.rel (%p1399) target = $region48
    $region47: #{vit_forward.11} parent=5 // pred_region
      %s1402 = ssub.s32 %s9, 2
      // Predicated region
      $region49: #{vit_forward.11} parent=47 // pred_check
        %p1403 = pneg %p143
      $region50: #{vit_forward.11} parent=47 // pred_check_branch
        %1405 = sbr.rel (%p1403) target = $region52
      $region51: #{vit_forward.11} parent=47 // pred_region
        %s1406 = smul.u32 4, %s22
        %s1407 = smul.u32 2, %s23
        %p1408 = scmp.lt.s32.totalorder %s1406, 7
        %s1409 = scalar_select %p1408, %s1406, 7
        %p1410 = scmp.lt.s32.totalorder %s1407, 1
        %s1411 = scalar_select %p1410, %s1407, 1
        %s1412 = smul.addr %s1409, 2
        %s1413 = sadd.s32 %s1411, %s1412
        %s1414 = smul.addr %s1413, 8
        %s1415 = scalar_lea.vmem %s3, %s1414
      $region52: #{vit_forward.11} parent=47 // pred_fallthru
        _
    $region48: #{vit_forward.11} parent=5 // pred_fallthru
      _
  $region6: #{vit_forward.11} parent=0 // loop_footer
    %s13 = sadd.s32 1, %s9
  $region7: #{vit_forward.11} parent=0 // loop_footer_branch
    %8 = sbr.rel target = $region3
  $region8: #{vit_forward.11} parent=0 // loop_exit
    _

// kernel: vit_forward.17
$region0: #{vit_forward.17}
  #allocation0 [shape = 'u32[]', space=smem, size = 0x4, offset = 0x4, fixed_abs, tag = 'smem constant byte address 0x4 - core index']
  #allocation1 [shape = 'u32[144,128]{1,0:T(1,128)}', space=vmem, size = 0x12000, scoped, tag = 'internal scratch']
  #allocation2 [shape = 'f32[32,32]{1,0:T(8,128)}', space=vmem, size = 0x4000, scoped, tag = 'scratch operand']
  #allocation3 [shape = 'f32[32,32]{1,0:T(8,128)}', space=vmem, size = 0x4000, scoped, tag = 'scratch operand']
  %s0 = inlined_call_operand.vmem [shape: f32[32,32], index: 0, kind: input, shape index: {}]
  %s1 = inlined_call_operand.vmem [shape: f32[1,32], index: 1, kind: input, shape index: {}]
  %s2 = inlined_call_operand.vmem [shape: f32[1,32], index: 2, kind: input, shape index: {}]
  %s3 = inlined_call_operand.vmem [shape: f32[32,85], index: 3, kind: input, shape index: {}]
  %s4 = inlined_call_operand.vmem [shape: f32[1,85], index: 4, kind: input, shape index: {}]
  %s5 = inlined_call_operand.vmem [shape: f32[32,85], index: 5, kind: input, shape index: {}]
  %s6 = inlined_call_operand.vmem [shape: f32[1,85], index: 6, kind: input, shape index: {}]
  %s7 = inlined_call_operand.vmem [shape: f32[85,32], index: 7, kind: input, shape index: {}]
  %s8 = inlined_call_operand.vmem [shape: f32[1,32], index: 8, kind: input, shape index: {}]
  %s9 = inlined_call_operand.hbm [shape: f32[32,32], index: 9, kind: output, shape index: {}]
  %s10 = sld [smem:[#allocation0]]
  $region54: #{vit_forward.17} parent=0
    _
  %s12 = ssub.s32 1, %s10
  %s13 = scalar_select 0, %s12, %s10
  $region1: #{vit_forward.17} parent=0
    #allocation4 [shape = 'u8[16384]{0}', space=vmem, size = 0x4000, scoped, tag = 'output window, operand 0, single buffered']
    #allocation5 [shape = 's32[1]{0}', space=sflag, size = 0x4, scoped, tag = 'scoped memory for vit_forward.17']
    %14 = vsyncpa [#allocation5], 0
    // Predicated region
    $region2: #{vit_forward.17} parent=1 // pred_check
      _
    $region3: #{vit_forward.17} parent=1 // pred_check_branch
      %16 = sbr.rel (0) target = $region5
    $region4: #{vit_forward.17} parent=1 // pred_region
      _
    $region5: #{vit_forward.17} parent=1 // pred_fallthru
      _
    // Predicated region
    $region6: #{vit_forward.17} parent=1 // pred_check
      _
    $region7: #{vit_forward.17} parent=1 // pred_check_branch
      %18 = sbr.rel (0) target = $region9
    $region8: #{vit_forward.17} parent=1 // pred_region
      _
    $region9: #{vit_forward.17} parent=1 // pred_fallthru
      _
    // Predicated region
    $region10: #{vit_forward.17} parent=1 // pred_check
      _
    $region11: #{vit_forward.17} parent=1 // pred_check_branch
      %20 = sbr.rel (0) target = $region13
    $region12: #{vit_forward.17} parent=1 // pred_region
      _
    $region13: #{vit_forward.17} parent=1 // pred_fallthru
      _
    // Predicated region
    $region14: #{vit_forward.17} parent=1 // pred_check
      _
    $region15: #{vit_forward.17} parent=1 // pred_check_branch
      %22 = sbr.rel (0) target = $region17
    $region16: #{vit_forward.17} parent=1 // pred_region
      _
    $region17: #{vit_forward.17} parent=1 // pred_fallthru
      _
    // Predicated region
    $region18: #{vit_forward.17} parent=1 // pred_check
      _
    $region19: #{vit_forward.17} parent=1 // pred_check_branch
      %24 = sbr.rel (0) target = $region21
    $region20: #{vit_forward.17} parent=1 // pred_region
      _
    $region21: #{vit_forward.17} parent=1 // pred_fallthru
      _
    // Predicated region
    $region22: #{vit_forward.17} parent=1 // pred_check
      _
    $region23: #{vit_forward.17} parent=1 // pred_check_branch
      %26 = sbr.rel (0) target = $region25
    $region24: #{vit_forward.17} parent=1 // pred_region
      _
    $region25: #{vit_forward.17} parent=1 // pred_fallthru
      _
    // Predicated region
    $region26: #{vit_forward.17} parent=1 // pred_check
      _
    $region27: #{vit_forward.17} parent=1 // pred_check_branch
      %28 = sbr.rel (0) target = $region29
    $region28: #{vit_forward.17} parent=1 // pred_region
      _
    $region29: #{vit_forward.17} parent=1 // pred_fallthru
      _
    // Predicated region
    $region30: #{vit_forward.17} parent=1 // pred_check
      _
    $region31: #{vit_forward.17} parent=1 // pred_check_branch
      %30 = sbr.rel (0) target = $region33
    $region32: #{vit_forward.17} parent=1 // pred_region
      _
    $region33: #{vit_forward.17} parent=1 // pred_fallthru
      _
    // Predicated region
    $region34: #{vit_forward.17} parent=1 // pred_check
      _
    $region35: #{vit_forward.17} parent=1 // pred_check_branch
      %32 = sbr.rel (0) target = $region37
    $region36: #{vit_forward.17} parent=1 // pred_region
      _
    $region37: #{vit_forward.17} parent=1 // pred_fallthru
      _
    %p33 = scmp.eq.s32.totalorder 0, 0
    // Predicated region
    $region38: #{vit_forward.17} parent=1 // pred_check
      %p34 = pneg %p33
    $region39: #{vit_forward.17} parent=1 // pred_check_branch
      %36 = sbr.rel (%p34) target = $region41
    $region40: #{vit_forward.17} parent=1 // pred_region
      %vm37 = vcmask 261120
      %38 = vst.msk [vmem:[#allocation2] sm:$0xff] %vm37, 0.0
      %39 = vst.msk [vmem:[#allocation2 + $0x8] sm:$0xff] %vm37, 0.0
      %40 = vst.msk [vmem:[#allocation2 + $0x10] sm:$0xff] %vm37, 0.0
      %41 = vst.msk [vmem:[#allocation2 + $0x18] sm:$0xff] %vm37, 0.0
      %v42 = vld [vmem:[%s0] sm:$0xff]
      %v43 = vld [vmem:[%s0 + $0x8] sm:$0xff]
      %v44 = vld [vmem:[%s0 + $0x10] sm:$0xff]
      %v45 = vld [vmem:[%s0 + $0x18] sm:$0xff]
      %v46 = vsel %vm37, %v42, 0.0
      %47 = vadd.xlane.f32.xlu0 %v46
      %v48 = vpop.xlane.xlu0 %47
      %v49 = vsel %vm37, %v43, 0.0
      %50 = vadd.xlane.f32.xlu0 %v49
      %v51 = vpop.xlane.xlu0 %50
      %v52 = vsel %vm37, %v44, 0.0
      %53 = vadd.xlane.f32.xlu0 %v52
      %v54 = vpop.xlane.xlu0 %53
      %v55 = vsel %vm37, %v45, 0.0
      %56 = vadd.xlane.f32.xlu0 %v55
      %v57 = vpop.xlane.xlu0 %56
      %v58 = vrcp.pop 32.0
      %v59 = vmul.f32 %v48, %v58
      %v60 = vmul.f32 %v51, %v58
      %v61 = vmul.f32 %v54, %v58
      %v62 = vmul.f32 %v57, %v58
      %v63 = vsub.f32 %v42, %v59
      %v64 = vsub.f32 %v43, %v60
      %v65 = vsub.f32 %v44, %v61
      %v66 = vsub.f32 %v45, %v62
      %v67 = vmul.f32 %v63, %v63
      %v68 = vmul.f32 %v64, %v64
      %v69 = vmul.f32 %v65, %v65
      %v70 = vmul.f32 %v66, %v66
      %v71 = vsel %vm37, %v67, 0.0
      %72 = vadd.xlane.f32.xlu0 %v71
      %v73 = vpop.xlane.xlu0 %72
      %v74 = vsel %vm37, %v68, 0.0
      %75 = vadd.xlane.f32.xlu0 %v74
      %v76 = vpop.xlane.xlu0 %75
      %v77 = vsel %vm37, %v69, 0.0
      %78 = vadd.xlane.f32.xlu0 %v77
      %v79 = vpop.xlane.xlu0 %78
      %v80 = vsel %vm37, %v70, 0.0
      %81 = vadd.xlane.f32.xlu0 %v80
      %v82 = vpop.xlane.xlu0 %81
      %v83 = vmul.f32 %v73, %v58
      %v84 = vmul.f32 %v76, %v58
      %v85 = vmul.f32 %v79, %v58
      %v86 = vmul.f32 %v82, %v58
      %v87 = vadd.f32 %v83, 1e-06
      %v88 = vadd.f32 %v84, 1e-06
      %v89 = vadd.f32 %v85, 1e-06
      %v90 = vadd.f32 %v86, 1e-06
      %v91 = vrsqrt.pop %v87
      %v92 = vrsqrt.pop %v88
      %v93 = vrsqrt.pop %v89
      %v94 = vrsqrt.pop %v90
      %v95 = vmul.f32 %v63, %v91
      %v96 = vmul.f32 %v64, %v92
      %v97 = vmul.f32 %v65, %v93
      %v98 = vmul.f32 %v66, %v94
      %v99 = vld [vmem:[%s1] sm:$0x1]
      %v101 = vlaneseq
      %v102 = vshrl.u32 %v101, 7
      %v103 = vsub.s32 0, %v102
      %v104 = vrot.slane %v99, %v103
      %v106 = vmul.f32 %v95, %v104
      %v107 = vmul.f32 %v96, %v104
      %v108 = vmul.f32 %v97, %v104
      %v109 = vmul.f32 %v98, %v104
      %v110 = vld [vmem:[%s2] sm:$0x1]
      %v112 = vlaneseq
      %v113 = vshrl.u32 %v112, 7
      %v114 = vsub.s32 0, %v113
      %v115 = vrot.slane %v110, %v114
      %v117 = vadd.f32 %v106, %v115
      %v118 = vadd.f32 %v107, %v115
      %v119 = vadd.f32 %v108, %v115
      %v120 = vadd.f32 %v109, %v115
      %121 = vst.msk [vmem:[#allocation3] sm:$0xff] %vm37, %v117
      %122 = vst.msk [vmem:[#allocation3 + $0x8] sm:$0xff] %vm37, %v118
      %123 = vst.msk [vmem:[#allocation3 + $0x10] sm:$0xff] %vm37, %v119
      %124 = vst.msk [vmem:[#allocation3 + $0x18] sm:$0xff] %vm37, %v120
    $region41: #{vit_forward.17} parent=1 // pred_fallthru
      _
    %v125 = vld [vmem:[#allocation3] sm:$0xff]
    %v126 = vld [vmem:[#allocation3 + $0x8] sm:$0xff]
    %v127 = vld [vmem:[#allocation3 + $0x10] sm:$0xff]
    %v128 = vld [vmem:[#allocation3 + $0x18] sm:$0xff]
    %v129 = vld [vmem:[%s3] sm:$0xff]
    %v130 = vld [vmem:[%s3 + $0x8] sm:$0xff]
    %v131 = vld [vmem:[%s3 + $0x10] sm:$0xff]
    %v132 = vld [vmem:[%s3 + $0x18] sm:$0xff]
    %v133 = vld [vmem:[%s4] sm:$0x1]
    %v135 = vlaneseq
    %v136 = vshrl.u32 %v135, 7
    %v137 = vsub.s32 0, %v136
    %v138 = vrot.slane %v133, %v137
    %vm140 = vcmask 261120
    %v142 = vsel %vm140, %v125, 0
    %v145 = vsel %vm140, %v126, 0
    %v148 = vsel %vm140, %v127, 0
    %v151 = vsel %vm140, %v128, 0
    %153 = vmatprep.subr.mxu0 0.0
    %154 = vmatpush1.msra.mxu0 0.0
    %155 = vmatprep.subr.mxu0 0.0
    %156 = vmatpush1.msra.mxu0 0.0
    %157 = vmatprep.subr.mxu0 0.0
    %158 = vmatpush1.msra.mxu0 0.0
    %159 = vmatprep.subr.mxu0 0.0
    %160 = vmatpush1.msra.mxu0 0.0
    %161 = vmatprep.subr.mxu0 0.0
    %162 = vmatpush1.msra.mxu0 0.0
    %163 = vmatprep.subr.mxu0 0.0
    %164 = vmatpush1.msra.mxu0 0.0
    %165 = vmatprep.subr.mxu0 0.0
    %166 = vmatpush1.msra.mxu0 0.0
    %167 = vmatprep.subr.mxu0 0.0
    %168 = vmatpush1.msra.mxu0 0.0
    %169 = vmatprep.subr.mxu0 0.0
    %170 = vmatpush1.msra.mxu0 0.0
    %171 = vmatprep.subr.mxu0 0.0
    %172 = vmatpush1.msra.mxu0 0.0
    %173 = vmatprep.subr.mxu0 0.0
    %174 = vmatpush1.msra.mxu0 0.0
    %175 = vmatprep.subr.mxu0 0.0
    %176 = vmatpush1.msra.mxu0 0.0
    %177 = vmatprep.subr.mxu0 0.0
    %178 = vmatpush1.msra.mxu0 %v132
    %179 = vmatprep.subr.mxu0 0.0
    %180 = vmatpush1.msra.mxu0 %v131
    %181 = vmatprep.subr.mxu0 0.0
    %182 = vmatpush1.msra.mxu0 %v130
    %183 = vmatprep.subr.mxu0 0.0
    %184 = vmatpush1.msra.mxu0 %v129
    %185 = vmatprep.subr.mxu0 0.0
    %186 = vmatpush2.msra.mxu0 0.0
    %187 = vmatprep.subr.mxu0 0.0
    %188 = vmatpush2.msra.mxu0 0.0
    %189 = vmatprep.subr.mxu0 0.0
    %190 = vmatpush2.msra.mxu0 0.0
    %191 = vmatprep.subr.mxu0 0.0
    %192 = vmatpush2.msra.mxu0 0.0
    %193 = vmatprep.subr.mxu0 0.0
    %194 = vmatpush2.msra.mxu0 0.0
    %195 = vmatprep.subr.mxu0 0.0
    %196 = vmatpush2.msra.mxu0 0.0
    %197 = vmatprep.subr.mxu0 0.0
    %198 = vmatpush2.msra.mxu0 0.0
    %199 = vmatprep.subr.mxu0 0.0
    %200 = vmatpush2.msra.mxu0 0.0
    %201 = vmatprep.subr.mxu0 0.0
    %202 = vmatpush2.msra.mxu0 0.0
    %203 = vmatprep.subr.mxu0 0.0
    %204 = vmatpush2.msra.mxu0 0.0
    %205 = vmatprep.subr.mxu0 0.0
    %206 = vmatpush2.msra.mxu0 0.0
    %207 = vmatprep.subr.mxu0 0.0
    %208 = vmatpush2.msra.mxu0 0.0
    %209 = vmatprep.subr.mxu0 0.0
    %210 = vmatpush2.msra.mxu0 0.0
    %211 = vmatprep.subr.mxu0 0.0
    %212 = vmatpush2.msra.mxu0 0.0
    %213 = vmatprep.subr.mxu0 0.0
    %214 = vmatpush2.msra.mxu0 0.0
    %215 = vmatprep.subr.mxu0 0.0
    %216 = vmatpush2.msra.mxu0 0.0
    %217 = vmatprep.mubr.f32.mxu0 0.0
    %218 = vmatmul.mubr.f32.gmra.mxu0 %v142
    %v219 = vpop.f32.mrf.mxu0
    %v220 = vadd.f32 %v138, %v219
    %v221 = vpop.f32.mrf.mxu0
    %222 = vmatprep.mubr.f32.mxu0 0.0
    %223 = vmatmul.mubr.f32.gmra.mxu0 %v145
    %v224 = vpop.f32.mrf.mxu0
    %v225 = vadd.f32 %v138, %v224
    %v226 = vpop.f32.mrf.mxu0
    %227 = vmatprep.mubr.f32.mxu0 0.0
    %228 = vmatmul.mubr.f32.gmra.mxu0 %v148
    %v229 = vpop.f32.mrf.mxu0
    %v230 = vadd.f32 %v138, %v229
    %v231 = vpop.f32.mrf.mxu0
    %232 = vmatprep.mubr.f32.mxu0 0.0
    %233 = vmatmul.mubr.f32.gmra.mxu0 %v151
    %v234 = vpop.f32.mrf.mxu0
    %v235 = vadd.f32 %v138, %v234
    %v236 = vpop.f32.mrf.mxu0
    %237 = vdwg.mxu0
    %v238 = vld [vmem:[%s5] sm:$0xff]
    %v239 = vld [vmem:[%s5 + $0x8] sm:$0xff]
    %v240 = vld [vmem:[%s5 + $0x10] sm:$0xff]
    %v241 = vld [vmem:[%s5 + $0x18] sm:$0xff]
    %v242 = vld [vmem:[%s6] sm:$0x1]
    %v244 = vlaneseq
    %v245 = vshrl.u32 %v244, 7
    %v246 = vsub.s32 0, %v245
    %v247 = vrot.slane %v242, %v246
    %249 = vmatprep.subr.mxu0 0.0
    %250 = vmatpush1.msra.mxu0 0.0
    %251 = vmatprep.subr.mxu0 0.0
    %252 = vmatpush1.msra.mxu0 0.0
    %253 = vmatprep.subr.mxu0 0.0
    %254 = vmatpush1.msra.mxu0 0.0
    %255 = vmatprep.subr.mxu0 0.0
    %256 = vmatpush1.msra.mxu0 0.0
    %257 = vmatprep.subr.mxu0 0.0
    %258 = vmatpush1.msra.mxu0 0.0
    %259 = vmatprep.subr.mxu0 0.0
    %260 = vmatpush1.msra.mxu0 0.0
    %261 = vmatprep.subr.mxu0 0.0
    %262 = vmatpush1.msra.mxu0 0.0
    %263 = vmatprep.subr.mxu0 0.0
    %264 = vmatpush1.msra.mxu0 0.0
    %265 = vmatprep.subr.mxu0 0.0
    %266 = vmatpush1.msra.mxu0 0.0
    %267 = vmatprep.subr.mxu0 0.0
    %268 = vmatpush1.msra.mxu0 0.0
    %269 = vmatprep.subr.mxu0 0.0
    %270 = vmatpush1.msra.mxu0 0.0
    %271 = vmatprep.subr.mxu0 0.0
    %272 = vmatpush1.msra.mxu0 0.0
    %273 = vmatprep.subr.mxu0 0.0
    %274 = vmatpush1.msra.mxu0 %v241
    %275 = vmatprep.subr.mxu0 0.0
    %276 = vmatpush1.msra.mxu0 %v240
    %277 = vmatprep.subr.mxu0 0.0
    %278 = vmatpush1.msra.mxu0 %v239
    %279 = vmatprep.subr.mxu0 0.0
    %280 = vmatpush1.msra.mxu0 %v238
    %281 = vmatprep.subr.mxu0 0.0
    %282 = vmatpush2.msra.mxu0 0.0
    %283 = vmatprep.subr.mxu0 0.0
    %284 = vmatpush2.msra.mxu0 0.0
    %285 = vmatprep.subr.mxu0 0.0
    %286 = vmatpush2.msra.mxu0 0.0
    %287 = vmatprep.subr.mxu0 0.0
    %288 = vmatpush2.msra.mxu0 0.0
    %289 = vmatprep.subr.mxu0 0.0
    %290 = vmatpush2.msra.mxu0 0.0
    %291 = vmatprep.subr.mxu0 0.0
    %292 = vmatpush2.msra.mxu0 0.0
    %293 = vmatprep.subr.mxu0 0.0
    %294 = vmatpush2.msra.mxu0 0.0
    %295 = vmatprep.subr.mxu0 0.0
    %296 = vmatpush2.msra.mxu0 0.0
    %297 = vmatprep.subr.mxu0 0.0
    %298 = vmatpush2.msra.mxu0 0.0
    %299 = vmatprep.subr.mxu0 0.0
    %300 = vmatpush2.msra.mxu0 0.0
    %301 = vmatprep.subr.mxu0 0.0
    %302 = vmatpush2.msra.mxu0 0.0
    %303 = vmatprep.subr.mxu0 0.0
    %304 = vmatpush2.msra.mxu0 0.0
    %305 = vmatprep.subr.mxu0 0.0
    %306 = vmatpush2.msra.mxu0 0.0
    %307 = vmatprep.subr.mxu0 0.0
    %308 = vmatpush2.msra.mxu0 0.0
    %309 = vmatprep.subr.mxu0 0.0
    %310 = vmatpush2.msra.mxu0 0.0
    %311 = vmatprep.subr.mxu0 0.0
    %312 = vmatpush2.msra.mxu0 0.0
    %313 = vmatprep.mubr.f32.mxu0 0.0
    %314 = vmatmul.mubr.f32.gmra.mxu0 %v142
    %v315 = vpop.f32.mrf.mxu0
    %v316 = vadd.f32 %v247, %v315
    %v317 = vpop.f32.mrf.mxu0
    %318 = vmatprep.mubr.f32.mxu0 0.0
    %319 = vmatmul.mubr.f32.gmra.mxu0 %v145
    %v320 = vpop.f32.mrf.mxu0
    %v321 = vadd.f32 %v247, %v320
    %v322 = vpop.f32.mrf.mxu0
    %323 = vmatprep.mubr.f32.mxu0 0.0
    %324 = vmatmul.mubr.f32.gmra.mxu0 %v148
    %v325 = vpop.f32.mrf.mxu0
    %v326 = vadd.f32 %v247, %v325
    %v327 = vpop.f32.mrf.mxu0
    %328 = vmatprep.mubr.f32.mxu0 0.0
    %329 = vmatmul.mubr.f32.gmra.mxu0 %v151
    %v330 = vpop.f32.mrf.mxu0
    %v331 = vadd.f32 %v247, %v330
    %v332 = vpop.f32.mrf.mxu0
    %333 = vdwg.mxu0
    %v334 = vxor.u32 %v220, 2147483648
    %v335 = vxor.u32 %v225, 2147483648
    %v336 = vxor.u32 %v230, 2147483648
    %v337 = vxor.u32 %v235, 2147483648
    %v338 = vmul.f32 %v334, 1.442695
    %v339 = vpow.pop %v338
    %v340 = vmul.f32 %v335, 1.442695
    %v341 = vpow.pop %v340
    %v342 = vmul.f32 %v336, 1.442695
    %v343 = vpow.pop %v342
    %v344 = vmul.f32 %v337, 1.442695
    %v345 = vpow.pop %v344
    %v346 = vadd.f32 %v339, 1.0
    %v347 = vadd.f32 %v341, 1.0
    %v348 = vadd.f32 %v343, 1.0
    %v349 = vadd.f32 %v345, 1.0
    %v350 = vrcp.pop %v346
    %v351 = vmul.f32 1.0, %v350
    %v352 = vrcp.pop %v347
    %v353 = vmul.f32 1.0, %v352
    %v354 = vrcp.pop %v348
    %v355 = vmul.f32 1.0, %v354
    %v356 = vrcp.pop %v349
    %v357 = vmul.f32 1.0, %v356
    %v358 = vmul.f32 %v220, %v351
    %v359 = vmul.f32 %v225, %v353
    %v360 = vmul.f32 %v230, %v355
    %v361 = vmul.f32 %v235, %v357
    %v362 = vmul.f32 %v358, %v316
    %v363 = vmul.f32 %v359, %v321
    %v364 = vmul.f32 %v360, %v326
    %v365 = vmul.f32 %v361, %v331
    %v366 = vld [vmem:[#allocation2] sm:$0xff]
    %v367 = vld [vmem:[#allocation2 + $0x8] sm:$0xff]
    %v368 = vld [vmem:[#allocation2 + $0x10] sm:$0xff]
    %v369 = vld [vmem:[#allocation2 + $0x18] sm:$0xff]
    %v370 = vld [vmem:[%s7] sm:$0xff]
    %v371 = vld [vmem:[%s7 + $0x8] sm:$0xff]
    %v372 = vld [vmem:[%s7 + $0x10] sm:$0xff]
    %v373 = vld [vmem:[%s7 + $0x18] sm:$0xff]
    %v374 = vld [vmem:[%s7 + $0x20] sm:$0xff]
    %v375 = vld [vmem:[%s7 + $0x28] sm:$0xff]
    %v376 = vld [vmem:[%s7 + $0x30] sm:$0xff]
    %v377 = vld [vmem:[%s7 + $0x38] sm:$0xff]
    %v378 = vld [vmem:[%s7 + $0x40] sm:$0xff]
    %v379 = vld [vmem:[%s7 + $0x48] sm:$0xff]
    %v380 = vld [vmem:[%s7 + $0x50] sm:$0x1f]
    %vm381 = vcmask 695296
    %v383 = vsel %vm381, %v362, 0
    %v386 = vsel %vm381, %v363, 0
    %v389 = vsel %vm381, %v364, 0
    %v392 = vsel %vm381, %v365, 0
    %vm394 = vcmask 1044480
    %v396 = vsel %vm394, %v380, 0
    %398 = vmatprep.subr.mxu0 0.0
    %399 = vmatpush1.msra.mxu0 0.0
    %400 = vmatprep.subr.mxu0 0.0
    %401 = vmatpush1.msra.mxu0 0.0
    %402 = vmatprep.subr.mxu0 0.0
    %403 = vmatpush1.msra.mxu0 0.0
    %404 = vmatprep.subr.mxu0 0.0
    %405 = vmatpush1.msra.mxu0 0.0
    %406 = vmatprep.subr.mxu0 0.0
    %407 = vmatpush1.msra.mxu0 0.0
    %408 = vmatprep.subr.mxu0 0.0
    %409 = vmatpush1.msra.mxu0 %v396
    %410 = vmatprep.subr.mxu0 0.0
    %411 = vmatpush1.msra.mxu0 %v379
    %412 = vmatprep.subr.mxu0 0.0
    %413 = vmatpush1.msra.mxu0 %v378
    %414 = vmatprep.subr.mxu0 0.0
    %415 = vmatpush1.msra.mxu0 %v377
    %416 = vmatprep.subr.mxu0 0.0
    %417 = vmatpush1.msra.mxu0 %v376
    %418 = vmatprep.subr.mxu0 0.0
    %419 = vmatpush1.msra.mxu0 %v375
    %420 = vmatprep.subr.mxu0 0.0
    %421 = vmatpush1.msra.mxu0 %v374
    %422 = vmatprep.subr.mxu0 0.0
    %423 = vmatpush1.msra.mxu0 %v373
    %424 = vmatprep.subr.mxu0 0.0
    %425 = vmatpush1.msra.mxu0 %v372
    %426 = vmatprep.subr.mxu0 0.0
    %427 = vmatpush1.msra.mxu0 %v371
    %428 = vmatprep.subr.mxu0 0.0
    %429 = vmatpush1.msra.mxu0 %v370
    %430 = vmatprep.subr.mxu0 0.0
    %431 = vmatpush2.msra.mxu0 0.0
    %432 = vmatprep.subr.mxu0 0.0
    %433 = vmatpush2.msra.mxu0 0.0
    %434 = vmatprep.subr.mxu0 0.0
    %435 = vmatpush2.msra.mxu0 0.0
    %436 = vmatprep.subr.mxu0 0.0
    %437 = vmatpush2.msra.mxu0 0.0
    %438 = vmatprep.subr.mxu0 0.0
    %439 = vmatpush2.msra.mxu0 0.0
    %440 = vmatprep.subr.mxu0 0.0
    %441 = vmatpush2.msra.mxu0 0.0
    %442 = vmatprep.subr.mxu0 0.0
    %443 = vmatpush2.msra.mxu0 0.0
    %444 = vmatprep.subr.mxu0 0.0
    %445 = vmatpush2.msra.mxu0 0.0
    %446 = vmatprep.subr.mxu0 0.0
    %447 = vmatpush2.msra.mxu0 0.0
    %448 = vmatprep.subr.mxu0 0.0
    %449 = vmatpush2.msra.mxu0 0.0
    %450 = vmatprep.subr.mxu0 0.0
    %451 = vmatpush2.msra.mxu0 0.0
    %452 = vmatprep.subr.mxu0 0.0
    %453 = vmatpush2.msra.mxu0 0.0
    %454 = vmatprep.subr.mxu0 0.0
    %455 = vmatpush2.msra.mxu0 0.0
    %456 = vmatprep.subr.mxu0 0.0
    %457 = vmatpush2.msra.mxu0 0.0
    %458 = vmatprep.subr.mxu0 0.0
    %459 = vmatpush2.msra.mxu0 0.0
    %460 = vmatprep.subr.mxu0 0.0
    %461 = vmatpush2.msra.mxu0 0.0
    %462 = vmatprep.mubr.f32.mxu0 0.0
    %463 = vmatmul.mubr.f32.gmra.mxu0 %v383
    %v464 = vpop.f32.mrf.mxu0
    %v465 = vadd.f32 0.0, %v464
    %v466 = vpop.f32.mrf.mxu0
    %467 = vmatprep.mubr.f32.mxu0 0.0
    %468 = vmatmul.mubr.f32.gmra.mxu0 %v386
    %v469 = vpop.f32.mrf.mxu0
    %v470 = vadd.f32 0.0, %v469
    %v471 = vpop.f32.mrf.mxu0
    %472 = vmatprep.mubr.f32.mxu0 0.0
    %473 = vmatmul.mubr.f32.gmra.mxu0 %v389
    %v474 = vpop.f32.mrf.mxu0
    %v475 = vadd.f32 0.0, %v474
    %v476 = vpop.f32.mrf.mxu0
    %477 = vmatprep.mubr.f32.mxu0 0.0
    %478 = vmatmul.mubr.f32.gmra.mxu0 %v392
    %v479 = vpop.f32.mrf.mxu0
    %v480 = vadd.f32 0.0, %v479
    %v481 = vpop.f32.mrf.mxu0
    %482 = vdwg.mxu0
    %v483 = vadd.f32 %v366, %v465
    %v484 = vadd.f32 %v367, %v470
    %v485 = vadd.f32 %v368, %v475
    %v486 = vadd.f32 %v369, %v480
    %487 = vst.msk [vmem:[#allocation2] sm:$0xff] %vm140, %v483
    %488 = vst.msk [vmem:[#allocation2 + $0x8] sm:$0xff] %vm140, %v484
    %489 = vst.msk [vmem:[#allocation2 + $0x10] sm:$0xff] %vm140, %v485
    %490 = vst.msk [vmem:[#allocation2 + $0x18] sm:$0xff] %vm140, %v486
    // Predicated region
    $region42: #{vit_forward.17} parent=1 // pred_check
      %p491 = pneg %p33
    $region43: #{vit_forward.17} parent=1 // pred_check_branch
      %493 = sbr.rel (%p491) target = $region45
    $region44: #{vit_forward.17} parent=1 // pred_region
      %v494 = vld [vmem:[#allocation2] sm:$0xff]
      %v495 = vld [vmem:[#allocation2 + $0x8] sm:$0xff]
      %v496 = vld [vmem:[#allocation2 + $0x10] sm:$0xff]
      %v497 = vld [vmem:[#allocation2 + $0x18] sm:$0xff]
      %v498 = vld [vmem:[%s8] sm:$0x1]
      %v500 = vlaneseq
      %v501 = vshrl.u32 %v500, 7
      %v502 = vsub.s32 0, %v501
      %v503 = vrot.slane %v498, %v502
      %v505 = vadd.f32 %v494, %v503
      %v506 = vadd.f32 %v495, %v503
      %v507 = vadd.f32 %v496, %v503
      %v508 = vadd.f32 %v497, %v503
      %v509 = vld [vmem:[%s0] sm:$0xff]
      %v510 = vld [vmem:[%s0 + $0x8] sm:$0xff]
      %v511 = vld [vmem:[%s0 + $0x10] sm:$0xff]
      %v512 = vld [vmem:[%s0 + $0x18] sm:$0xff]
      %v513 = vadd.f32 %v505, %v509
      %v514 = vadd.f32 %v506, %v510
      %v515 = vadd.f32 %v507, %v511
      %v516 = vadd.f32 %v508, %v512
      %517 = vst.msk [vmem:[#allocation4] sm:$0xff] %vm140, %v513
      %518 = vst.msk [vmem:[#allocation4 + $0x8] sm:$0xff] %vm140, %v514
      %519 = vst.msk [vmem:[#allocation4 + $0x10] sm:$0xff] %vm140, %v515
      %520 = vst.msk [vmem:[#allocation4 + $0x18] sm:$0xff] %vm140, %v516
    $region45: #{vit_forward.17} parent=1 // pred_fallthru
      _
    // Predicated region
    $region46: #{vit_forward.17} parent=1 // pred_check
      _
    $region47: #{vit_forward.17} parent=1 // pred_check_branch
      %522 = sbr.rel (0) target = $region49
    $region48: #{vit_forward.17} parent=1 // pred_region
      %s524 = ssub.s32 512, 512
      %525 = vsyncadd [#allocation5], %s524
      %s526 = sshll.u32 [#allocation4], 4
      %s527 = int_to_ptr.vmem [resolvable:$true] %s526
      %532 = dma.vmem_to_hbm [thread:$0]  %s527, 512, %s9, [#allocation5], 128, 128, 8
    $region49: #{vit_forward.17} parent=1 // pred_fallthru
      _
    // Predicated region
    $region50: #{vit_forward.17} parent=1 // pred_check
      _
    $region51: #{vit_forward.17} parent=1 // pred_check_branch
      %534 = sbr.rel (0) target = $region53
    $region52: #{vit_forward.17} parent=1 // pred_region
      %535 = dma.done [#allocation5], 512
    $region53: #{vit_forward.17} parent=1 // pred_fallthru
      _
    %536 = vsyncpa [#allocation5], 1

</llo_original>
